<compile_context>
chip_gen: v7x
topology: tpu7x:2x2x1
jax: 0.10.0
libtpu: 0.0.40
codegen_flags: <defaults>
</compile_context>

<pallas_src>
import functools

import jax
import jax.numpy as jnp
from jax.experimental import pallas as pl
from jax.experimental.pallas import tpu as pltpu

DIM = 4
HIDDEN = 32
NUM_COUPLING = 4
BATCH = 256          # small demo batch; wrapper scales to large batches via the grid


# ----------------------------------------------------------------------------
# Pallas kernel: one batch-tile of the full forward (fused s/t coupling MLPs).
# ----------------------------------------------------------------------------
def realnvp_kernel(
    x_ref, masks_ref,
    w1_ref, b1_ref, w2_ref, b2_ref, w3_ref, b3_ref,
    z_ref, logdet_ref,
):
    x = x_ref[...]                       # (TB, D) f32, values in (0, 1)
    masks = masks_ref[...]               # (L, D)
    inv_masks = 1.0 - masks              # hoisted once (not per layer)

    b1 = b1_ref[...]                     # (L, 2H)
    b2 = b2_ref[...]                     # (L, 2H)
    b3 = b3_ref[...]                     # (L, 2D)

    # logit transform, divide-free:  x <- log(x) - log(1 - x)
    x = jnp.log(x) - jnp.log(1.0 - x)
    # NOTE: reproduces the PyTorch reference exactly — the jacobian term is
    # computed with the *already transformed* x.
    #   log|1/(x'(1-x'))| = -(log|x'| + log|1-x'|)
    log_det = -jnp.sum(
        jnp.log(jnp.abs(x)) + jnp.log(jnp.abs(1.0 - x)),
        axis=-1, keepdims=True,
    )                                    # (TB, 1)

    # Static unrolled loop over the (few) coupling layers.
    for i in range(NUM_COUPLING):
        mask = masks[i:i + 1, :]                 # (1, D)
        inv_mask = inv_masks[i:i + 1, :]         # (1, D)
        keeped = x * mask                        # (TB, D)

        # ---- fused t/s MLP ------------------------------------------------
        # layer 1: contraction K = D = 4 -> do it on the VPU as 4 FMAs
        w1 = w1_ref[i]                           # (D, 2H)
        h = b1[i:i + 1, :] + keeped[:, 0:1] * w1[0:1, :]
        for k in range(1, DIM):
            h = h + keeped[:, k:k + 1] * w1[k:k + 1, :]
        h = jnp.tanh(h)                          # (TB, 2H)

        # layer 2: block-diagonal (2H, 2H) on the MXU
        h = jnp.tanh(
            jnp.dot(h, w2_ref[i], preferred_element_type=jnp.float32)
            + b2[i:i + 1, :]
        )                                        # (TB, 2H)

        # layer 3: block-diagonal (2H, 2D) on the MXU
        out = (jnp.dot(h, w3_ref[i], preferred_element_type=jnp.float32)
               + b3[i:i + 1, :])                 # (TB, 2D)

        t1 = out[:, :DIM]                        # (TB, D)
        s1 = jnp.tanh(out[:, DIM:])              # (TB, D)
        # -------------------------------------------------------------------

        x = keeped + inv_mask * (x - t1) * jnp.exp(-s1)
        log_det = log_det - jnp.sum(inv_mask * s1, axis=-1, keepdims=True)

    z_ref[...] = x
    logdet_ref[...] = log_det


# ----------------------------------------------------------------------------
# Wrapper: fuse s/t params, tile batch with a parallel grid, compute loss.
# ----------------------------------------------------------------------------
def _fuse_params(params):
    """Concat layer-1, block-diagonalize layer-2/3 so one matmul chain does
    both the t- and the s-network of every coupling layer."""
    (wt1, bt1, wt2, bt2, wt3, bt3, ws1, bs1, ws2, bs2, ws3, bs3) = params
    L, D, H = wt1.shape
    zHH = jnp.zeros((L, H, H), jnp.float32)
    zHD = jnp.zeros((L, H, D), jnp.float32)

    w1f = jnp.concatenate([wt1, ws1], axis=-1)                     # (L, D, 2H)
    b1f = jnp.concatenate([bt1, bs1], axis=-1)                     # (L, 2H)
    w2f = jnp.concatenate(
        [jnp.concatenate([wt2, zHH], axis=-1),
         jnp.concatenate([zHH, ws2], axis=-1)], axis=1)            # (L, 2H, 2H)
    b2f = jnp.concatenate([bt2, bs2], axis=-1)                     # (L, 2H)
    w3f = jnp.concatenate(
        [jnp.concatenate([wt3, zHD], axis=-1),
         jnp.concatenate([zHD, ws3], axis=-1)], axis=1)            # (L, 2H, 2D)
    b3f = jnp.concatenate([bt3, bs3], axis=-1)                     # (L, 2D)
    return w1f, b1f, w2f, b2f, w3f, b3f


def _default_block_b(B):
    if B <= 4096:
        return B
    for tb in (4096, 2048, 1024, 512, 256, 128, 64, 32, 16, 8):
        if B % tb == 0:
            return tb
    return B


@functools.partial(jax.jit, static_argnames=("block_b",))
def realnvp_forward(x, masks, params, block_b=None):
    B = x.shape[0]
    if block_b is None:
        block_b = _default_block_b(B)
    assert B % block_b == 0, "batch must be divisible by block_b"
    assert block_b == B or block_b % 8 == 0, "block_b must be a multiple of 8"

    w1f, b1f, w2f, b2f, w3f, b3f = _fuse_params(params)
    L, H2, D2 = NUM_COUPLING, 2 * HIDDEN, 2 * DIM

    grid = (B // block_b,)
    in_specs = [
        pl.BlockSpec((block_b, DIM), lambda i: (i, 0)),       # x (tiled over batch)
        pl.BlockSpec((L, DIM), lambda i: (0, 0)),             # masks
        pl.BlockSpec((L, DIM, H2), lambda i: (0, 0, 0)),      # w1 fused
        pl.BlockSpec((L, H2), lambda i: (0, 0)),              # b1 fused
        pl.BlockSpec((L, H2, H2), lambda i: (0, 0, 0)),       # w2 block-diag
        pl.BlockSpec((L, H2), lambda i: (0, 0)),              # b2 fused
        pl.BlockSpec((L, H2, D2), lambda i: (0, 0, 0)),       # w3 block-diag
        pl.BlockSpec((L, D2), lambda i: (0, 0)),              # b3 fused
    ]
    out_specs = (
        pl.BlockSpec((block_b, DIM), lambda i: (i, 0)),       # z
        pl.BlockSpec((block_b, 1), lambda i: (i, 0)),         # log_det
    )

    z, log_det = pl.pallas_call(
        realnvp_kernel,
        grid=grid,
        in_specs=in_specs,
        out_specs=out_specs,
        out_shape=(
            jax.ShapeDtypeStruct((B, DIM), jnp.float32),
            jax.ShapeDtypeStruct((B, 1), jnp.float32),
        ),
        compiler_params=pltpu.CompilerParams(
            dimension_semantics=("parallel",)),
    )(x, masks, w1f, b1f, w2f, b2f, w3f, b3f)

    log_det = log_det[:, 0]
    # loss is 3 cheap elementwise/reduce ops; keep it out of the kernel so the
    # kernel outputs stay minimal / lane-dense.
    tmp = -0.5 * (jnp.sum(z * z, axis=-1) + DIM * jnp.log(2.0 * jnp.pi))
    loss = tmp + log_det
    return z, log_det, loss


# ----------------------------------------------------------------------------
# Deterministic synthetic parameter init (mirrors Base_model shapes/init).
# ----------------------------------------------------------------------------
def xavier_uniform(key, fan_in, fan_out):
    bound = jnp.sqrt(6.0 / (fan_in + fan_out))
    # stored as (in, out) so the kernel computes x @ W  (== PyTorch x @ W.T)
    return jax.random.uniform(key, (fan_in, fan_out), jnp.float32,
                              minval=-bound, maxval=bound)


def linear_bias(key, fan_in, fan_out):
    bound = 1.0 / jnp.sqrt(fan_in)   # PyTorch nn.Linear default bias init
    return jax.random.uniform(key, (fan_out,), jnp.float32,
                              minval=-bound, maxval=bound)


def make_params(key):
    def stack_net(key):
        ws1, bs1, ws2, bs2, ws3, bs3 = [], [], [], [], [], []
        for _ in range(NUM_COUPLING):
            key, *ks = jax.random.split(key, 7)
            ws1.append(xavier_uniform(ks[0], DIM, HIDDEN))
            bs1.append(linear_bias(ks[1], DIM, HIDDEN))
            ws2.append(xavier_uniform(ks[2], HIDDEN, HIDDEN))
            bs2.append(linear_bias(ks[3], HIDDEN, HIDDEN))
            ws3.append(xavier_uniform(ks[4], HIDDEN, DIM))
            bs3.append(linear_bias(ks[5], HIDDEN, DIM))
        stk = lambda xs: jnp.stack(xs, axis=0)
        return (stk(ws1), stk(bs1), stk(ws2), stk(bs2), stk(ws3), stk(bs3)), key

    t_params, key = stack_net(key)
    s_params, key = stack_net(key)
    return t_params + s_params


# ----------------------------------------------------------------------------
# Pure-JAX reference (mirrors the PyTorch forward) for a correctness check.
# ----------------------------------------------------------------------------
def realnvp_reference(x, masks, params):
    (wt1, bt1, wt2, bt2, wt3, bt3, ws1, bs1, ws2, bs2, ws3, bs3) = params
    x = jnp.log(x / (1.0 - x))
    log_det = jnp.sum(jnp.log(jnp.abs(1.0 / (x * (1.0 - x)))), axis=-1)

    def mlp(inp, w1, b1, w2, b2, w3, b3):
        h = jnp.tanh(inp @ w1 + b1)
        h = jnp.tanh(h @ w2 + b2)
        return h @ w3 + b3

    for i in range(NUM_COUPLING):
        mask = masks[i]
        keeped = x * mask
        t1 = mlp(keeped, wt1[i], bt1[i], wt2[i], bt2[i], wt3[i], bt3[i])
        s1 = jnp.tanh(mlp(keeped, ws1[i], bs1[i], ws2[i], bs2[i], ws3[i], bs3[i]))
        x = keeped + (1.0 - mask) * (x - t1) * jnp.exp(-s1)
        log_det = log_det + jnp.sum((1.0 - mask) * (-s1), axis=-1)

    z = x
    tmp = -0.5 * (jnp.sum(z * z, axis=-1) + DIM * jnp.log(2.0 * jnp.pi))
    return z, log_det, tmp + log_det


if __name__ == "__main__":
    key = jax.random.PRNGKey(0)
    key, k_x, k_p = jax.random.split(key, 3)

    # Input must lie in (0, 1) for the logit transform.
    x = jax.random.uniform(k_x, (BATCH, DIM), jnp.float32,
                           minval=0.05, maxval=0.95)

    # Alternating binary masks, one per coupling layer.
    base = jnp.array([1.0, 0.0, 1.0, 0.0], jnp.float32)
    masks = jnp.stack([base if i % 2 == 0 else 1.0 - base
                       for i in range(NUM_COUPLING)], axis=0)   # (L, D)

    params = make_params(k_p)

    # block_b=128 exercises a 2-step parallel batch grid at this small size;
    # the default picks up to 4096-row tiles for large batches.
    z, log_det, loss = realnvp_forward(x, masks, params, block_b=128)
    jax.block_until_ready((z, log_det, loss))

    z_ref, ld_ref, loss_ref = realnvp_reference(x, masks, params)
    assert jnp.allclose(z, z_ref, atol=1e-3, rtol=1e-3)
    assert jnp.allclose(log_det, ld_ref, atol=1e-3, rtol=1e-3)
    assert jnp.allclose(loss, loss_ref, atol=1e-3, rtol=1e-3)

    print("KERNEL_OK")
</pallas_src>

<mosaic_0001>
module attributes {stable_mosaic.version = 11 : i64} {
  func.func @realnvp_kernel(%arg0: i32, %arg1: memref<128x4xf32, #tpu.memory_space<vmem>>, %arg2: memref<4x4xf32, #tpu.memory_space<vmem>>, %arg3: memref<4x4x64xf32, #tpu.memory_space<vmem>>, %arg4: memref<4x64xf32, #tpu.memory_space<vmem>>, %arg5: memref<4x64x64xf32, #tpu.memory_space<vmem>>, %arg6: memref<4x64xf32, #tpu.memory_space<vmem>>, %arg7: memref<4x64x8xf32, #tpu.memory_space<vmem>>, %arg8: memref<4x8xf32, #tpu.memory_space<vmem>>, %arg9: memref<128x4xf32, #tpu.memory_space<vmem>>, %arg10: memref<128x1xf32, #tpu.memory_space<vmem>>) attributes {dimension_semantics = [#tpu.dimension_semantics<parallel>], iteration_bounds = array<i64: 2>, scalar_prefetch = 0 : i64, scratch_operands = 0 : i64, tpu.core_type = #tpu.core_type<tc>, window_params = [{transform_indices = @transform_0, window_bounds = array<i64: 128, 4>}, {pipeline_mode = #tpu.pipeline_mode<synchronous>, transform_indices = @transform_1, window_bounds = array<i64: 4, 4>}, {pipeline_mode = #tpu.pipeline_mode<synchronous>, transform_indices = @transform_2, window_bounds = array<i64: 4, 4, 64>}, {pipeline_mode = #tpu.pipeline_mode<synchronous>, transform_indices = @transform_3, window_bounds = array<i64: 4, 64>}, {pipeline_mode = #tpu.pipeline_mode<synchronous>, transform_indices = @transform_4, window_bounds = array<i64: 4, 64, 64>}, {pipeline_mode = #tpu.pipeline_mode<synchronous>, transform_indices = @transform_5, window_bounds = array<i64: 4, 64>}, {pipeline_mode = #tpu.pipeline_mode<synchronous>, transform_indices = @transform_6, window_bounds = array<i64: 4, 64, 8>}, {pipeline_mode = #tpu.pipeline_mode<synchronous>, transform_indices = @transform_7, window_bounds = array<i64: 4, 8>}, {transform_indices = @transform_8, window_bounds = array<i64: 128, 4>}, {transform_indices = @transform_9, window_bounds = array<i64: 128, 1>}]} {
    %c0 = arith.constant 0 : index
    %c0_0 = arith.constant 0 : index
    %0 = vector.load %arg1[%c0, %c0_0] : memref<128x4xf32, #tpu.memory_space<vmem>>, vector<128x4xf32>
    %c0_1 = arith.constant 0 : index
    %c0_2 = arith.constant 0 : index
    %1 = vector.load %arg2[%c0_1, %c0_2] : memref<4x4xf32, #tpu.memory_space<vmem>>, vector<4x4xf32>
    %cst = arith.constant 1.000000e+00 : f32
    %2 = vector.broadcast %cst : f32 to vector<4x4xf32>
    %3 = arith.subf %2, %1 : vector<4x4xf32>
    %c0_3 = arith.constant 0 : index
    %c0_4 = arith.constant 0 : index
    %4 = vector.load %arg4[%c0_3, %c0_4] : memref<4x64xf32, #tpu.memory_space<vmem>>, vector<4x64xf32>
    %c0_5 = arith.constant 0 : index
    %c0_6 = arith.constant 0 : index
    %5 = vector.load %arg6[%c0_5, %c0_6] : memref<4x64xf32, #tpu.memory_space<vmem>>, vector<4x64xf32>
    %c0_7 = arith.constant 0 : index
    %c0_8 = arith.constant 0 : index
    %6 = vector.load %arg8[%c0_7, %c0_8] : memref<4x8xf32, #tpu.memory_space<vmem>>, vector<4x8xf32>
    %7 = math.log %0 : vector<128x4xf32>
    %cst_9 = arith.constant 1.000000e+00 : f32
    %8 = vector.broadcast %cst_9 : f32 to vector<128x4xf32>
    %9 = arith.subf %8, %0 : vector<128x4xf32>
    %10 = math.log %9 : vector<128x4xf32>
    %11 = arith.subf %7, %10 : vector<128x4xf32>
    %12 = math.absf %11 : vector<128x4xf32>
    %13 = math.log %12 : vector<128x4xf32>
    %cst_10 = arith.constant 1.000000e+00 : f32
    %14 = vector.broadcast %cst_10 : f32 to vector<128x4xf32>
    %15 = arith.subf %14, %11 : vector<128x4xf32>
    %16 = math.absf %15 : vector<128x4xf32>
    %17 = math.log %16 : vector<128x4xf32>
    %18 = arith.addf %13, %17 : vector<128x4xf32>
    %cst_11 = arith.constant dense<0.000000e+00> : vector<128xf32>
    %19 = vector.multi_reduction <add>, %18, %cst_11 [1] : vector<128x4xf32> to vector<128xf32>
    %20 = vector.shape_cast %19 : vector<128xf32> to vector<128x1xf32>
    %cst_12 = arith.constant 0.000000e+00 : f32
    %21 = vector.broadcast %cst_12 : f32 to vector<128x1xf32>
    %22 = arith.subf %21, %20 : vector<128x1xf32>
    %23 = vector.extract_strided_slice %1 {offsets = [0, 0], sizes = [1, 4], strides = [1, 1]} : vector<4x4xf32> to vector<1x4xf32>
    %24 = vector.extract_strided_slice %3 {offsets = [0, 0], sizes = [1, 4], strides = [1, 1]} : vector<4x4xf32> to vector<1x4xf32>
    %25 = vector.broadcast %23 : vector<1x4xf32> to vector<128x4xf32>
    %26 = arith.mulf %11, %25 : vector<128x4xf32>
    %c0_13 = arith.constant 0 : index
    %c0_14 = arith.constant 0 : index
    %c0_15 = arith.constant 0 : index
    %27 = vector.load %arg3[%c0_13, %c0_14, %c0_15] : memref<4x4x64xf32, #tpu.memory_space<vmem>>, vector<1x4x64xf32>
    %28 = vector.shape_cast %27 : vector<1x4x64xf32> to vector<4x64xf32>
    %29 = vector.extract_strided_slice %4 {offsets = [0, 0], sizes = [1, 64], strides = [1, 1]} : vector<4x64xf32> to vector<1x64xf32>
    %30 = vector.extract_strided_slice %26 {offsets = [0, 0], sizes = [128, 1], strides = [1, 1]} : vector<128x4xf32> to vector<128x1xf32>
    %31 = vector.extract_strided_slice %28 {offsets = [0, 0], sizes = [1, 64], strides = [1, 1]} : vector<4x64xf32> to vector<1x64xf32>
    %32 = vector.broadcast %30 : vector<128x1xf32> to vector<128x64xf32>
    %33 = vector.broadcast %31 : vector<1x64xf32> to vector<128x64xf32>
    %34 = arith.mulf %32, %33 : vector<128x64xf32>
    %35 = vector.broadcast %29 : vector<1x64xf32> to vector<128x64xf32>
    %36 = arith.addf %35, %34 : vector<128x64xf32>
    %37 = vector.extract_strided_slice %26 {offsets = [0, 1], sizes = [128, 1], strides = [1, 1]} : vector<128x4xf32> to vector<128x1xf32>
    %38 = vector.extract_strided_slice %28 {offsets = [1, 0], sizes = [1, 64], strides = [1, 1]} : vector<4x64xf32> to vector<1x64xf32>
    %39 = vector.broadcast %37 : vector<128x1xf32> to vector<128x64xf32>
    %40 = vector.broadcast %38 : vector<1x64xf32> to vector<128x64xf32>
    %41 = arith.mulf %39, %40 : vector<128x64xf32>
    %42 = arith.addf %36, %41 : vector<128x64xf32>
    %43 = vector.extract_strided_slice %26 {offsets = [0, 2], sizes = [128, 1], strides = [1, 1]} : vector<128x4xf32> to vector<128x1xf32>
    %44 = vector.extract_strided_slice %28 {offsets = [2, 0], sizes = [1, 64], strides = [1, 1]} : vector<4x64xf32> to vector<1x64xf32>
    %45 = vector.broadcast %43 : vector<128x1xf32> to vector<128x64xf32>
    %46 = vector.broadcast %44 : vector<1x64xf32> to vector<128x64xf32>
    %47 = arith.mulf %45, %46 : vector<128x64xf32>
    %48 = arith.addf %42, %47 : vector<128x64xf32>
    %49 = vector.extract_strided_slice %26 {offsets = [0, 3], sizes = [128, 1], strides = [1, 1]} : vector<128x4xf32> to vector<128x1xf32>
    %50 = vector.extract_strided_slice %28 {offsets = [3, 0], sizes = [1, 64], strides = [1, 1]} : vector<4x64xf32> to vector<1x64xf32>
    %51 = vector.broadcast %49 : vector<128x1xf32> to vector<128x64xf32>
    %52 = vector.broadcast %50 : vector<1x64xf32> to vector<128x64xf32>
    %53 = arith.mulf %51, %52 : vector<128x64xf32>
    %54 = arith.addf %48, %53 : vector<128x64xf32>
    %55 = math.tanh %54 : vector<128x64xf32>
    %c0_16 = arith.constant 0 : index
    %c0_17 = arith.constant 0 : index
    %c0_18 = arith.constant 0 : index
    %56 = vector.load %arg5[%c0_16, %c0_17, %c0_18] : memref<4x64x64xf32, #tpu.memory_space<vmem>>, vector<1x64x64xf32>
    %57 = vector.shape_cast %56 : vector<1x64x64xf32> to vector<64x64xf32>
    %cst_19 = arith.constant dense<0.000000e+00> : vector<128x64xf32>
    %58 = tpu.matmul %55, %57, %cst_19 {dimension_numbers = #tpu.dot_dimension_numbers<[1], [0], [0], [1], [0, 0, 1, 1], [], []>} : vector<128x64xf32>, vector<64x64xf32>, vector<128x64xf32> -> vector<128x64xf32>
    %59 = vector.extract_strided_slice %5 {offsets = [0, 0], sizes = [1, 64], strides = [1, 1]} : vector<4x64xf32> to vector<1x64xf32>
    %60 = vector.broadcast %59 : vector<1x64xf32> to vector<128x64xf32>
    %61 = arith.addf %58, %60 : vector<128x64xf32>
    %62 = math.tanh %61 : vector<128x64xf32>
    %c0_20 = arith.constant 0 : index
    %c0_21 = arith.constant 0 : index
    %c0_22 = arith.constant 0 : index
    %63 = vector.load %arg7[%c0_20, %c0_21, %c0_22] : memref<4x64x8xf32, #tpu.memory_space<vmem>>, vector<1x64x8xf32>
    %64 = vector.shape_cast %63 : vector<1x64x8xf32> to vector<64x8xf32>
    %cst_23 = arith.constant dense<0.000000e+00> : vector<128x8xf32>
    %65 = tpu.matmul %62, %64, %cst_23 {dimension_numbers = #tpu.dot_dimension_numbers<[1], [0], [0], [1], [0, 0, 1, 1], [], []>} : vector<128x64xf32>, vector<64x8xf32>, vector<128x8xf32> -> vector<128x8xf32>
    %66 = vector.extract_strided_slice %6 {offsets = [0, 0], sizes = [1, 8], strides = [1, 1]} : vector<4x8xf32> to vector<1x8xf32>
    %67 = vector.broadcast %66 : vector<1x8xf32> to vector<128x8xf32>
    %68 = arith.addf %65, %67 : vector<128x8xf32>
    %69 = vector.extract_strided_slice %68 {offsets = [0, 0], sizes = [128, 4], strides = [1, 1]} : vector<128x8xf32> to vector<128x4xf32>
    %70 = vector.extract_strided_slice %68 {offsets = [0, 4], sizes = [128, 4], strides = [1, 1]} : vector<128x8xf32> to vector<128x4xf32>
    %71 = math.tanh %70 : vector<128x4xf32>
    %72 = arith.subf %11, %69 : vector<128x4xf32>
    %73 = vector.broadcast %24 : vector<1x4xf32> to vector<128x4xf32>
    %74 = arith.mulf %73, %72 : vector<128x4xf32>
    %cst_24 = arith.constant 0.000000e+00 : f32
    %75 = vector.broadcast %cst_24 : f32 to vector<128x4xf32>
    %76 = arith.subf %75, %71 : vector<128x4xf32>
    %77 = math.exp %76 : vector<128x4xf32>
    %78 = arith.mulf %74, %77 : vector<128x4xf32>
    %79 = arith.addf %26, %78 : vector<128x4xf32>
    %80 = vector.broadcast %24 : vector<1x4xf32> to vector<128x4xf32>
    %81 = arith.mulf %80, %71 : vector<128x4xf32>
    %cst_25 = arith.constant dense<0.000000e+00> : vector<128xf32>
    %82 = vector.multi_reduction <add>, %81, %cst_25 [1] : vector<128x4xf32> to vector<128xf32>
    %83 = vector.shape_cast %82 : vector<128xf32> to vector<128x1xf32>
    %84 = arith.subf %22, %83 : vector<128x1xf32>
    %85 = vector.extract_strided_slice %1 {offsets = [1, 0], sizes = [1, 4], strides = [1, 1]} : vector<4x4xf32> to vector<1x4xf32>
    %86 = vector.extract_strided_slice %3 {offsets = [1, 0], sizes = [1, 4], strides = [1, 1]} : vector<4x4xf32> to vector<1x4xf32>
    %87 = vector.broadcast %85 : vector<1x4xf32> to vector<128x4xf32>
    %88 = arith.mulf %79, %87 : vector<128x4xf32>
    %c1 = arith.constant 1 : index
    %c0_26 = arith.constant 0 : index
    %c0_27 = arith.constant 0 : index
    %89 = vector.load %arg3[%c1, %c0_26, %c0_27] : memref<4x4x64xf32, #tpu.memory_space<vmem>>, vector<1x4x64xf32>
    %90 = vector.shape_cast %89 : vector<1x4x64xf32> to vector<4x64xf32>
    %91 = vector.extract_strided_slice %4 {offsets = [1, 0], sizes = [1, 64], strides = [1, 1]} : vector<4x64xf32> to vector<1x64xf32>
    %92 = vector.extract_strided_slice %88 {offsets = [0, 0], sizes = [128, 1], strides = [1, 1]} : vector<128x4xf32> to vector<128x1xf32>
    %93 = vector.extract_strided_slice %90 {offsets = [0, 0], sizes = [1, 64], strides = [1, 1]} : vector<4x64xf32> to vector<1x64xf32>
    %94 = vector.broadcast %92 : vector<128x1xf32> to vector<128x64xf32>
    %95 = vector.broadcast %93 : vector<1x64xf32> to vector<128x64xf32>
    %96 = arith.mulf %94, %95 : vector<128x64xf32>
    %97 = vector.broadcast %91 : vector<1x64xf32> to vector<128x64xf32>
    %98 = arith.addf %97, %96 : vector<128x64xf32>
    %99 = vector.extract_strided_slice %88 {offsets = [0, 1], sizes = [128, 1], strides = [1, 1]} : vector<128x4xf32> to vector<128x1xf32>
    %100 = vector.extract_strided_slice %90 {offsets = [1, 0], sizes = [1, 64], strides = [1, 1]} : vector<4x64xf32> to vector<1x64xf32>
    %101 = vector.broadcast %99 : vector<128x1xf32> to vector<128x64xf32>
    %102 = vector.broadcast %100 : vector<1x64xf32> to vector<128x64xf32>
    %103 = arith.mulf %101, %102 : vector<128x64xf32>
    %104 = arith.addf %98, %103 : vector<128x64xf32>
    %105 = vector.extract_strided_slice %88 {offsets = [0, 2], sizes = [128, 1], strides = [1, 1]} : vector<128x4xf32> to vector<128x1xf32>
    %106 = vector.extract_strided_slice %90 {offsets = [2, 0], sizes = [1, 64], strides = [1, 1]} : vector<4x64xf32> to vector<1x64xf32>
    %107 = vector.broadcast %105 : vector<128x1xf32> to vector<128x64xf32>
    %108 = vector.broadcast %106 : vector<1x64xf32> to vector<128x64xf32>
    %109 = arith.mulf %107, %108 : vector<128x64xf32>
    %110 = arith.addf %104, %109 : vector<128x64xf32>
    %111 = vector.extract_strided_slice %88 {offsets = [0, 3], sizes = [128, 1], strides = [1, 1]} : vector<128x4xf32> to vector<128x1xf32>
    %112 = vector.extract_strided_slice %90 {offsets = [3, 0], sizes = [1, 64], strides = [1, 1]} : vector<4x64xf32> to vector<1x64xf32>
    %113 = vector.broadcast %111 : vector<128x1xf32> to vector<128x64xf32>
    %114 = vector.broadcast %112 : vector<1x64xf32> to vector<128x64xf32>
    %115 = arith.mulf %113, %114 : vector<128x64xf32>
    %116 = arith.addf %110, %115 : vector<128x64xf32>
    %117 = math.tanh %116 : vector<128x64xf32>
    %c1_28 = arith.constant 1 : index
    %c0_29 = arith.constant 0 : index
    %c0_30 = arith.constant 0 : index
    %118 = vector.load %arg5[%c1_28, %c0_29, %c0_30] : memref<4x64x64xf32, #tpu.memory_space<vmem>>, vector<1x64x64xf32>
    %119 = vector.shape_cast %118 : vector<1x64x64xf32> to vector<64x64xf32>
    %cst_31 = arith.constant dense<0.000000e+00> : vector<128x64xf32>
    %120 = tpu.matmul %117, %119, %cst_31 {dimension_numbers = #tpu.dot_dimension_numbers<[1], [0], [0], [1], [0, 0, 1, 1], [], []>} : vector<128x64xf32>, vector<64x64xf32>, vector<128x64xf32> -> vector<128x64xf32>
    %121 = vector.extract_strided_slice %5 {offsets = [1, 0], sizes = [1, 64], strides = [1, 1]} : vector<4x64xf32> to vector<1x64xf32>
    %122 = vector.broadcast %121 : vector<1x64xf32> to vector<128x64xf32>
    %123 = arith.addf %120, %122 : vector<128x64xf32>
    %124 = math.tanh %123 : vector<128x64xf32>
    %c1_32 = arith.constant 1 : index
    %c0_33 = arith.constant 0 : index
    %c0_34 = arith.constant 0 : index
    %125 = vector.load %arg7[%c1_32, %c0_33, %c0_34] : memref<4x64x8xf32, #tpu.memory_space<vmem>>, vector<1x64x8xf32>
    %126 = vector.shape_cast %125 : vector<1x64x8xf32> to vector<64x8xf32>
    %cst_35 = arith.constant dense<0.000000e+00> : vector<128x8xf32>
    %127 = tpu.matmul %124, %126, %cst_35 {dimension_numbers = #tpu.dot_dimension_numbers<[1], [0], [0], [1], [0, 0, 1, 1], [], []>} : vector<128x64xf32>, vector<64x8xf32>, vector<128x8xf32> -> vector<128x8xf32>
    %128 = vector.extract_strided_slice %6 {offsets = [1, 0], sizes = [1, 8], strides = [1, 1]} : vector<4x8xf32> to vector<1x8xf32>
    %129 = vector.broadcast %128 : vector<1x8xf32> to vector<128x8xf32>
    %130 = arith.addf %127, %129 : vector<128x8xf32>
    %131 = vector.extract_strided_slice %130 {offsets = [0, 0], sizes = [128, 4], strides = [1, 1]} : vector<128x8xf32> to vector<128x4xf32>
    %132 = vector.extract_strided_slice %130 {offsets = [0, 4], sizes = [128, 4], strides = [1, 1]} : vector<128x8xf32> to vector<128x4xf32>
    %133 = math.tanh %132 : vector<128x4xf32>
    %134 = arith.subf %79, %131 : vector<128x4xf32>
    %135 = vector.broadcast %86 : vector<1x4xf32> to vector<128x4xf32>
    %136 = arith.mulf %135, %134 : vector<128x4xf32>
    %cst_36 = arith.constant 0.000000e+00 : f32
    %137 = vector.broadcast %cst_36 : f32 to vector<128x4xf32>
    %138 = arith.subf %137, %133 : vector<128x4xf32>
    %139 = math.exp %138 : vector<128x4xf32>
    %140 = arith.mulf %136, %139 : vector<128x4xf32>
    %141 = arith.addf %88, %140 : vector<128x4xf32>
    %142 = vector.broadcast %86 : vector<1x4xf32> to vector<128x4xf32>
    %143 = arith.mulf %142, %133 : vector<128x4xf32>
    %cst_37 = arith.constant dense<0.000000e+00> : vector<128xf32>
    %144 = vector.multi_reduction <add>, %143, %cst_37 [1] : vector<128x4xf32> to vector<128xf32>
    %145 = vector.shape_cast %144 : vector<128xf32> to vector<128x1xf32>
    %146 = arith.subf %84, %145 : vector<128x1xf32>
    %147 = vector.extract_strided_slice %1 {offsets = [2, 0], sizes = [1, 4], strides = [1, 1]} : vector<4x4xf32> to vector<1x4xf32>
    %148 = vector.extract_strided_slice %3 {offsets = [2, 0], sizes = [1, 4], strides = [1, 1]} : vector<4x4xf32> to vector<1x4xf32>
    %149 = vector.broadcast %147 : vector<1x4xf32> to vector<128x4xf32>
    %150 = arith.mulf %141, %149 : vector<128x4xf32>
    %c2 = arith.constant 2 : index
    %c0_38 = arith.constant 0 : index
    %c0_39 = arith.constant 0 : index
    %151 = vector.load %arg3[%c2, %c0_38, %c0_39] : memref<4x4x64xf32, #tpu.memory_space<vmem>>, vector<1x4x64xf32>
    %152 = vector.shape_cast %151 : vector<1x4x64xf32> to vector<4x64xf32>
    %153 = vector.extract_strided_slice %4 {offsets = [2, 0], sizes = [1, 64], strides = [1, 1]} : vector<4x64xf32> to vector<1x64xf32>
    %154 = vector.extract_strided_slice %150 {offsets = [0, 0], sizes = [128, 1], strides = [1, 1]} : vector<128x4xf32> to vector<128x1xf32>
    %155 = vector.extract_strided_slice %152 {offsets = [0, 0], sizes = [1, 64], strides = [1, 1]} : vector<4x64xf32> to vector<1x64xf32>
    %156 = vector.broadcast %154 : vector<128x1xf32> to vector<128x64xf32>
    %157 = vector.broadcast %155 : vector<1x64xf32> to vector<128x64xf32>
    %158 = arith.mulf %156, %157 : vector<128x64xf32>
    %159 = vector.broadcast %153 : vector<1x64xf32> to vector<128x64xf32>
    %160 = arith.addf %159, %158 : vector<128x64xf32>
    %161 = vector.extract_strided_slice %150 {offsets = [0, 1], sizes = [128, 1], strides = [1, 1]} : vector<128x4xf32> to vector<128x1xf32>
    %162 = vector.extract_strided_slice %152 {offsets = [1, 0], sizes = [1, 64], strides = [1, 1]} : vector<4x64xf32> to vector<1x64xf32>
    %163 = vector.broadcast %161 : vector<128x1xf32> to vector<128x64xf32>
    %164 = vector.broadcast %162 : vector<1x64xf32> to vector<128x64xf32>
    %165 = arith.mulf %163, %164 : vector<128x64xf32>
    %166 = arith.addf %160, %165 : vector<128x64xf32>
    %167 = vector.extract_strided_slice %150 {offsets = [0, 2], sizes = [128, 1], strides = [1, 1]} : vector<128x4xf32> to vector<128x1xf32>
    %168 = vector.extract_strided_slice %152 {offsets = [2, 0], sizes = [1, 64], strides = [1, 1]} : vector<4x64xf32> to vector<1x64xf32>
    %169 = vector.broadcast %167 : vector<128x1xf32> to vector<128x64xf32>
    %170 = vector.broadcast %168 : vector<1x64xf32> to vector<128x64xf32>
    %171 = arith.mulf %169, %170 : vector<128x64xf32>
    %172 = arith.addf %166, %171 : vector<128x64xf32>
    %173 = vector.extract_strided_slice %150 {offsets = [0, 3], sizes = [128, 1], strides = [1, 1]} : vector<128x4xf32> to vector<128x1xf32>
    %174 = vector.extract_strided_slice %152 {offsets = [3, 0], sizes = [1, 64], strides = [1, 1]} : vector<4x64xf32> to vector<1x64xf32>
    %175 = vector.broadcast %173 : vector<128x1xf32> to vector<128x64xf32>
    %176 = vector.broadcast %174 : vector<1x64xf32> to vector<128x64xf32>
    %177 = arith.mulf %175, %176 : vector<128x64xf32>
    %178 = arith.addf %172, %177 : vector<128x64xf32>
    %179 = math.tanh %178 : vector<128x64xf32>
    %c2_40 = arith.constant 2 : index
    %c0_41 = arith.constant 0 : index
    %c0_42 = arith.constant 0 : index
    %180 = vector.load %arg5[%c2_40, %c0_41, %c0_42] : memref<4x64x64xf32, #tpu.memory_space<vmem>>, vector<1x64x64xf32>
    %181 = vector.shape_cast %180 : vector<1x64x64xf32> to vector<64x64xf32>
    %cst_43 = arith.constant dense<0.000000e+00> : vector<128x64xf32>
    %182 = tpu.matmul %179, %181, %cst_43 {dimension_numbers = #tpu.dot_dimension_numbers<[1], [0], [0], [1], [0, 0, 1, 1], [], []>} : vector<128x64xf32>, vector<64x64xf32>, vector<128x64xf32> -> vector<128x64xf32>
    %183 = vector.extract_strided_slice %5 {offsets = [2, 0], sizes = [1, 64], strides = [1, 1]} : vector<4x64xf32> to vector<1x64xf32>
    %184 = vector.broadcast %183 : vector<1x64xf32> to vector<128x64xf32>
    %185 = arith.addf %182, %184 : vector<128x64xf32>
    %186 = math.tanh %185 : vector<128x64xf32>
    %c2_44 = arith.constant 2 : index
    %c0_45 = arith.constant 0 : index
    %c0_46 = arith.constant 0 : index
    %187 = vector.load %arg7[%c2_44, %c0_45, %c0_46] : memref<4x64x8xf32, #tpu.memory_space<vmem>>, vector<1x64x8xf32>
    %188 = vector.shape_cast %187 : vector<1x64x8xf32> to vector<64x8xf32>
    %cst_47 = arith.constant dense<0.000000e+00> : vector<128x8xf32>
    %189 = tpu.matmul %186, %188, %cst_47 {dimension_numbers = #tpu.dot_dimension_numbers<[1], [0], [0], [1], [0, 0, 1, 1], [], []>} : vector<128x64xf32>, vector<64x8xf32>, vector<128x8xf32> -> vector<128x8xf32>
    %190 = vector.extract_strided_slice %6 {offsets = [2, 0], sizes = [1, 8], strides = [1, 1]} : vector<4x8xf32> to vector<1x8xf32>
    %191 = vector.broadcast %190 : vector<1x8xf32> to vector<128x8xf32>
    %192 = arith.addf %189, %191 : vector<128x8xf32>
    %193 = vector.extract_strided_slice %192 {offsets = [0, 0], sizes = [128, 4], strides = [1, 1]} : vector<128x8xf32> to vector<128x4xf32>
    %194 = vector.extract_strided_slice %192 {offsets = [0, 4], sizes = [128, 4], strides = [1, 1]} : vector<128x8xf32> to vector<128x4xf32>
    %195 = math.tanh %194 : vector<128x4xf32>
    %196 = arith.subf %141, %193 : vector<128x4xf32>
    %197 = vector.broadcast %148 : vector<1x4xf32> to vector<128x4xf32>
    %198 = arith.mulf %197, %196 : vector<128x4xf32>
    %cst_48 = arith.constant 0.000000e+00 : f32
    %199 = vector.broadcast %cst_48 : f32 to vector<128x4xf32>
    %200 = arith.subf %199, %195 : vector<128x4xf32>
    %201 = math.exp %200 : vector<128x4xf32>
    %202 = arith.mulf %198, %201 : vector<128x4xf32>
    %203 = arith.addf %150, %202 : vector<128x4xf32>
    %204 = vector.broadcast %148 : vector<1x4xf32> to vector<128x4xf32>
    %205 = arith.mulf %204, %195 : vector<128x4xf32>
    %cst_49 = arith.constant dense<0.000000e+00> : vector<128xf32>
    %206 = vector.multi_reduction <add>, %205, %cst_49 [1] : vector<128x4xf32> to vector<128xf32>
    %207 = vector.shape_cast %206 : vector<128xf32> to vector<128x1xf32>
    %208 = arith.subf %146, %207 : vector<128x1xf32>
    %209 = vector.extract_strided_slice %1 {offsets = [3, 0], sizes = [1, 4], strides = [1, 1]} : vector<4x4xf32> to vector<1x4xf32>
    %210 = vector.extract_strided_slice %3 {offsets = [3, 0], sizes = [1, 4], strides = [1, 1]} : vector<4x4xf32> to vector<1x4xf32>
    %211 = vector.broadcast %209 : vector<1x4xf32> to vector<128x4xf32>
    %212 = arith.mulf %203, %211 : vector<128x4xf32>
    %c3 = arith.constant 3 : index
    %c0_50 = arith.constant 0 : index
    %c0_51 = arith.constant 0 : index
    %213 = vector.load %arg3[%c3, %c0_50, %c0_51] : memref<4x4x64xf32, #tpu.memory_space<vmem>>, vector<1x4x64xf32>
    %214 = vector.shape_cast %213 : vector<1x4x64xf32> to vector<4x64xf32>
    %215 = vector.extract_strided_slice %4 {offsets = [3, 0], sizes = [1, 64], strides = [1, 1]} : vector<4x64xf32> to vector<1x64xf32>
    %216 = vector.extract_strided_slice %212 {offsets = [0, 0], sizes = [128, 1], strides = [1, 1]} : vector<128x4xf32> to vector<128x1xf32>
    %217 = vector.extract_strided_slice %214 {offsets = [0, 0], sizes = [1, 64], strides = [1, 1]} : vector<4x64xf32> to vector<1x64xf32>
    %218 = vector.broadcast %216 : vector<128x1xf32> to vector<128x64xf32>
    %219 = vector.broadcast %217 : vector<1x64xf32> to vector<128x64xf32>
    %220 = arith.mulf %218, %219 : vector<128x64xf32>
    %221 = vector.broadcast %215 : vector<1x64xf32> to vector<128x64xf32>
    %222 = arith.addf %221, %220 : vector<128x64xf32>
    %223 = vector.extract_strided_slice %212 {offsets = [0, 1], sizes = [128, 1], strides = [1, 1]} : vector<128x4xf32> to vector<128x1xf32>
    %224 = vector.extract_strided_slice %214 {offsets = [1, 0], sizes = [1, 64], strides = [1, 1]} : vector<4x64xf32> to vector<1x64xf32>
    %225 = vector.broadcast %223 : vector<128x1xf32> to vector<128x64xf32>
    %226 = vector.broadcast %224 : vector<1x64xf32> to vector<128x64xf32>
    %227 = arith.mulf %225, %226 : vector<128x64xf32>
    %228 = arith.addf %222, %227 : vector<128x64xf32>
    %229 = vector.extract_strided_slice %212 {offsets = [0, 2], sizes = [128, 1], strides = [1, 1]} : vector<128x4xf32> to vector<128x1xf32>
    %230 = vector.extract_strided_slice %214 {offsets = [2, 0], sizes = [1, 64], strides = [1, 1]} : vector<4x64xf32> to vector<1x64xf32>
    %231 = vector.broadcast %229 : vector<128x1xf32> to vector<128x64xf32>
    %232 = vector.broadcast %230 : vector<1x64xf32> to vector<128x64xf32>
    %233 = arith.mulf %231, %232 : vector<128x64xf32>
    %234 = arith.addf %228, %233 : vector<128x64xf32>
    %235 = vector.extract_strided_slice %212 {offsets = [0, 3], sizes = [128, 1], strides = [1, 1]} : vector<128x4xf32> to vector<128x1xf32>
    %236 = vector.extract_strided_slice %214 {offsets = [3, 0], sizes = [1, 64], strides = [1, 1]} : vector<4x64xf32> to vector<1x64xf32>
    %237 = vector.broadcast %235 : vector<128x1xf32> to vector<128x64xf32>
    %238 = vector.broadcast %236 : vector<1x64xf32> to vector<128x64xf32>
    %239 = arith.mulf %237, %238 : vector<128x64xf32>
    %240 = arith.addf %234, %239 : vector<128x64xf32>
    %241 = math.tanh %240 : vector<128x64xf32>
    %c3_52 = arith.constant 3 : index
    %c0_53 = arith.constant 0 : index
    %c0_54 = arith.constant 0 : index
    %242 = vector.load %arg5[%c3_52, %c0_53, %c0_54] : memref<4x64x64xf32, #tpu.memory_space<vmem>>, vector<1x64x64xf32>
    %243 = vector.shape_cast %242 : vector<1x64x64xf32> to vector<64x64xf32>
    %cst_55 = arith.constant dense<0.000000e+00> : vector<128x64xf32>
    %244 = tpu.matmul %241, %243, %cst_55 {dimension_numbers = #tpu.dot_dimension_numbers<[1], [0], [0], [1], [0, 0, 1, 1], [], []>} : vector<128x64xf32>, vector<64x64xf32>, vector<128x64xf32> -> vector<128x64xf32>
    %245 = vector.extract_strided_slice %5 {offsets = [3, 0], sizes = [1, 64], strides = [1, 1]} : vector<4x64xf32> to vector<1x64xf32>
    %246 = vector.broadcast %245 : vector<1x64xf32> to vector<128x64xf32>
    %247 = arith.addf %244, %246 : vector<128x64xf32>
    %248 = math.tanh %247 : vector<128x64xf32>
    %c3_56 = arith.constant 3 : index
    %c0_57 = arith.constant 0 : index
    %c0_58 = arith.constant 0 : index
    %249 = vector.load %arg7[%c3_56, %c0_57, %c0_58] : memref<4x64x8xf32, #tpu.memory_space<vmem>>, vector<1x64x8xf32>
    %250 = vector.shape_cast %249 : vector<1x64x8xf32> to vector<64x8xf32>
    %cst_59 = arith.constant dense<0.000000e+00> : vector<128x8xf32>
    %251 = tpu.matmul %248, %250, %cst_59 {dimension_numbers = #tpu.dot_dimension_numbers<[1], [0], [0], [1], [0, 0, 1, 1], [], []>} : vector<128x64xf32>, vector<64x8xf32>, vector<128x8xf32> -> vector<128x8xf32>
    %252 = vector.extract_strided_slice %6 {offsets = [3, 0], sizes = [1, 8], strides = [1, 1]} : vector<4x8xf32> to vector<1x8xf32>
    %253 = vector.broadcast %252 : vector<1x8xf32> to vector<128x8xf32>
    %254 = arith.addf %251, %253 : vector<128x8xf32>
    %255 = vector.extract_strided_slice %254 {offsets = [0, 0], sizes = [128, 4], strides = [1, 1]} : vector<128x8xf32> to vector<128x4xf32>
    %256 = vector.extract_strided_slice %254 {offsets = [0, 4], sizes = [128, 4], strides = [1, 1]} : vector<128x8xf32> to vector<128x4xf32>
    %257 = math.tanh %256 : vector<128x4xf32>
    %258 = arith.subf %203, %255 : vector<128x4xf32>
    %259 = vector.broadcast %210 : vector<1x4xf32> to vector<128x4xf32>
    %260 = arith.mulf %259, %258 : vector<128x4xf32>
    %cst_60 = arith.constant 0.000000e+00 : f32
    %261 = vector.broadcast %cst_60 : f32 to vector<128x4xf32>
    %262 = arith.subf %261, %257 : vector<128x4xf32>
    %263 = math.exp %262 : vector<128x4xf32>
    %264 = arith.mulf %260, %263 : vector<128x4xf32>
    %265 = arith.addf %212, %264 : vector<128x4xf32>
    %266 = vector.broadcast %210 : vector<1x4xf32> to vector<128x4xf32>
    %267 = arith.mulf %266, %257 : vector<128x4xf32>
    %cst_61 = arith.constant dense<0.000000e+00> : vector<128xf32>
    %268 = vector.multi_reduction <add>, %267, %cst_61 [1] : vector<128x4xf32> to vector<128xf32>
    %269 = vector.shape_cast %268 : vector<128xf32> to vector<128x1xf32>
    %270 = arith.subf %208, %269 : vector<128x1xf32>
    %c0_62 = arith.constant 0 : index
    %c0_63 = arith.constant 0 : index
    %271 = vector.load %arg9[%c0_62, %c0_63] : memref<128x4xf32, #tpu.memory_space<vmem>>, vector<128x4xf32>
    tpu.vector_store %arg9[%c0_62, %c0_63], %265 {strides = array<i32>} : memref<128x4xf32, #tpu.memory_space<vmem>>, vector<128x4xf32>,
    %c0_64 = arith.constant 0 : index
    %c0_65 = arith.constant 0 : index
    %272 = vector.load %arg10[%c0_64, %c0_65] : memref<128x1xf32, #tpu.memory_space<vmem>>, vector<128x1xf32>
    tpu.vector_store %arg10[%c0_64, %c0_65], %270 {strides = array<i32>} : memref<128x1xf32, #tpu.memory_space<vmem>>, vector<128x1xf32>,
    return
  }
  func.func @transform_0(%arg0: i32) -> (i32, i32) {
    %c0_i32 = arith.constant 0 : i32
    %c0_i32_0 = arith.constant 0 : i32
    return %arg0, %c0_i32 : i32, i32
  }
  func.func @transform_1(%arg0: i32) -> (i32, i32) {
    %c0_i32 = arith.constant 0 : i32
    %c0_i32_0 = arith.constant 0 : i32
    %c0_i32_1 = arith.constant 0 : i32
    return %c0_i32, %c0_i32_0 : i32, i32
  }
  func.func @transform_2(%arg0: i32) -> (i32, i32, i32) {
    %c0_i32 = arith.constant 0 : i32
    %c0_i32_0 = arith.constant 0 : i32
    %c0_i32_1 = arith.constant 0 : i32
    %c0_i32_2 = arith.constant 0 : i32
    return %c0_i32, %c0_i32_0, %c0_i32_1 : i32, i32, i32
  }
  func.func @transform_3(%arg0: i32) -> (i32, i32) {
    %c0_i32 = arith.constant 0 : i32
    %c0_i32_0 = arith.constant 0 : i32
    %c0_i32_1 = arith.constant 0 : i32
    return %c0_i32, %c0_i32_0 : i32, i32
  }
  func.func @transform_4(%arg0: i32) -> (i32, i32, i32) {
    %c0_i32 = arith.constant 0 : i32
    %c0_i32_0 = arith.constant 0 : i32
    %c0_i32_1 = arith.constant 0 : i32
    %c0_i32_2 = arith.constant 0 : i32
    return %c0_i32, %c0_i32_0, %c0_i32_1 : i32, i32, i32
  }
  func.func @transform_5(%arg0: i32) -> (i32, i32) {
    %c0_i32 = arith.constant 0 : i32
    %c0_i32_0 = arith.constant 0 : i32
    %c0_i32_1 = arith.constant 0 : i32
    return %c0_i32, %c0_i32_0 : i32, i32
  }
  func.func @transform_6(%arg0: i32) -> (i32, i32, i32) {
    %c0_i32 = arith.constant 0 : i32
    %c0_i32_0 = arith.constant 0 : i32
    %c0_i32_1 = arith.constant 0 : i32
    %c0_i32_2 = arith.constant 0 : i32
    return %c0_i32, %c0_i32_0, %c0_i32_1 : i32, i32, i32
  }
  func.func @transform_7(%arg0: i32) -> (i32, i32) {
    %c0_i32 = arith.constant 0 : i32
    %c0_i32_0 = arith.constant 0 : i32
    %c0_i32_1 = arith.constant 0 : i32
    return %c0_i32, %c0_i32_0 : i32, i32
  }
  func.func @transform_8(%arg0: i32) -> (i32, i32) {
    %c0_i32 = arith.constant 0 : i32
    %c0_i32_0 = arith.constant 0 : i32
    return %arg0, %c0_i32 : i32, i32
  }
  func.func @transform_9(%arg0: i32) -> (i32, i32) {
    %c0_i32 = arith.constant 0 : i32
    %c0_i32_0 = arith.constant 0 : i32
    return %arg0, %c0_i32 : i32, i32
  }
}

</mosaic_0001>

<llo_original>
// kernel: realnvp_forward.1
$region0: #{realnvp_forward.1}
  #allocation0 [shape = 'u32[]', space=smem, size = 0x4, offset = 0x4, fixed_abs, tag = 'smem constant byte address 0x4 - core index']
  #allocation1 [shape = 'u32[144,128]{1,0:T(1,128)}', space=vmem, size = 0x12000, scoped, tag = 'internal scratch']
  %s0 = inlined_call_operand.vmem [shape: f32[256,4], index: 0, kind: input, shape index: {}]
  %s1 = inlined_call_operand.vmem [shape: f32[4,4], index: 1, kind: input, shape index: {}]
  %s2 = inlined_call_operand.vmem [shape: f32[4,4,64], index: 2, kind: input, shape index: {}]
  %s3 = inlined_call_operand.vmem [shape: f32[4,64], index: 3, kind: input, shape index: {}]
  %s4 = inlined_call_operand.vmem [shape: f32[4,64,64], index: 4, kind: input, shape index: {}]
  %s5 = inlined_call_operand.vmem [shape: f32[4,64], index: 5, kind: input, shape index: {}]
  %s6 = inlined_call_operand.vmem [shape: f32[4,64,8], index: 6, kind: input, shape index: {}]
  %s7 = inlined_call_operand.vmem [shape: f32[4,8], index: 7, kind: input, shape index: {}]
  %s8 = inlined_call_operand.vmem [shape: f32[256,4], index: 8, kind: output, shape index: {0}]
  %s9 = inlined_call_operand.vmem [shape: f32[256,1], index: 9, kind: output, shape index: {1}]
  %10 = xla_tuple %s8, %s9
  %s11 = sld [smem:[#allocation0]]
  $region73: #{realnvp_forward.1} parent=0
    _
  %s13 = ssub.s32 1, %s11
  %s14 = scalar_select 0, %s13, %s11
  loop: start=0, step=1, limit=4
  $region2: #{realnvp_forward.1} parent=0 // loop_pre_header
    _
  $region3: #{realnvp_forward.1} parent=0 // loop_header
    %s16 = sphi 0, %s20
    %p17 = scmp.ge.s32.totalorder %s16, 4
    %s26 = sphi 0, %s28
    %s29 = sphi 0, %s26
    %s30 = sphi 0, %s29
    %s46 = sphi 0, %s30
    %s50 = sphi 0, %s50
    %s52 = sphi 0, %s50
    %s53 = sphi 0, %s52
    %s67 = sphi 0, %s53
    %s71 = sphi 0, %s71
    %s73 = sphi 0, %s71
    %s74 = sphi 0, %s73
    %s88 = sphi 0, %s74
    %s92 = sphi 0, %s92
    %s94 = sphi 0, %s92
    %s95 = sphi 0, %s94
    %s109 = sphi 0, %s95
    %s113 = sphi 0, %s113
    %s115 = sphi 0, %s113
    %s116 = sphi 0, %s115
    %s130 = sphi 0, %s116
    %s134 = sphi 0, %s134
    %s136 = sphi 0, %s134
    %s137 = sphi 0, %s136
    %s151 = sphi 0, %s137
    %s155 = sphi 0, %s155
    %s157 = sphi 0, %s155
    %s158 = sphi 0, %s157
    %s172 = sphi 0, %s158
    %s176 = sphi 0, %s176
    %s178 = sphi 0, %s176
    %s179 = sphi 0, %s178
    %s193 = sphi 0, %s179
    %s199 = sphi 0, %s201
    %s202 = sphi 0, %s199
    %s203 = sphi 0, %s202
    %s219 = sphi 0, %s203
    %s225 = sphi 0, %s227
    %s228 = sphi 0, %s225
    %s229 = sphi 0, %s228
    %s245 = sphi 0, %s229
  $region4: #{realnvp_forward.1} parent=0 // loop_header_branch
    %19 = sbr.rel (%p17) target = $region8
  $region5: #{realnvp_forward.1} parent=0 // loop_body
    %s21 = ssub.s32 %s16, 1
    %s22 = ssub.s32 %s16, 2
    %s23 = sadd.s32 %s16, 1
    %s24 = ssub.s32 %s16, %s23
    %p25 = scmp.eq.s32.totalorder %s24, 0
    %s27 = sadd.s32 %s26, 1
    %s28 = scalar_select %p25, %s26, %s27
    %p31 = pneg %p25
    %p32 = scmp.eq.s32.totalorder %s16, 1
    %p33 = por %p31, %p32
    %p34 = scmp.ne.s32.totalorder %s26, %s29
    %p35 = scmp.eq.s32.totalorder %s16, 0
    %p36 = por %p34, %p35
    %p37 = scmp.ne.s32.totalorder %s26, %s29
    %p38 = scmp.eq.s32.totalorder %s21, 1
    %p39 = por %p37, %p38
    %p40 = scmp.ne.s32.totalorder %s29, %s30
    %p41 = scmp.eq.s32.totalorder %s21, 0
    %p42 = por %p40, %p41
    %p43 = scmp.ne.s32.totalorder %s29, %s30
    %p44 = scmp.eq.s32.totalorder %s22, 1
    %p45 = por %p43, %p44
    %p47 = scmp.ne.s32.totalorder %s30, %s46
    %p48 = scmp.eq.s32.totalorder %s22, 0
    %p49 = por %p47, %p48
    %s51 = sadd.s32 %s50, 1
    %p54 = scmp.eq.s32.totalorder %s16, 1
    %p55 = scmp.ne.s32.totalorder %s50, %s52
    %p56 = scmp.eq.s32.totalorder %s16, 0
    %p57 = por %p55, %p56
    %p58 = scmp.ne.s32.totalorder %s50, %s52
    %p59 = scmp.eq.s32.totalorder %s21, 1
    %p60 = por %p58, %p59
    %p61 = scmp.ne.s32.totalorder %s52, %s53
    %p62 = scmp.eq.s32.totalorder %s21, 0
    %p63 = por %p61, %p62
    %p64 = scmp.ne.s32.totalorder %s52, %s53
    %p65 = scmp.eq.s32.totalorder %s22, 1
    %p66 = por %p64, %p65
    %p68 = scmp.ne.s32.totalorder %s53, %s67
    %p69 = scmp.eq.s32.totalorder %s22, 0
    %p70 = por %p68, %p69
    %s72 = sadd.s32 %s71, 1
    %p75 = scmp.eq.s32.totalorder %s16, 1
    %p76 = scmp.ne.s32.totalorder %s71, %s73
    %p77 = scmp.eq.s32.totalorder %s16, 0
    %p78 = por %p76, %p77
    %p79 = scmp.ne.s32.totalorder %s71, %s73
    %p80 = scmp.eq.s32.totalorder %s21, 1
    %p81 = por %p79, %p80
    %p82 = scmp.ne.s32.totalorder %s73, %s74
    %p83 = scmp.eq.s32.totalorder %s21, 0
    %p84 = por %p82, %p83
    %p85 = scmp.ne.s32.totalorder %s73, %s74
    %p86 = scmp.eq.s32.totalorder %s22, 1
    %p87 = por %p85, %p86
    %p89 = scmp.ne.s32.totalorder %s74, %s88
    %p90 = scmp.eq.s32.totalorder %s22, 0
    %p91 = por %p89, %p90
    %s93 = sadd.s32 %s92, 1
    %p96 = scmp.eq.s32.totalorder %s16, 1
    %p97 = scmp.ne.s32.totalorder %s92, %s94
    %p98 = scmp.eq.s32.totalorder %s16, 0
    %p99 = por %p97, %p98
    %p100 = scmp.ne.s32.totalorder %s92, %s94
    %p101 = scmp.eq.s32.totalorder %s21, 1
    %p102 = por %p100, %p101
    %p103 = scmp.ne.s32.totalorder %s94, %s95
    %p104 = scmp.eq.s32.totalorder %s21, 0
    %p105 = por %p103, %p104
    %p106 = scmp.ne.s32.totalorder %s94, %s95
    %p107 = scmp.eq.s32.totalorder %s22, 1
    %p108 = por %p106, %p107
    %p110 = scmp.ne.s32.totalorder %s95, %s109
    %p111 = scmp.eq.s32.totalorder %s22, 0
    %p112 = por %p110, %p111
    %s114 = sadd.s32 %s113, 1
    %p117 = scmp.eq.s32.totalorder %s16, 1
    %p118 = scmp.ne.s32.totalorder %s113, %s115
    %p119 = scmp.eq.s32.totalorder %s16, 0
    %p120 = por %p118, %p119
    %p121 = scmp.ne.s32.totalorder %s113, %s115
    %p122 = scmp.eq.s32.totalorder %s21, 1
    %p123 = por %p121, %p122
    %p124 = scmp.ne.s32.totalorder %s115, %s116
    %p125 = scmp.eq.s32.totalorder %s21, 0
    %p126 = por %p124, %p125
    %p127 = scmp.ne.s32.totalorder %s115, %s116
    %p128 = scmp.eq.s32.totalorder %s22, 1
    %p129 = por %p127, %p128
    %p131 = scmp.ne.s32.totalorder %s116, %s130
    %p132 = scmp.eq.s32.totalorder %s22, 0
    %p133 = por %p131, %p132
    %s135 = sadd.s32 %s134, 1
    %p138 = scmp.eq.s32.totalorder %s16, 1
    %p139 = scmp.ne.s32.totalorder %s134, %s136
    %p140 = scmp.eq.s32.totalorder %s16, 0
    %p141 = por %p139, %p140
    %p142 = scmp.ne.s32.totalorder %s134, %s136
    %p143 = scmp.eq.s32.totalorder %s21, 1
    %p144 = por %p142, %p143
    %p145 = scmp.ne.s32.totalorder %s136, %s137
    %p146 = scmp.eq.s32.totalorder %s21, 0
    %p147 = por %p145, %p146
    %p148 = scmp.ne.s32.totalorder %s136, %s137
    %p149 = scmp.eq.s32.totalorder %s22, 1
    %p150 = por %p148, %p149
    %p152 = scmp.ne.s32.totalorder %s137, %s151
    %p153 = scmp.eq.s32.totalorder %s22, 0
    %p154 = por %p152, %p153
    %s156 = sadd.s32 %s155, 1
    %p159 = scmp.eq.s32.totalorder %s16, 1
    %p160 = scmp.ne.s32.totalorder %s155, %s157
    %p161 = scmp.eq.s32.totalorder %s16, 0
    %p162 = por %p160, %p161
    %p163 = scmp.ne.s32.totalorder %s155, %s157
    %p164 = scmp.eq.s32.totalorder %s21, 1
    %p165 = por %p163, %p164
    %p166 = scmp.ne.s32.totalorder %s157, %s158
    %p167 = scmp.eq.s32.totalorder %s21, 0
    %p168 = por %p166, %p167
    %p169 = scmp.ne.s32.totalorder %s157, %s158
    %p170 = scmp.eq.s32.totalorder %s22, 1
    %p171 = por %p169, %p170
    %p173 = scmp.ne.s32.totalorder %s158, %s172
    %p174 = scmp.eq.s32.totalorder %s22, 0
    %p175 = por %p173, %p174
    %s177 = sadd.s32 %s176, 1
    %p180 = scmp.eq.s32.totalorder %s16, 1
    %p181 = scmp.ne.s32.totalorder %s176, %s178
    %p182 = scmp.eq.s32.totalorder %s16, 0
    %p183 = por %p181, %p182
    %p184 = scmp.ne.s32.totalorder %s176, %s178
    %p185 = scmp.eq.s32.totalorder %s21, 1
    %p186 = por %p184, %p185
    %p187 = scmp.ne.s32.totalorder %s178, %s179
    %p188 = scmp.eq.s32.totalorder %s21, 0
    %p189 = por %p187, %p188
    %p190 = scmp.ne.s32.totalorder %s178, %s179
    %p191 = scmp.eq.s32.totalorder %s22, 1
    %p192 = por %p190, %p191
    %p194 = scmp.ne.s32.totalorder %s179, %s193
    %p195 = scmp.eq.s32.totalorder %s22, 0
    %p196 = por %p194, %p195
    %s197 = ssub.s32 %s16, %s23
    %p198 = scmp.eq.s32.totalorder %s197, 0
    %s200 = sadd.s32 %s199, 1
    %s201 = scalar_select %p198, %s199, %s200
    %p204 = pneg %p198
    %p205 = scmp.eq.s32.totalorder %s16, 1
    %p206 = por %p204, %p205
    %p207 = scmp.ne.s32.totalorder %s199, %s202
    %p208 = scmp.eq.s32.totalorder %s16, 0
    %p209 = por %p207, %p208
    %p210 = scmp.ne.s32.totalorder %s199, %s202
    %p211 = scmp.eq.s32.totalorder %s21, 1
    %p212 = por %p210, %p211
    %p213 = scmp.ne.s32.totalorder %s202, %s203
    %p214 = scmp.eq.s32.totalorder %s21, 0
    %p215 = por %p213, %p214
    %p216 = scmp.ne.s32.totalorder %s202, %s203
    %p217 = scmp.eq.s32.totalorder %s22, 1
    %p218 = por %p216, %p217
    %p220 = scmp.ne.s32.totalorder %s203, %s219
    %p221 = scmp.eq.s32.totalorder %s22, 0
    %p222 = por %p220, %p221
    %s223 = ssub.s32 %s16, %s23
    %p224 = scmp.eq.s32.totalorder %s223, 0
    %s226 = sadd.s32 %s225, 1
    %s227 = scalar_select %p224, %s225, %s226
    %p230 = pneg %p224
    %p231 = scmp.eq.s32.totalorder %s16, 1
    %p232 = por %p230, %p231
    %p233 = scmp.ne.s32.totalorder %s225, %s228
    %p234 = scmp.eq.s32.totalorder %s16, 0
    %p235 = por %p233, %p234
    %p236 = scmp.ne.s32.totalorder %s225, %s228
    %p237 = scmp.eq.s32.totalorder %s21, 1
    %p238 = por %p236, %p237
    %p239 = scmp.ne.s32.totalorder %s228, %s229
    %p240 = scmp.eq.s32.totalorder %s21, 0
    %p241 = por %p239, %p240
    %p242 = scmp.ne.s32.totalorder %s228, %s229
    %p243 = scmp.eq.s32.totalorder %s22, 1
    %p244 = por %p242, %p243
    %p246 = scmp.ne.s32.totalorder %s229, %s245
    %p247 = scmp.eq.s32.totalorder %s22, 0
    %p248 = por %p246, %p247
    %p249 = scmp.le.s32.totalorder 1, %s16
    %p250 = scmp.lt.s32.totalorder %s16, 3
    %p251 = pnand %p249, %p250
    %p252 = pneg %p251
    // Predicated region
    $region9: #{realnvp_forward.1} parent=5 // pred_check
      _
    $region10: #{realnvp_forward.1} parent=5 // pred_check_branch
      %254 = sbr.rel (%p251) target = $region12
    $region11: #{realnvp_forward.1} parent=5 // pred_region
      %s255 = ssub.s32 %s16, 1
      // Predicated region
      $region13: #{realnvp_forward.1} parent=11 // pred_check
        %p256 = pneg %p63
      $region14: #{realnvp_forward.1} parent=11 // pred_check_branch
        %258 = sbr.rel (%p256) target = $region16
      $region15: #{realnvp_forward.1} parent=11 // pred_region
        _
      $region16: #{realnvp_forward.1} parent=11 // pred_fallthru
        _
      // Predicated region
      $region17: #{realnvp_forward.1} parent=11 // pred_check
        %p259 = pneg %p84
      $region18: #{realnvp_forward.1} parent=11 // pred_check_branch
        %261 = sbr.rel (%p259) target = $region20
      $region19: #{realnvp_forward.1} parent=11 // pred_region
        _
      $region20: #{realnvp_forward.1} parent=11 // pred_fallthru
        _
      // Predicated region
      $region21: #{realnvp_forward.1} parent=11 // pred_check
        %p262 = pneg %p105
      $region22: #{realnvp_forward.1} parent=11 // pred_check_branch
        %264 = sbr.rel (%p262) target = $region24
      $region23: #{realnvp_forward.1} parent=11 // pred_region
        _
      $region24: #{realnvp_forward.1} parent=11 // pred_fallthru
        _
      // Predicated region
      $region25: #{realnvp_forward.1} parent=11 // pred_check
        %p265 = pneg %p126
      $region26: #{realnvp_forward.1} parent=11 // pred_check_branch
        %267 = sbr.rel (%p265) target = $region28
      $region27: #{realnvp_forward.1} parent=11 // pred_region
        _
      $region28: #{realnvp_forward.1} parent=11 // pred_fallthru
        _
      // Predicated region
      $region29: #{realnvp_forward.1} parent=11 // pred_check
        %p268 = pneg %p147
      $region30: #{realnvp_forward.1} parent=11 // pred_check_branch
        %270 = sbr.rel (%p268) target = $region32
      $region31: #{realnvp_forward.1} parent=11 // pred_region
        _
      $region32: #{realnvp_forward.1} parent=11 // pred_fallthru
        _
      // Predicated region
      $region33: #{realnvp_forward.1} parent=11 // pred_check
        %p271 = pneg %p168
      $region34: #{realnvp_forward.1} parent=11 // pred_check_branch
        %273 = sbr.rel (%p271) target = $region36
      $region35: #{realnvp_forward.1} parent=11 // pred_region
        _
      $region36: #{realnvp_forward.1} parent=11 // pred_fallthru
        _
      // Predicated region
      $region37: #{realnvp_forward.1} parent=11 // pred_check
        %p274 = pneg %p189
      $region38: #{realnvp_forward.1} parent=11 // pred_check_branch
        %276 = sbr.rel (%p274) target = $region40
      $region39: #{realnvp_forward.1} parent=11 // pred_region
        _
      $region40: #{realnvp_forward.1} parent=11 // pred_fallthru
        _
    $region12: #{realnvp_forward.1} parent=5 // pred_fallthru
      _
    %p277 = scmp.lt.s32.totalorder %s16, 2
    // Predicated region
    $region41: #{realnvp_forward.1} parent=5 // pred_check
      %p278 = pneg %p277
    $region42: #{realnvp_forward.1} parent=5 // pred_check_branch
      %280 = sbr.rel (%p278) target = $region44
    $region43: #{realnvp_forward.1} parent=5 // pred_region
      // Predicated region
      $region45: #{realnvp_forward.1} parent=43 // pred_check
        %p281 = pneg %p36
      $region46: #{realnvp_forward.1} parent=43 // pred_check_branch
        %283 = sbr.rel (%p281) target = $region48
      $region47: #{realnvp_forward.1} parent=43 // pred_region
        %s284 = smul.u32 16, %s16
        %p285 = scmp.lt.s32.totalorder %s284, 31
        %s286 = scalar_select %p285, %s284, 31
        %s287 = smul.addr %s286, 8
        %s288 = scalar_lea.vmem %s0, %s287
        %s289 = smul.u32 16, %s16
      $region48: #{realnvp_forward.1} parent=43 // pred_fallthru
        _
    $region44: #{realnvp_forward.1} parent=5 // pred_fallthru
      _
    %p290 = scmp.le.s32.totalorder 1, %s16
    %p291 = scmp.lt.s32.totalorder %s16, 3
    %p292 = pnand %p290, %p291
    %p293 = pneg %p292
    // Predicated region
    $region49: #{realnvp_forward.1} parent=5 // pred_check
      _
    $region50: #{realnvp_forward.1} parent=5 // pred_check_branch
      %295 = sbr.rel (%p292) target = $region52
    $region51: #{realnvp_forward.1} parent=5 // pred_region
      %s296 = ssub.s32 %s16, 1
      %s297 = smul.u32 16, %s21
      %p298 = scmp.lt.s32.totalorder %s297, 31
      %s299 = scalar_select %p298, %s297, 31
      %s300 = smul.addr %s299, 8
      %s301 = scalar_lea.vmem %s0, %s300
      %p302 = pneg %p42
      %p303 = pneg %p39
      %p304 = pneg %p63
      %p305 = pneg %p60
      %p306 = pneg %p84
      %p307 = pneg %p81
      %p308 = pneg %p105
      %p309 = pneg %p102
      %p310 = pneg %p126
      %p311 = pneg %p123
      %p312 = pneg %p147
      %p313 = pneg %p144
      %p314 = pneg %p168
      %p315 = pneg %p165
      %p316 = pneg %p189
      %p317 = pneg %p186
      %p318 = pneg %p215
      %p319 = pneg %p212
      %s320 = smul.u32 16, %s21
      %p321 = scmp.lt.s32.totalorder %s320, 31
      %s322 = scalar_select %p321, %s320, 31
      %s323 = smul.addr %s322, 8
      %s324 = scalar_lea.vmem %s8, %s323
      %p325 = pneg %p241
      %p326 = pneg %p238
      %s327 = smul.u32 16, %s21
      %p328 = scmp.lt.s32.totalorder %s327, 31
      %s329 = scalar_select %p328, %s327, 31
      %s330 = smul.addr %s329, 8
      %s331 = scalar_lea.vmem %s9, %s330
      %s332 = smul.u32 16, %s21
      %p333 = scmp.lt.s32.totalorder %s332, 31
      %s334 = scalar_select %p333, %s332, 31
      %s335 = smul.addr %s334, 8
      %s336 = scalar_lea.vmem %s0, %s335
      %s337 = smul.u32 16, %s21
      %s338 = smul.u32 16, %s21
      %p339 = scmp.lt.s32.totalorder %s338, 31
      %s340 = scalar_select %p339, %s338, 31
      %s341 = smul.addr %s340, 8
      %s342 = scalar_lea.vmem %s8, %s341
      %s343 = smul.u32 16, %s21
      %s344 = smul.u32 16, %s21
      %p345 = scmp.lt.s32.totalorder %s344, 31
      %s346 = scalar_select %p345, %s344, 31
      %s347 = smul.addr %s346, 8
      %s348 = scalar_lea.vmem %s9, %s347
      %s349 = smul.u32 16, %s21
      %v350 = vld [vmem:[%s336] sm:$0xff]
      %v351 = vld [vmem:[%s336 + $0x8] sm:$0xff]
      %v352 = vld [vmem:[%s336 + $0x10] sm:$0xff]
      %v353 = vld [vmem:[%s336 + $0x18] sm:$0xff]
      %v354 = vld [vmem:[%s336 + $0x20] sm:$0xff]
      %v355 = vld [vmem:[%s336 + $0x28] sm:$0xff]
      %v356 = vld [vmem:[%s336 + $0x30] sm:$0xff]
      %v357 = vld [vmem:[%s336 + $0x38] sm:$0xff]
      %v358 = vld [vmem:[%s336 + $0x40] sm:$0xff]
      %v359 = vld [vmem:[%s336 + $0x48] sm:$0xff]
      %v360 = vld [vmem:[%s336 + $0x50] sm:$0xff]
      %v361 = vld [vmem:[%s336 + $0x58] sm:$0xff]
      %v362 = vld [vmem:[%s336 + $0x60] sm:$0xff]
      %v363 = vld [vmem:[%s336 + $0x68] sm:$0xff]
      %v364 = vld [vmem:[%s336 + $0x70] sm:$0xff]
      %v365 = vld [vmem:[%s336 + $0x78] sm:$0xff]
      %v366 = vld [vmem:[%s1] sm:$0xf]
      %v367 = vsub.f32 1.0, %v366
      %v368 = vld [vmem:[%s3] sm:$0xf]
      %v369 = vld [vmem:[%s5] sm:$0xf]
      %v370 = vld [vmem:[%s7] sm:$0xf]
      %v371 = vlog2.pop %v350
      %v372 = vmul.f32 %v371, 0.6931472
      %v373 = vlog2.pop %v351
      %v374 = vmul.f32 %v373, 0.6931472
      %v375 = vlog2.pop %v352
      %v376 = vmul.f32 %v375, 0.6931472
      %v377 = vlog2.pop %v353
      %v378 = vmul.f32 %v377, 0.6931472
      %v379 = vlog2.pop %v354
      %v380 = vmul.f32 %v379, 0.6931472
      %v381 = vlog2.pop %v355
      %v382 = vmul.f32 %v381, 0.6931472
      %v383 = vlog2.pop %v356
      %v384 = vmul.f32 %v383, 0.6931472
      %v385 = vlog2.pop %v357
      %v386 = vmul.f32 %v385, 0.6931472
      %v387 = vlog2.pop %v358
      %v388 = vmul.f32 %v387, 0.6931472
      %v389 = vlog2.pop %v359
      %v390 = vmul.f32 %v389, 0.6931472
      %v391 = vlog2.pop %v360
      %v392 = vmul.f32 %v391, 0.6931472
      %v393 = vlog2.pop %v361
      %v394 = vmul.f32 %v393, 0.6931472
      %v395 = vlog2.pop %v362
      %v396 = vmul.f32 %v395, 0.6931472
      %v397 = vlog2.pop %v363
      %v398 = vmul.f32 %v397, 0.6931472
      %v399 = vlog2.pop %v364
      %v400 = vmul.f32 %v399, 0.6931472
      %v401 = vlog2.pop %v365
      %v402 = vmul.f32 %v401, 0.6931472
      %v403 = vsub.f32 1.0, %v350
      %v404 = vsub.f32 1.0, %v351
      %v405 = vsub.f32 1.0, %v352
      %v406 = vsub.f32 1.0, %v353
      %v407 = vsub.f32 1.0, %v354
      %v408 = vsub.f32 1.0, %v355
      %v409 = vsub.f32 1.0, %v356
      %v410 = vsub.f32 1.0, %v357
      %v411 = vsub.f32 1.0, %v358
      %v412 = vsub.f32 1.0, %v359
      %v413 = vsub.f32 1.0, %v360
      %v414 = vsub.f32 1.0, %v361
      %v415 = vsub.f32 1.0, %v362
      %v416 = vsub.f32 1.0, %v363
      %v417 = vsub.f32 1.0, %v364
      %v418 = vsub.f32 1.0, %v365
      %v419 = vlog2.pop %v403
      %v420 = vmul.f32 %v419, 0.6931472
      %v421 = vlog2.pop %v404
      %v422 = vmul.f32 %v421, 0.6931472
      %v423 = vlog2.pop %v405
      %v424 = vmul.f32 %v423, 0.6931472
      %v425 = vlog2.pop %v406
      %v426 = vmul.f32 %v425, 0.6931472
      %v427 = vlog2.pop %v407
      %v428 = vmul.f32 %v427, 0.6931472
      %v429 = vlog2.pop %v408
      %v430 = vmul.f32 %v429, 0.6931472
      %v431 = vlog2.pop %v409
      %v432 = vmul.f32 %v431, 0.6931472
      %v433 = vlog2.pop %v410
      %v434 = vmul.f32 %v433, 0.6931472
      %v435 = vlog2.pop %v411
      %v436 = vmul.f32 %v435, 0.6931472
      %v437 = vlog2.pop %v412
      %v438 = vmul.f32 %v437, 0.6931472
      %v439 = vlog2.pop %v413
      %v440 = vmul.f32 %v439, 0.6931472
      %v441 = vlog2.pop %v414
      %v442 = vmul.f32 %v441, 0.6931472
      %v443 = vlog2.pop %v415
      %v444 = vmul.f32 %v443, 0.6931472
      %v445 = vlog2.pop %v416
      %v446 = vmul.f32 %v445, 0.6931472
      %v447 = vlog2.pop %v417
      %v448 = vmul.f32 %v447, 0.6931472
      %v449 = vlog2.pop %v418
      %v450 = vmul.f32 %v449, 0.6931472
      %v451 = vsub.f32 %v372, %v420
      %v452 = vsub.f32 %v374, %v422
      %v453 = vsub.f32 %v376, %v424
      %v454 = vsub.f32 %v378, %v426
      %v455 = vsub.f32 %v380, %v428
      %v456 = vsub.f32 %v382, %v430
      %v457 = vsub.f32 %v384, %v432
      %v458 = vsub.f32 %v386, %v434
      %v459 = vsub.f32 %v388, %v436
      %v460 = vsub.f32 %v390, %v438
      %v461 = vsub.f32 %v392, %v440
      %v462 = vsub.f32 %v394, %v442
      %v463 = vsub.f32 %v396, %v444
      %v464 = vsub.f32 %v398, %v446
      %v465 = vsub.f32 %v400, %v448
      %v466 = vsub.f32 %v402, %v450
      %v467 = vand.u32 2147483647, %v451
      %v468 = vand.u32 2147483647, %v452
      %v469 = vand.u32 2147483647, %v453
      %v470 = vand.u32 2147483647, %v454
      %v471 = vand.u32 2147483647, %v455
      %v472 = vand.u32 2147483647, %v456
      %v473 = vand.u32 2147483647, %v457
      %v474 = vand.u32 2147483647, %v458
      %v475 = vand.u32 2147483647, %v459
      %v476 = vand.u32 2147483647, %v460
      %v477 = vand.u32 2147483647, %v461
      %v478 = vand.u32 2147483647, %v462
      %v479 = vand.u32 2147483647, %v463
      %v480 = vand.u32 2147483647, %v464
      %v481 = vand.u32 2147483647, %v465
      %v482 = vand.u32 2147483647, %v466
      %v483 = vlog2.pop %v467
      %v484 = vmul.f32 %v483, 0.6931472
      %v485 = vlog2.pop %v468
      %v486 = vmul.f32 %v485, 0.6931472
      %v487 = vlog2.pop %v469
      %v488 = vmul.f32 %v487, 0.6931472
      %v489 = vlog2.pop %v470
      %v490 = vmul.f32 %v489, 0.6931472
      %v491 = vlog2.pop %v471
      %v492 = vmul.f32 %v491, 0.6931472
      %v493 = vlog2.pop %v472
      %v494 = vmul.f32 %v493, 0.6931472
      %v495 = vlog2.pop %v473
      %v496 = vmul.f32 %v495, 0.6931472
      %v497 = vlog2.pop %v474
      %v498 = vmul.f32 %v497, 0.6931472
      %v499 = vlog2.pop %v475
      %v500 = vmul.f32 %v499, 0.6931472
      %v501 = vlog2.pop %v476
      %v502 = vmul.f32 %v501, 0.6931472
      %v503 = vlog2.pop %v477
      %v504 = vmul.f32 %v503, 0.6931472
      %v505 = vlog2.pop %v478
      %v506 = vmul.f32 %v505, 0.6931472
      %v507 = vlog2.pop %v479
      %v508 = vmul.f32 %v507, 0.6931472
      %v509 = vlog2.pop %v480
      %v510 = vmul.f32 %v509, 0.6931472
      %v511 = vlog2.pop %v481
      %v512 = vmul.f32 %v511, 0.6931472
      %v513 = vlog2.pop %v482
      %v514 = vmul.f32 %v513, 0.6931472
      %v515 = vsub.f32 1.0, %v451
      %v516 = vsub.f32 1.0, %v452
      %v517 = vsub.f32 1.0, %v453
      %v518 = vsub.f32 1.0, %v454
      %v519 = vsub.f32 1.0, %v455
      %v520 = vsub.f32 1.0, %v456
      %v521 = vsub.f32 1.0, %v457
      %v522 = vsub.f32 1.0, %v458
      %v523 = vsub.f32 1.0, %v459
      %v524 = vsub.f32 1.0, %v460
      %v525 = vsub.f32 1.0, %v461
      %v526 = vsub.f32 1.0, %v462
      %v527 = vsub.f32 1.0, %v463
      %v528 = vsub.f32 1.0, %v464
      %v529 = vsub.f32 1.0, %v465
      %v530 = vsub.f32 1.0, %v466
      %v531 = vand.u32 2147483647, %v515
      %v532 = vand.u32 2147483647, %v516
      %v533 = vand.u32 2147483647, %v517
      %v534 = vand.u32 2147483647, %v518
      %v535 = vand.u32 2147483647, %v519
      %v536 = vand.u32 2147483647, %v520
      %v537 = vand.u32 2147483647, %v521
      %v538 = vand.u32 2147483647, %v522
      %v539 = vand.u32 2147483647, %v523
      %v540 = vand.u32 2147483647, %v524
      %v541 = vand.u32 2147483647, %v525
      %v542 = vand.u32 2147483647, %v526
      %v543 = vand.u32 2147483647, %v527
      %v544 = vand.u32 2147483647, %v528
      %v545 = vand.u32 2147483647, %v529
      %v546 = vand.u32 2147483647, %v530
      %v547 = vlog2.pop %v531
      %v548 = vmul.f32 %v547, 0.6931472
      %v549 = vlog2.pop %v532
      %v550 = vmul.f32 %v549, 0.6931472
      %v551 = vlog2.pop %v533
      %v552 = vmul.f32 %v551, 0.6931472
      %v553 = vlog2.pop %v534
      %v554 = vmul.f32 %v553, 0.6931472
      %v555 = vlog2.pop %v535
      %v556 = vmul.f32 %v555, 0.6931472
      %v557 = vlog2.pop %v536
      %v558 = vmul.f32 %v557, 0.6931472
      %v559 = vlog2.pop %v537
      %v560 = vmul.f32 %v559, 0.6931472
      %v561 = vlog2.pop %v538
      %v562 = vmul.f32 %v561, 0.6931472
      %v563 = vlog2.pop %v539
      %v564 = vmul.f32 %v563, 0.6931472
      %v565 = vlog2.pop %v540
      %v566 = vmul.f32 %v565, 0.6931472
      %v567 = vlog2.pop %v541
      %v568 = vmul.f32 %v567, 0.6931472
      %v569 = vlog2.pop %v542
      %v570 = vmul.f32 %v569, 0.6931472
      %v571 = vlog2.pop %v543
      %v572 = vmul.f32 %v571, 0.6931472
      %v573 = vlog2.pop %v544
      %v574 = vmul.f32 %v573, 0.6931472
      %v575 = vlog2.pop %v545
      %v576 = vmul.f32 %v575, 0.6931472
      %v577 = vlog2.pop %v546
      %v578 = vmul.f32 %v577, 0.6931472
      %v579 = vadd.f32 %v484, %v548
      %v580 = vadd.f32 %v486, %v550
      %v581 = vadd.f32 %v488, %v552
      %v582 = vadd.f32 %v490, %v554
      %v583 = vadd.f32 %v492, %v556
      %v584 = vadd.f32 %v494, %v558
      %v585 = vadd.f32 %v496, %v560
      %v586 = vadd.f32 %v498, %v562
      %v587 = vadd.f32 %v500, %v564
      %v588 = vadd.f32 %v502, %v566
      %v589 = vadd.f32 %v504, %v568
      %v590 = vadd.f32 %v506, %v570
      %v591 = vadd.f32 %v508, %v572
      %v592 = vadd.f32 %v510, %v574
      %v593 = vadd.f32 %v512, %v576
      %v594 = vadd.f32 %v514, %v578
      %vm595 = vcmask 31744
      %v596 = vsel %vm595, %v579, 0.0
      %597 = vadd.xlane.f32.xlu0 %v596
      %v598 = vpop.xlane.xlu0 %597
      %v599 = vsel %vm595, %v580, 0.0
      %600 = vadd.xlane.f32.xlu0 %v599
      %v601 = vpop.xlane.xlu0 %600
      %v602 = vsel %vm595, %v581, 0.0
      %603 = vadd.xlane.f32.xlu0 %v602
      %v604 = vpop.xlane.xlu0 %603
      %v605 = vsel %vm595, %v582, 0.0
      %606 = vadd.xlane.f32.xlu0 %v605
      %v607 = vpop.xlane.xlu0 %606
      %v608 = vsel %vm595, %v583, 0.0
      %609 = vadd.xlane.f32.xlu0 %v608
      %v610 = vpop.xlane.xlu0 %609
      %v611 = vsel %vm595, %v584, 0.0
      %612 = vadd.xlane.f32.xlu0 %v611
      %v613 = vpop.xlane.xlu0 %612
      %v614 = vsel %vm595, %v585, 0.0
      %615 = vadd.xlane.f32.xlu0 %v614
      %v616 = vpop.xlane.xlu0 %615
      %v617 = vsel %vm595, %v586, 0.0
      %618 = vadd.xlane.f32.xlu0 %v617
      %v619 = vpop.xlane.xlu0 %618
      %v620 = vsel %vm595, %v587, 0.0
      %621 = vadd.xlane.f32.xlu0 %v620
      %v622 = vpop.xlane.xlu0 %621
      %v623 = vsel %vm595, %v588, 0.0
      %624 = vadd.xlane.f32.xlu0 %v623
      %v625 = vpop.xlane.xlu0 %624
      %v626 = vsel %vm595, %v589, 0.0
      %627 = vadd.xlane.f32.xlu0 %v626
      %v628 = vpop.xlane.xlu0 %627
      %v629 = vsel %vm595, %v590, 0.0
      %630 = vadd.xlane.f32.xlu0 %v629
      %v631 = vpop.xlane.xlu0 %630
      %v632 = vsel %vm595, %v591, 0.0
      %633 = vadd.xlane.f32.xlu0 %v632
      %v634 = vpop.xlane.xlu0 %633
      %v635 = vsel %vm595, %v592, 0.0
      %636 = vadd.xlane.f32.xlu0 %v635
      %v637 = vpop.xlane.xlu0 %636
      %v638 = vsel %vm595, %v593, 0.0
      %639 = vadd.xlane.f32.xlu0 %v638
      %v640 = vpop.xlane.xlu0 %639
      %v641 = vsel %vm595, %v594, 0.0
      %642 = vadd.xlane.f32.xlu0 %v641
      %v643 = vpop.xlane.xlu0 %642
      %v644 = vsub.f32 0.0, %v598
      %v645 = vsub.f32 0.0, %v601
      %v646 = vsub.f32 0.0, %v604
      %v647 = vsub.f32 0.0, %v607
      %v648 = vsub.f32 0.0, %v610
      %v649 = vsub.f32 0.0, %v613
      %v650 = vsub.f32 0.0, %v616
      %v651 = vsub.f32 0.0, %v619
      %v652 = vsub.f32 0.0, %v622
      %v653 = vsub.f32 0.0, %v625
      %v654 = vsub.f32 0.0, %v628
      %v655 = vsub.f32 0.0, %v631
      %v656 = vsub.f32 0.0, %v634
      %v657 = vsub.f32 0.0, %v637
      %v658 = vsub.f32 0.0, %v640
      %v659 = vsub.f32 0.0, %v643
      %v660 = vlaneseq
      %v661 = vshrl.u32 %v660, 7
      %v662 = vsub.s32 0, %v661
      %v663 = vrot.slane %v366, %v662
      %v664 = vmul.f32 %v451, %v663
      %v665 = vmul.f32 %v452, %v663
      %v666 = vmul.f32 %v453, %v663
      %v667 = vmul.f32 %v454, %v663
      %v668 = vmul.f32 %v455, %v663
      %v669 = vmul.f32 %v456, %v663
      %v670 = vmul.f32 %v457, %v663
      %v671 = vmul.f32 %v458, %v663
      %v672 = vmul.f32 %v459, %v663
      %v673 = vmul.f32 %v460, %v663
      %v674 = vmul.f32 %v461, %v663
      %v675 = vmul.f32 %v462, %v663
      %v676 = vmul.f32 %v463, %v663
      %v677 = vmul.f32 %v464, %v663
      %v678 = vmul.f32 %v465, %v663
      %v679 = vmul.f32 %v466, %v663
      %v680 = vld [vmem:[%s2] sm:$0xf]
      %682 = vset.pattern.permute.xlu0 0
      %683 = vperm.xlu0 %682, %v664
      %v684 = vpop.permute.xlu0 %683
      %687 = vset.pattern.permute.xlu0 0
      %688 = vperm.xlu0 %687, %v665
      %v689 = vpop.permute.xlu0 %688
      %692 = vset.pattern.permute.xlu0 0
      %693 = vperm.xlu0 %692, %v666
      %v694 = vpop.permute.xlu0 %693
      %697 = vset.pattern.permute.xlu0 0
      %698 = vperm.xlu0 %697, %v667
      %v699 = vpop.permute.xlu0 %698
      %702 = vset.pattern.permute.xlu0 0
      %703 = vperm.xlu0 %702, %v668
      %v704 = vpop.permute.xlu0 %703
      %707 = vset.pattern.permute.xlu0 0
      %708 = vperm.xlu0 %707, %v669
      %v709 = vpop.permute.xlu0 %708
      %712 = vset.pattern.permute.xlu0 0
      %713 = vperm.xlu0 %712, %v670
      %v714 = vpop.permute.xlu0 %713
      %717 = vset.pattern.permute.xlu0 0
      %718 = vperm.xlu0 %717, %v671
      %v719 = vpop.permute.xlu0 %718
      %722 = vset.pattern.permute.xlu0 0
      %723 = vperm.xlu0 %722, %v672
      %v724 = vpop.permute.xlu0 %723
      %727 = vset.pattern.permute.xlu0 0
      %728 = vperm.xlu0 %727, %v673
      %v729 = vpop.permute.xlu0 %728
      %732 = vset.pattern.permute.xlu0 0
      %733 = vperm.xlu0 %732, %v674
      %v734 = vpop.permute.xlu0 %733
      %737 = vset.pattern.permute.xlu0 0
      %738 = vperm.xlu0 %737, %v675
      %v739 = vpop.permute.xlu0 %738
      %742 = vset.pattern.permute.xlu0 0
      %743 = vperm.xlu0 %742, %v676
      %v744 = vpop.permute.xlu0 %743
      %747 = vset.pattern.permute.xlu0 0
      %748 = vperm.xlu0 %747, %v677
      %v749 = vpop.permute.xlu0 %748
      %752 = vset.pattern.permute.xlu0 0
      %753 = vperm.xlu0 %752, %v678
      %v754 = vpop.permute.xlu0 %753
      %757 = vset.pattern.permute.xlu0 0
      %758 = vperm.xlu0 %757, %v679
      %v759 = vpop.permute.xlu0 %758
      %v761 = vlaneseq
      %v762 = vshrl.u32 %v761, 7
      %v763 = vsub.s32 0, %v762
      %v764 = vrot.slane %v680, %v763
      %v765 = vmul.f32 %v684, %v764
      %v766 = vmul.f32 %v689, %v764
      %v767 = vmul.f32 %v694, %v764
      %v768 = vmul.f32 %v699, %v764
      %v769 = vmul.f32 %v704, %v764
      %v770 = vmul.f32 %v709, %v764
      %v771 = vmul.f32 %v714, %v764
      %v772 = vmul.f32 %v719, %v764
      %v773 = vmul.f32 %v724, %v764
      %v774 = vmul.f32 %v729, %v764
      %v775 = vmul.f32 %v734, %v764
      %v776 = vmul.f32 %v739, %v764
      %v777 = vmul.f32 %v744, %v764
      %v778 = vmul.f32 %v749, %v764
      %v779 = vmul.f32 %v754, %v764
      %v780 = vmul.f32 %v759, %v764
      %v781 = vlaneseq
      %v782 = vshrl.u32 %v781, 7
      %v783 = vsub.s32 0, %v782
      %v784 = vrot.slane %v368, %v783
      %v785 = vadd.f32 %v784, %v765
      %v786 = vadd.f32 %v784, %v766
      %v787 = vadd.f32 %v784, %v767
      %v788 = vadd.f32 %v784, %v768
      %v789 = vadd.f32 %v784, %v769
      %v790 = vadd.f32 %v784, %v770
      %v791 = vadd.f32 %v784, %v771
      %v792 = vadd.f32 %v784, %v772
      %v793 = vadd.f32 %v784, %v773
      %v794 = vadd.f32 %v784, %v774
      %v795 = vadd.f32 %v784, %v775
      %v796 = vadd.f32 %v784, %v776
      %v797 = vadd.f32 %v784, %v777
      %v798 = vadd.f32 %v784, %v778
      %v799 = vadd.f32 %v784, %v779
      %v800 = vadd.f32 %v784, %v780
      %801 = vset.pattern.permute.xlu0 1
      %802 = vperm.xlu0 %801, %v664
      %v803 = vpop.permute.xlu0 %802
      %805 = vset.pattern.permute.xlu0 1
      %806 = vperm.xlu0 %805, %v665
      %v807 = vpop.permute.xlu0 %806
      %809 = vset.pattern.permute.xlu0 1
      %810 = vperm.xlu0 %809, %v666
      %v811 = vpop.permute.xlu0 %810
      %813 = vset.pattern.permute.xlu0 1
      %814 = vperm.xlu0 %813, %v667
      %v815 = vpop.permute.xlu0 %814
      %817 = vset.pattern.permute.xlu0 1
      %818 = vperm.xlu0 %817, %v668
      %v819 = vpop.permute.xlu0 %818
      %821 = vset.pattern.permute.xlu0 1
      %822 = vperm.xlu0 %821, %v669
      %v823 = vpop.permute.xlu0 %822
      %825 = vset.pattern.permute.xlu0 1
      %826 = vperm.xlu0 %825, %v670
      %v827 = vpop.permute.xlu0 %826
      %829 = vset.pattern.permute.xlu0 1
      %830 = vperm.xlu0 %829, %v671
      %v831 = vpop.permute.xlu0 %830
      %833 = vset.pattern.permute.xlu0 1
      %834 = vperm.xlu0 %833, %v672
      %v835 = vpop.permute.xlu0 %834
      %837 = vset.pattern.permute.xlu0 1
      %838 = vperm.xlu0 %837, %v673
      %v839 = vpop.permute.xlu0 %838
      %841 = vset.pattern.permute.xlu0 1
      %842 = vperm.xlu0 %841, %v674
      %v843 = vpop.permute.xlu0 %842
      %845 = vset.pattern.permute.xlu0 1
      %846 = vperm.xlu0 %845, %v675
      %v847 = vpop.permute.xlu0 %846
      %849 = vset.pattern.permute.xlu0 1
      %850 = vperm.xlu0 %849, %v676
      %v851 = vpop.permute.xlu0 %850
      %853 = vset.pattern.permute.xlu0 1
      %854 = vperm.xlu0 %853, %v677
      %v855 = vpop.permute.xlu0 %854
      %857 = vset.pattern.permute.xlu0 1
      %858 = vperm.xlu0 %857, %v678
      %v859 = vpop.permute.xlu0 %858
      %861 = vset.pattern.permute.xlu0 1
      %862 = vperm.xlu0 %861, %v679
      %v863 = vpop.permute.xlu0 %862
      %v865 = vlaneseq
      %v866 = vshrl.u32 %v865, 7
      %v867 = vsub.s32 1, %v866
      %v868 = vrot.slane %v680, %v867
      %v869 = vmul.f32 %v803, %v868
      %v870 = vmul.f32 %v807, %v868
      %v871 = vmul.f32 %v811, %v868
      %v872 = vmul.f32 %v815, %v868
      %v873 = vmul.f32 %v819, %v868
      %v874 = vmul.f32 %v823, %v868
      %v875 = vmul.f32 %v827, %v868
      %v876 = vmul.f32 %v831, %v868
      %v877 = vmul.f32 %v835, %v868
      %v878 = vmul.f32 %v839, %v868
      %v879 = vmul.f32 %v843, %v868
      %v880 = vmul.f32 %v847, %v868
      %v881 = vmul.f32 %v851, %v868
      %v882 = vmul.f32 %v855, %v868
      %v883 = vmul.f32 %v859, %v868
      %v884 = vmul.f32 %v863, %v868
      %v885 = vadd.f32 %v785, %v869
      %v886 = vadd.f32 %v786, %v870
      %v887 = vadd.f32 %v787, %v871
      %v888 = vadd.f32 %v788, %v872
      %v889 = vadd.f32 %v789, %v873
      %v890 = vadd.f32 %v790, %v874
      %v891 = vadd.f32 %v791, %v875
      %v892 = vadd.f32 %v792, %v876
      %v893 = vadd.f32 %v793, %v877
      %v894 = vadd.f32 %v794, %v878
      %v895 = vadd.f32 %v795, %v879
      %v896 = vadd.f32 %v796, %v880
      %v897 = vadd.f32 %v797, %v881
      %v898 = vadd.f32 %v798, %v882
      %v899 = vadd.f32 %v799, %v883
      %v900 = vadd.f32 %v800, %v884
      %901 = vset.pattern.permute.xlu0 2
      %902 = vperm.xlu0 %901, %v664
      %v903 = vpop.permute.xlu0 %902
      %905 = vset.pattern.permute.xlu0 2
      %906 = vperm.xlu0 %905, %v665
      %v907 = vpop.permute.xlu0 %906
      %909 = vset.pattern.permute.xlu0 2
      %910 = vperm.xlu0 %909, %v666
      %v911 = vpop.permute.xlu0 %910
      %913 = vset.pattern.permute.xlu0 2
      %914 = vperm.xlu0 %913, %v667
      %v915 = vpop.permute.xlu0 %914
      %917 = vset.pattern.permute.xlu0 2
      %918 = vperm.xlu0 %917, %v668
      %v919 = vpop.permute.xlu0 %918
      %921 = vset.pattern.permute.xlu0 2
      %922 = vperm.xlu0 %921, %v669
      %v923 = vpop.permute.xlu0 %922
      %925 = vset.pattern.permute.xlu0 2
      %926 = vperm.xlu0 %925, %v670
      %v927 = vpop.permute.xlu0 %926
      %929 = vset.pattern.permute.xlu0 2
      %930 = vperm.xlu0 %929, %v671
      %v931 = vpop.permute.xlu0 %930
      %933 = vset.pattern.permute.xlu0 2
      %934 = vperm.xlu0 %933, %v672
      %v935 = vpop.permute.xlu0 %934
      %937 = vset.pattern.permute.xlu0 2
      %938 = vperm.xlu0 %937, %v673
      %v939 = vpop.permute.xlu0 %938
      %941 = vset.pattern.permute.xlu0 2
      %942 = vperm.xlu0 %941, %v674
      %v943 = vpop.permute.xlu0 %942
      %945 = vset.pattern.permute.xlu0 2
      %946 = vperm.xlu0 %945, %v675
      %v947 = vpop.permute.xlu0 %946
      %949 = vset.pattern.permute.xlu0 2
      %950 = vperm.xlu0 %949, %v676
      %v951 = vpop.permute.xlu0 %950
      %953 = vset.pattern.permute.xlu0 2
      %954 = vperm.xlu0 %953, %v677
      %v955 = vpop.permute.xlu0 %954
      %957 = vset.pattern.permute.xlu0 2
      %958 = vperm.xlu0 %957, %v678
      %v959 = vpop.permute.xlu0 %958
      %961 = vset.pattern.permute.xlu0 2
      %962 = vperm.xlu0 %961, %v679
      %v963 = vpop.permute.xlu0 %962
      %v965 = vlaneseq
      %v966 = vshrl.u32 %v965, 7
      %v967 = vsub.s32 2, %v966
      %v968 = vrot.slane %v680, %v967
      %v969 = vmul.f32 %v903, %v968
      %v970 = vmul.f32 %v907, %v968
      %v971 = vmul.f32 %v911, %v968
      %v972 = vmul.f32 %v915, %v968
      %v973 = vmul.f32 %v919, %v968
      %v974 = vmul.f32 %v923, %v968
      %v975 = vmul.f32 %v927, %v968
      %v976 = vmul.f32 %v931, %v968
      %v977 = vmul.f32 %v935, %v968
      %v978 = vmul.f32 %v939, %v968
      %v979 = vmul.f32 %v943, %v968
      %v980 = vmul.f32 %v947, %v968
      %v981 = vmul.f32 %v951, %v968
      %v982 = vmul.f32 %v955, %v968
      %v983 = vmul.f32 %v959, %v968
      %v984 = vmul.f32 %v963, %v968
      %v985 = vadd.f32 %v885, %v969
      %v986 = vadd.f32 %v886, %v970
      %v987 = vadd.f32 %v887, %v971
      %v988 = vadd.f32 %v888, %v972
      %v989 = vadd.f32 %v889, %v973
      %v990 = vadd.f32 %v890, %v974
      %v991 = vadd.f32 %v891, %v975
      %v992 = vadd.f32 %v892, %v976
      %v993 = vadd.f32 %v893, %v977
      %v994 = vadd.f32 %v894, %v978
      %v995 = vadd.f32 %v895, %v979
      %v996 = vadd.f32 %v896, %v980
      %v997 = vadd.f32 %v897, %v981
      %v998 = vadd.f32 %v898, %v982
      %v999 = vadd.f32 %v899, %v983
      %v1000 = vadd.f32 %v900, %v984
      %1001 = vset.pattern.permute.xlu0 3
      %1002 = vperm.xlu0 %1001, %v664
      %v1003 = vpop.permute.xlu0 %1002
      %1005 = vset.pattern.permute.xlu0 3
      %1006 = vperm.xlu0 %1005, %v665
      %v1007 = vpop.permute.xlu0 %1006
      %1009 = vset.pattern.permute.xlu0 3
      %1010 = vperm.xlu0 %1009, %v666
      %v1011 = vpop.permute.xlu0 %1010
      %1013 = vset.pattern.permute.xlu0 3
      %1014 = vperm.xlu0 %1013, %v667
      %v1015 = vpop.permute.xlu0 %1014
      %1017 = vset.pattern.permute.xlu0 3
      %1018 = vperm.xlu0 %1017, %v668
      %v1019 = vpop.permute.xlu0 %1018
      %1021 = vset.pattern.permute.xlu0 3
      %1022 = vperm.xlu0 %1021, %v669
      %v1023 = vpop.permute.xlu0 %1022
      %1025 = vset.pattern.permute.xlu0 3
      %1026 = vperm.xlu0 %1025, %v670
      %v1027 = vpop.permute.xlu0 %1026
      %1029 = vset.pattern.permute.xlu0 3
      %1030 = vperm.xlu0 %1029, %v671
      %v1031 = vpop.permute.xlu0 %1030
      %1033 = vset.pattern.permute.xlu0 3
      %1034 = vperm.xlu0 %1033, %v672
      %v1035 = vpop.permute.xlu0 %1034
      %1037 = vset.pattern.permute.xlu0 3
      %1038 = vperm.xlu0 %1037, %v673
      %v1039 = vpop.permute.xlu0 %1038
      %1041 = vset.pattern.permute.xlu0 3
      %1042 = vperm.xlu0 %1041, %v674
      %v1043 = vpop.permute.xlu0 %1042
      %1045 = vset.pattern.permute.xlu0 3
      %1046 = vperm.xlu0 %1045, %v675
      %v1047 = vpop.permute.xlu0 %1046
      %1049 = vset.pattern.permute.xlu0 3
      %1050 = vperm.xlu0 %1049, %v676
      %v1051 = vpop.permute.xlu0 %1050
      %1053 = vset.pattern.permute.xlu0 3
      %1054 = vperm.xlu0 %1053, %v677
      %v1055 = vpop.permute.xlu0 %1054
      %1057 = vset.pattern.permute.xlu0 3
      %1058 = vperm.xlu0 %1057, %v678
      %v1059 = vpop.permute.xlu0 %1058
      %1061 = vset.pattern.permute.xlu0 3
      %1062 = vperm.xlu0 %1061, %v679
      %v1063 = vpop.permute.xlu0 %1062
      %v1065 = vlaneseq
      %v1066 = vshrl.u32 %v1065, 7
      %v1067 = vsub.s32 3, %v1066
      %v1068 = vrot.slane %v680, %v1067
      %v1069 = vmul.f32 %v1003, %v1068
      %v1070 = vmul.f32 %v1007, %v1068
      %v1071 = vmul.f32 %v1011, %v1068
      %v1072 = vmul.f32 %v1015, %v1068
      %v1073 = vmul.f32 %v1019, %v1068
      %v1074 = vmul.f32 %v1023, %v1068
      %v1075 = vmul.f32 %v1027, %v1068
      %v1076 = vmul.f32 %v1031, %v1068
      %v1077 = vmul.f32 %v1035, %v1068
      %v1078 = vmul.f32 %v1039, %v1068
      %v1079 = vmul.f32 %v1043, %v1068
      %v1080 = vmul.f32 %v1047, %v1068
      %v1081 = vmul.f32 %v1051, %v1068
      %v1082 = vmul.f32 %v1055, %v1068
      %v1083 = vmul.f32 %v1059, %v1068
      %v1084 = vmul.f32 %v1063, %v1068
      %v1085 = vadd.f32 %v985, %v1069
      %v1086 = vadd.f32 %v986, %v1070
      %v1087 = vadd.f32 %v987, %v1071
      %v1088 = vadd.f32 %v988, %v1072
      %v1089 = vadd.f32 %v989, %v1073
      %v1090 = vadd.f32 %v990, %v1074
      %v1091 = vadd.f32 %v991, %v1075
      %v1092 = vadd.f32 %v992, %v1076
      %v1093 = vadd.f32 %v993, %v1077
      %v1094 = vadd.f32 %v994, %v1078
      %v1095 = vadd.f32 %v995, %v1079
      %v1096 = vadd.f32 %v996, %v1080
      %v1097 = vadd.f32 %v997, %v1081
      %v1098 = vadd.f32 %v998, %v1082
      %v1099 = vadd.f32 %v999, %v1083
      %v1100 = vadd.f32 %v1000, %v1084
      %v1101 = vtanh.pop %v1085
      %v1102 = vtanh.pop %v1086
      %v1103 = vtanh.pop %v1087
      %v1104 = vtanh.pop %v1088
      %v1105 = vtanh.pop %v1089
      %v1106 = vtanh.pop %v1090
      %v1107 = vtanh.pop %v1091
      %v1108 = vtanh.pop %v1092
      %v1109 = vtanh.pop %v1093
      %v1110 = vtanh.pop %v1094
      %v1111 = vtanh.pop %v1095
      %v1112 = vtanh.pop %v1096
      %v1113 = vtanh.pop %v1097
      %v1114 = vtanh.pop %v1098
      %v1115 = vtanh.pop %v1099
      %v1116 = vtanh.pop %v1100
      %v1117 = vld [vmem:[%s4] sm:$0xff]
      %v1118 = vld [vmem:[%s4 + $0x8] sm:$0xff]
      %v1119 = vld [vmem:[%s4 + $0x10] sm:$0xff]
      %v1120 = vld [vmem:[%s4 + $0x18] sm:$0xff]
      %v1121 = vld [vmem:[%s4 + $0x20] sm:$0xff]
      %v1122 = vld [vmem:[%s4 + $0x28] sm:$0xff]
      %v1123 = vld [vmem:[%s4 + $0x30] sm:$0xff]
      %v1124 = vld [vmem:[%s4 + $0x38] sm:$0xff]
      %v1125 = vlaneseq
      %v1126 = vshrl.u32 %v1125, 7
      %v1127 = vsub.s32 0, %v1126
      %v1128 = vrot.slane %v369, %v1127
      %vm1129 = vcmask 523264
      %v1131 = vsel %vm1129, %v1101, 0
      %v1134 = vsel %vm1129, %v1102, 0
      %v1137 = vsel %vm1129, %v1103, 0
      %v1140 = vsel %vm1129, %v1104, 0
      %v1143 = vsel %vm1129, %v1105, 0
      %v1146 = vsel %vm1129, %v1106, 0
      %v1149 = vsel %vm1129, %v1107, 0
      %v1152 = vsel %vm1129, %v1108, 0
      %v1155 = vsel %vm1129, %v1109, 0
      %v1158 = vsel %vm1129, %v1110, 0
      %v1161 = vsel %vm1129, %v1111, 0
      %v1164 = vsel %vm1129, %v1112, 0
      %v1167 = vsel %vm1129, %v1113, 0
      %v1170 = vsel %vm1129, %v1114, 0
      %v1173 = vsel %vm1129, %v1115, 0
      %v1176 = vsel %vm1129, %v1116, 0
      %1178 = vmatprep.subr.mxu0 0.0
      %1179 = vmatpush1.msra.mxu0 %v1117
      %1180 = vmatprep.subr.mxu0 0.0
      %1181 = vmatpush1.msra.mxu0 %v1118
      %1182 = vmatprep.subr.mxu0 0.0
      %1183 = vmatpush1.msra.mxu0 %v1119
      %1184 = vmatprep.subr.mxu0 0.0
      %1185 = vmatpush1.msra.mxu0 %v1120
      %1186 = vmatprep.subr.mxu0 0.0
      %1187 = vmatpush1.msra.mxu0 %v1121
      %1188 = vmatprep.subr.mxu0 0.0
      %1189 = vmatpush1.msra.mxu0 %v1122
      %1190 = vmatprep.subr.mxu0 0.0
      %1191 = vmatpush1.msra.mxu0 %v1123
      %1192 = vmatprep.subr.mxu0 0.0
      %1193 = vmatpush1.msra.mxu0 %v1124
      %1194 = vmatprep.subr.mxu0 0.0
      %1195 = vmatpush1.msra.mxu0 0.0
      %1196 = vmatprep.subr.mxu0 0.0
      %1197 = vmatpush1.msra.mxu0 0.0
      %1198 = vmatprep.subr.mxu0 0.0
      %1199 = vmatpush1.msra.mxu0 0.0
      %1200 = vmatprep.subr.mxu0 0.0
      %1201 = vmatpush1.msra.mxu0 0.0
      %1202 = vmatprep.subr.mxu0 0.0
      %1203 = vmatpush1.msra.mxu0 0.0
      %1204 = vmatprep.subr.mxu0 0.0
      %1205 = vmatpush1.msra.mxu0 0.0
      %1206 = vmatprep.subr.mxu0 0.0
      %1207 = vmatpush1.msra.mxu0 0.0
      %1208 = vmatprep.subr.mxu0 0.0
      %1209 = vmatpush1.msra.mxu0 0.0
      %1210 = vmatprep.subr.mxu0 0.0
      %1211 = vmatpush1.msra.mxu0 0.0
      %1212 = vmatprep.subr.mxu0 0.0
      %1213 = vmatpush1.msra.mxu0 0.0
      %1214 = vmatprep.subr.mxu0 0.0
      %1215 = vmatpush1.msra.mxu0 0.0
      %1216 = vmatprep.subr.mxu0 0.0
      %1217 = vmatpush1.msra.mxu0 0.0
      %1218 = vmatprep.subr.mxu0 0.0
      %1219 = vmatpush1.msra.mxu0 0.0
      %1220 = vmatprep.subr.mxu0 0.0
      %1221 = vmatpush1.msra.mxu0 0.0
      %1222 = vmatprep.subr.mxu0 0.0
      %1223 = vmatpush1.msra.mxu0 0.0
      %1224 = vmatprep.subr.mxu0 0.0
      %1225 = vmatpush1.msra.mxu0 0.0
      %1226 = vmatprep.subr.mxu0 0.0
      %1227 = vmatpush1.msra.mxu0 0.0
      %1228 = vmatprep.subr.mxu0 0.0
      %1229 = vmatpush1.msra.mxu0 0.0
      %1230 = vmatprep.subr.mxu0 0.0
      %1231 = vmatpush1.msra.mxu0 0.0
      %1232 = vmatprep.subr.mxu0 0.0
      %1233 = vmatpush1.msra.mxu0 0.0
      %1234 = vmatprep.subr.mxu0 0.0
      %1235 = vmatpush1.msra.mxu0 0.0
      %1236 = vmatprep.subr.mxu0 0.0
      %1237 = vmatpush1.msra.mxu0 0.0
      %1238 = vmatprep.subr.mxu0 0.0
      %1239 = vmatpush1.msra.mxu0 0.0
      %1240 = vmatprep.subr.mxu0 0.0
      %1241 = vmatpush1.msra.mxu0 0.0
      %1242 = vmatprep.mubr.f32.mxu0 0.0
      %1243 = vmatmul.mubr.f32.gmra.mrb[0].mxu0 %v1131
      %v1244 = vpop.f32.mrb[0].mxu0
      %v1245 = vadd.f32 %v1128, %v1244
      %v1246 = vpop.f32.mrb[0].mxu0
      %1247 = vmatprep.mubr.f32.mxu0 0.0
      %1248 = vmatmul.mubr.f32.gmra.mrb[0].mxu0 %v1134
      %v1249 = vpop.f32.mrb[0].mxu0
      %v1250 = vadd.f32 %v1128, %v1249
      %v1251 = vpop.f32.mrb[0].mxu0
      %1252 = vmatprep.mubr.f32.mxu0 0.0
      %1253 = vmatmul.mubr.f32.gmra.mrb[0].mxu0 %v1137
      %v1254 = vpop.f32.mrb[0].mxu0
      %v1255 = vadd.f32 %v1128, %v1254
      %v1256 = vpop.f32.mrb[0].mxu0
      %1257 = vmatprep.mubr.f32.mxu0 0.0
      %1258 = vmatmul.mubr.f32.gmra.mrb[0].mxu0 %v1140
      %v1259 = vpop.f32.mrb[0].mxu0
      %v1260 = vadd.f32 %v1128, %v1259
      %v1261 = vpop.f32.mrb[0].mxu0
      %1262 = vmatprep.mubr.f32.mxu0 0.0
      %1263 = vmatmul.mubr.f32.gmra.mrb[0].mxu0 %v1143
      %v1264 = vpop.f32.mrb[0].mxu0
      %v1265 = vadd.f32 %v1128, %v1264
      %v1266 = vpop.f32.mrb[0].mxu0
      %1267 = vmatprep.mubr.f32.mxu0 0.0
      %1268 = vmatmul.mubr.f32.gmra.mrb[0].mxu0 %v1146
      %v1269 = vpop.f32.mrb[0].mxu0
      %v1270 = vadd.f32 %v1128, %v1269
      %v1271 = vpop.f32.mrb[0].mxu0
      %1272 = vmatprep.mubr.f32.mxu0 0.0
      %1273 = vmatmul.mubr.f32.gmra.mrb[0].mxu0 %v1149
      %v1274 = vpop.f32.mrb[0].mxu0
      %v1275 = vadd.f32 %v1128, %v1274
      %v1276 = vpop.f32.mrb[0].mxu0
      %1277 = vmatprep.mubr.f32.mxu0 0.0
      %1278 = vmatmul.mubr.f32.gmra.mrb[0].mxu0 %v1152
      %v1279 = vpop.f32.mrb[0].mxu0
      %v1280 = vadd.f32 %v1128, %v1279
      %v1281 = vpop.f32.mrb[0].mxu0
      %1282 = vmatprep.mubr.f32.mxu0 0.0
      %1283 = vmatmul.mubr.f32.gmra.mrb[0].mxu0 %v1155
      %v1284 = vpop.f32.mrb[0].mxu0
      %v1285 = vadd.f32 %v1128, %v1284
      %v1286 = vpop.f32.mrb[0].mxu0
      %1287 = vmatprep.mubr.f32.mxu0 0.0
      %1288 = vmatmul.mubr.f32.gmra.mrb[0].mxu0 %v1158
      %v1289 = vpop.f32.mrb[0].mxu0
      %v1290 = vadd.f32 %v1128, %v1289
      %v1291 = vpop.f32.mrb[0].mxu0
      %1292 = vmatprep.mubr.f32.mxu0 0.0
      %1293 = vmatmul.mubr.f32.gmra.mrb[0].mxu0 %v1161
      %v1294 = vpop.f32.mrb[0].mxu0
      %v1295 = vadd.f32 %v1128, %v1294
      %v1296 = vpop.f32.mrb[0].mxu0
      %1297 = vmatprep.mubr.f32.mxu0 0.0
      %1298 = vmatmul.mubr.f32.gmra.mrb[0].mxu0 %v1164
      %v1299 = vpop.f32.mrb[0].mxu0
      %v1300 = vadd.f32 %v1128, %v1299
      %v1301 = vpop.f32.mrb[0].mxu0
      %1302 = vmatprep.mubr.f32.mxu0 0.0
      %1303 = vmatmul.mubr.f32.gmra.mrb[0].mxu0 %v1167
      %v1304 = vpop.f32.mrb[0].mxu0
      %v1305 = vadd.f32 %v1128, %v1304
      %v1306 = vpop.f32.mrb[0].mxu0
      %1307 = vmatprep.mubr.f32.mxu0 0.0
      %1308 = vmatmul.mubr.f32.gmra.mrb[0].mxu0 %v1170
      %v1309 = vpop.f32.mrb[0].mxu0
      %v1310 = vadd.f32 %v1128, %v1309
      %v1311 = vpop.f32.mrb[0].mxu0
      %1312 = vmatprep.mubr.f32.mxu0 0.0
      %1313 = vmatmul.mubr.f32.gmra.mrb[0].mxu0 %v1173
      %v1314 = vpop.f32.mrb[0].mxu0
      %v1315 = vadd.f32 %v1128, %v1314
      %v1316 = vpop.f32.mrb[0].mxu0
      %1317 = vmatprep.mubr.f32.mxu0 0.0
      %1318 = vmatmul.mubr.f32.gmra.mrb[0].mxu0 %v1176
      %v1319 = vpop.f32.mrb[0].mxu0
      %v1320 = vadd.f32 %v1128, %v1319
      %v1321 = vpop.f32.mrb[0].mxu0
      %1322 = vdwg.mxu0
      %v1323 = vtanh.pop %v1245
      %v1324 = vtanh.pop %v1250
      %v1325 = vtanh.pop %v1255
      %v1326 = vtanh.pop %v1260
      %v1327 = vtanh.pop %v1265
      %v1328 = vtanh.pop %v1270
      %v1329 = vtanh.pop %v1275
      %v1330 = vtanh.pop %v1280
      %v1331 = vtanh.pop %v1285
      %v1332 = vtanh.pop %v1290
      %v1333 = vtanh.pop %v1295
      %v1334 = vtanh.pop %v1300
      %v1335 = vtanh.pop %v1305
      %v1336 = vtanh.pop %v1310
      %v1337 = vtanh.pop %v1315
      %v1338 = vtanh.pop %v1320
      %v1339 = vld [vmem:[%s6] sm:$0xff]
      %v1340 = vld [vmem:[%s6 + $0x8] sm:$0xff]
      %v1341 = vld [vmem:[%s6 + $0x10] sm:$0xff]
      %v1342 = vld [vmem:[%s6 + $0x18] sm:$0xff]
      %v1343 = vld [vmem:[%s6 + $0x20] sm:$0xff]
      %v1344 = vld [vmem:[%s6 + $0x28] sm:$0xff]
      %v1345 = vld [vmem:[%s6 + $0x30] sm:$0xff]
      %v1346 = vld [vmem:[%s6 + $0x38] sm:$0xff]
      %v1347 = vlaneseq
      %v1348 = vshrl.u32 %v1347, 7
      %v1349 = vsub.s32 0, %v1348
      %v1350 = vrot.slane %v370, %v1349
      %v1352 = vsel %vm1129, %v1323, 0
      %v1355 = vsel %vm1129, %v1324, 0
      %v1358 = vsel %vm1129, %v1325, 0
      %v1361 = vsel %vm1129, %v1326, 0
      %v1364 = vsel %vm1129, %v1327, 0
      %v1367 = vsel %vm1129, %v1328, 0
      %v1370 = vsel %vm1129, %v1329, 0
      %v1373 = vsel %vm1129, %v1330, 0
      %v1376 = vsel %vm1129, %v1331, 0
      %v1379 = vsel %vm1129, %v1332, 0
      %v1382 = vsel %vm1129, %v1333, 0
      %v1385 = vsel %vm1129, %v1334, 0
      %v1388 = vsel %vm1129, %v1335, 0
      %v1391 = vsel %vm1129, %v1336, 0
      %v1394 = vsel %vm1129, %v1337, 0
      %v1397 = vsel %vm1129, %v1338, 0
      %1399 = vmatprep.subr.mxu0 0.0
      %1400 = vmatpush1.msra.mxu0 %v1339
      %1401 = vmatprep.subr.mxu0 0.0
      %1402 = vmatpush1.msra.mxu0 %v1340
      %1403 = vmatprep.subr.mxu0 0.0
      %1404 = vmatpush1.msra.mxu0 %v1341
      %1405 = vmatprep.subr.mxu0 0.0
      %1406 = vmatpush1.msra.mxu0 %v1342
      %1407 = vmatprep.subr.mxu0 0.0
      %1408 = vmatpush1.msra.mxu0 %v1343
      %1409 = vmatprep.subr.mxu0 0.0
      %1410 = vmatpush1.msra.mxu0 %v1344
      %1411 = vmatprep.subr.mxu0 0.0
      %1412 = vmatpush1.msra.mxu0 %v1345
      %1413 = vmatprep.subr.mxu0 0.0
      %1414 = vmatpush1.msra.mxu0 %v1346
      %1415 = vmatprep.subr.mxu0 0.0
      %1416 = vmatpush1.msra.mxu0 0.0
      %1417 = vmatprep.subr.mxu0 0.0
      %1418 = vmatpush1.msra.mxu0 0.0
      %1419 = vmatprep.subr.mxu0 0.0
      %1420 = vmatpush1.msra.mxu0 0.0
      %1421 = vmatprep.subr.mxu0 0.0
      %1422 = vmatpush1.msra.mxu0 0.0
      %1423 = vmatprep.subr.mxu0 0.0
      %1424 = vmatpush1.msra.mxu0 0.0
      %1425 = vmatprep.subr.mxu0 0.0
      %1426 = vmatpush1.msra.mxu0 0.0
      %1427 = vmatprep.subr.mxu0 0.0
      %1428 = vmatpush1.msra.mxu0 0.0
      %1429 = vmatprep.subr.mxu0 0.0
      %1430 = vmatpush1.msra.mxu0 0.0
      %1431 = vmatprep.subr.mxu0 0.0
      %1432 = vmatpush1.msra.mxu0 0.0
      %1433 = vmatprep.subr.mxu0 0.0
      %1434 = vmatpush1.msra.mxu0 0.0
      %1435 = vmatprep.subr.mxu0 0.0
      %1436 = vmatpush1.msra.mxu0 0.0
      %1437 = vmatprep.subr.mxu0 0.0
      %1438 = vmatpush1.msra.mxu0 0.0
      %1439 = vmatprep.subr.mxu0 0.0
      %1440 = vmatpush1.msra.mxu0 0.0
      %1441 = vmatprep.subr.mxu0 0.0
      %1442 = vmatpush1.msra.mxu0 0.0
      %1443 = vmatprep.subr.mxu0 0.0
      %1444 = vmatpush1.msra.mxu0 0.0
      %1445 = vmatprep.subr.mxu0 0.0
      %1446 = vmatpush1.msra.mxu0 0.0
      %1447 = vmatprep.subr.mxu0 0.0
      %1448 = vmatpush1.msra.mxu0 0.0
      %1449 = vmatprep.subr.mxu0 0.0
      %1450 = vmatpush1.msra.mxu0 0.0
      %1451 = vmatprep.subr.mxu0 0.0
      %1452 = vmatpush1.msra.mxu0 0.0
      %1453 = vmatprep.subr.mxu0 0.0
      %1454 = vmatpush1.msra.mxu0 0.0
      %1455 = vmatprep.subr.mxu0 0.0
      %1456 = vmatpush1.msra.mxu0 0.0
      %1457 = vmatprep.subr.mxu0 0.0
      %1458 = vmatpush1.msra.mxu0 0.0
      %1459 = vmatprep.subr.mxu0 0.0
      %1460 = vmatpush1.msra.mxu0 0.0
      %1461 = vmatprep.subr.mxu0 0.0
      %1462 = vmatpush1.msra.mxu0 0.0
      %1463 = vmatprep.mubr.f32.mxu0 0.0
      %1464 = vmatmul.mubr.f32.gmra.mrb[0].mxu0 %v1352
      %v1465 = vpop.f32.mrb[0].mxu0
      %v1466 = vadd.f32 %v1350, %v1465
      %v1467 = vpop.f32.mrb[0].mxu0
      %1468 = vmatprep.mubr.f32.mxu0 0.0
      %1469 = vmatmul.mubr.f32.gmra.mrb[0].mxu0 %v1355
      %v1470 = vpop.f32.mrb[0].mxu0
      %v1471 = vadd.f32 %v1350, %v1470
      %v1472 = vpop.f32.mrb[0].mxu0
      %1473 = vmatprep.mubr.f32.mxu0 0.0
      %1474 = vmatmul.mubr.f32.gmra.mrb[0].mxu0 %v1358
      %v1475 = vpop.f32.mrb[0].mxu0
      %v1476 = vadd.f32 %v1350, %v1475
      %v1477 = vpop.f32.mrb[0].mxu0
      %1478 = vmatprep.mubr.f32.mxu0 0.0
      %1479 = vmatmul.mubr.f32.gmra.mrb[0].mxu0 %v1361
      %v1480 = vpop.f32.mrb[0].mxu0
      %v1481 = vadd.f32 %v1350, %v1480
      %v1482 = vpop.f32.mrb[0].mxu0
      %1483 = vmatprep.mubr.f32.mxu0 0.0
      %1484 = vmatmul.mubr.f32.gmra.mrb[0].mxu0 %v1364
      %v1485 = vpop.f32.mrb[0].mxu0
      %v1486 = vadd.f32 %v1350, %v1485
      %v1487 = vpop.f32.mrb[0].mxu0
      %1488 = vmatprep.mubr.f32.mxu0 0.0
      %1489 = vmatmul.mubr.f32.gmra.mrb[0].mxu0 %v1367
      %v1490 = vpop.f32.mrb[0].mxu0
      %v1491 = vadd.f32 %v1350, %v1490
      %v1492 = vpop.f32.mrb[0].mxu0
      %1493 = vmatprep.mubr.f32.mxu0 0.0
      %1494 = vmatmul.mubr.f32.gmra.mrb[0].mxu0 %v1370
      %v1495 = vpop.f32.mrb[0].mxu0
      %v1496 = vadd.f32 %v1350, %v1495
      %v1497 = vpop.f32.mrb[0].mxu0
      %1498 = vmatprep.mubr.f32.mxu0 0.0
      %1499 = vmatmul.mubr.f32.gmra.mrb[0].mxu0 %v1373
      %v1500 = vpop.f32.mrb[0].mxu0
      %v1501 = vadd.f32 %v1350, %v1500
      %v1502 = vpop.f32.mrb[0].mxu0
      %1503 = vmatprep.mubr.f32.mxu0 0.0
      %1504 = vmatmul.mubr.f32.gmra.mrb[0].mxu0 %v1376
      %v1505 = vpop.f32.mrb[0].mxu0
      %v1506 = vadd.f32 %v1350, %v1505
      %v1507 = vpop.f32.mrb[0].mxu0
      %1508 = vmatprep.mubr.f32.mxu0 0.0
      %1509 = vmatmul.mubr.f32.gmra.mrb[0].mxu0 %v1379
      %v1510 = vpop.f32.mrb[0].mxu0
      %v1511 = vadd.f32 %v1350, %v1510
      %v1512 = vpop.f32.mrb[0].mxu0
      %1513 = vmatprep.mubr.f32.mxu0 0.0
      %1514 = vmatmul.mubr.f32.gmra.mrb[0].mxu0 %v1382
      %v1515 = vpop.f32.mrb[0].mxu0
      %v1516 = vadd.f32 %v1350, %v1515
      %v1517 = vpop.f32.mrb[0].mxu0
      %1518 = vmatprep.mubr.f32.mxu0 0.0
      %1519 = vmatmul.mubr.f32.gmra.mrb[0].mxu0 %v1385
      %v1520 = vpop.f32.mrb[0].mxu0
      %v1521 = vadd.f32 %v1350, %v1520
      %v1522 = vpop.f32.mrb[0].mxu0
      %1523 = vmatprep.mubr.f32.mxu0 0.0
      %1524 = vmatmul.mubr.f32.gmra.mrb[0].mxu0 %v1388
      %v1525 = vpop.f32.mrb[0].mxu0
      %v1526 = vadd.f32 %v1350, %v1525
      %v1527 = vpop.f32.mrb[0].mxu0
      %1528 = vmatprep.mubr.f32.mxu0 0.0
      %1529 = vmatmul.mubr.f32.gmra.mrb[0].mxu0 %v1391
      %v1530 = vpop.f32.mrb[0].mxu0
      %v1531 = vadd.f32 %v1350, %v1530
      %v1532 = vpop.f32.mrb[0].mxu0
      %1533 = vmatprep.mubr.f32.mxu0 0.0
      %1534 = vmatmul.mubr.f32.gmra.mrb[0].mxu0 %v1394
      %v1535 = vpop.f32.mrb[0].mxu0
      %v1536 = vadd.f32 %v1350, %v1535
      %v1537 = vpop.f32.mrb[0].mxu0
      %1538 = vmatprep.mubr.f32.mxu0 0.0
      %1539 = vmatmul.mubr.f32.gmra.mrb[0].mxu0 %v1397
      %v1540 = vpop.f32.mrb[0].mxu0
      %v1541 = vadd.f32 %v1350, %v1540
      %v1542 = vpop.f32.mrb[0].mxu0
      %1543 = vdwg.mxu0
      %v1544 = vtanh.pop %v1466
      %v1545 = vtanh.pop %v1471
      %v1546 = vtanh.pop %v1476
      %v1547 = vtanh.pop %v1481
      %v1548 = vtanh.pop %v1486
      %v1549 = vtanh.pop %v1491
      %v1550 = vtanh.pop %v1496
      %v1551 = vtanh.pop %v1501
      %v1552 = vtanh.pop %v1506
      %v1553 = vtanh.pop %v1511
      %v1554 = vtanh.pop %v1516
      %v1555 = vtanh.pop %v1521
      %v1556 = vtanh.pop %v1526
      %v1557 = vtanh.pop %v1531
      %v1558 = vtanh.pop %v1536
      %v1559 = vtanh.pop %v1541
      %v1560 = vsub.f32 %v451, %v1466
      %v1561 = vsub.f32 %v452, %v1471
      %v1562 = vsub.f32 %v453, %v1476
      %v1563 = vsub.f32 %v454, %v1481
      %v1564 = vsub.f32 %v455, %v1486
      %v1565 = vsub.f32 %v456, %v1491
      %v1566 = vsub.f32 %v457, %v1496
      %v1567 = vsub.f32 %v458, %v1501
      %v1568 = vsub.f32 %v459, %v1506
      %v1569 = vsub.f32 %v460, %v1511
      %v1570 = vsub.f32 %v461, %v1516
      %v1571 = vsub.f32 %v462, %v1521
      %v1572 = vsub.f32 %v463, %v1526
      %v1573 = vsub.f32 %v464, %v1531
      %v1574 = vsub.f32 %v465, %v1536
      %v1575 = vsub.f32 %v466, %v1541
      %v1576 = vlaneseq
      %v1577 = vshrl.u32 %v1576, 7
      %v1578 = vsub.s32 0, %v1577
      %v1579 = vrot.slane %v367, %v1578
      %v1580 = vmul.f32 %v1579, %v1560
      %v1581 = vmul.f32 %v1579, %v1561
      %v1582 = vmul.f32 %v1579, %v1562
      %v1583 = vmul.f32 %v1579, %v1563
      %v1584 = vmul.f32 %v1579, %v1564
      %v1585 = vmul.f32 %v1579, %v1565
      %v1586 = vmul.f32 %v1579, %v1566
      %v1587 = vmul.f32 %v1579, %v1567
      %v1588 = vmul.f32 %v1579, %v1568
      %v1589 = vmul.f32 %v1579, %v1569
      %v1590 = vmul.f32 %v1579, %v1570
      %v1591 = vmul.f32 %v1579, %v1571
      %v1592 = vmul.f32 %v1579, %v1572
      %v1593 = vmul.f32 %v1579, %v1573
      %v1594 = vmul.f32 %v1579, %v1574
      %v1595 = vmul.f32 %v1579, %v1575
      %v1596 = vsub.f32 0.0, %v1544
      %v1597 = vsub.f32 0.0, %v1545
      %v1598 = vsub.f32 0.0, %v1546
      %v1599 = vsub.f32 0.0, %v1547
      %v1600 = vsub.f32 0.0, %v1548
      %v1601 = vsub.f32 0.0, %v1549
      %v1602 = vsub.f32 0.0, %v1550
      %v1603 = vsub.f32 0.0, %v1551
      %v1604 = vsub.f32 0.0, %v1552
      %v1605 = vsub.f32 0.0, %v1553
      %v1606 = vsub.f32 0.0, %v1554
      %v1607 = vsub.f32 0.0, %v1555
      %v1608 = vsub.f32 0.0, %v1556
      %v1609 = vsub.f32 0.0, %v1557
      %v1610 = vsub.f32 0.0, %v1558
      %v1611 = vsub.f32 0.0, %v1559
      %v1612 = vmul.f32 %v1596, 1.442695
      %v1613 = vpow.pop %v1612
      %v1614 = vmul.f32 %v1597, 1.442695
      %v1615 = vpow.pop %v1614
      %v1616 = vmul.f32 %v1598, 1.442695
      %v1617 = vpow.pop %v1616
      %v1618 = vmul.f32 %v1599, 1.442695
      %v1619 = vpow.pop %v1618
      %v1620 = vmul.f32 %v1600, 1.442695
      %v1621 = vpow.pop %v1620
      %v1622 = vmul.f32 %v1601, 1.442695
      %v1623 = vpow.pop %v1622
      %v1624 = vmul.f32 %v1602, 1.442695
      %v1625 = vpow.pop %v1624
      %v1626 = vmul.f32 %v1603, 1.442695
      %v1627 = vpow.pop %v1626
      %v1628 = vmul.f32 %v1604, 1.442695
      %v1629 = vpow.pop %v1628
      %v1630 = vmul.f32 %v1605, 1.442695
      %v1631 = vpow.pop %v1630
      %v1632 = vmul.f32 %v1606, 1.442695
      %v1633 = vpow.pop %v1632
      %v1634 = vmul.f32 %v1607, 1.442695
      %v1635 = vpow.pop %v1634
      %v1636 = vmul.f32 %v1608, 1.442695
      %v1637 = vpow.pop %v1636
      %v1638 = vmul.f32 %v1609, 1.442695
      %v1639 = vpow.pop %v1638
      %v1640 = vmul.f32 %v1610, 1.442695
      %v1641 = vpow.pop %v1640
      %v1642 = vmul.f32 %v1611, 1.442695
      %v1643 = vpow.pop %v1642
      %1660 = vrot.lane.b32.xlu0 %v1613, 124
      %v1661 = vpop.permute.xlu0 %1660
      %1662 = vrot.lane.b32.xlu0 %v1615, 124
      %v1663 = vpop.permute.xlu0 %1662
      %1664 = vrot.lane.b32.xlu0 %v1617, 124
      %v1665 = vpop.permute.xlu0 %1664
      %1666 = vrot.lane.b32.xlu0 %v1619, 124
      %v1667 = vpop.permute.xlu0 %1666
      %1668 = vrot.lane.b32.xlu0 %v1621, 124
      %v1669 = vpop.permute.xlu0 %1668
      %1670 = vrot.lane.b32.xlu0 %v1623, 124
      %v1671 = vpop.permute.xlu0 %1670
      %1672 = vrot.lane.b32.xlu0 %v1625, 124
      %v1673 = vpop.permute.xlu0 %1672
      %1674 = vrot.lane.b32.xlu0 %v1627, 124
      %v1675 = vpop.permute.xlu0 %1674
      %1676 = vrot.lane.b32.xlu0 %v1629, 124
      %v1677 = vpop.permute.xlu0 %1676
      %1678 = vrot.lane.b32.xlu0 %v1631, 124
      %v1679 = vpop.permute.xlu0 %1678
      %1680 = vrot.lane.b32.xlu0 %v1633, 124
      %v1681 = vpop.permute.xlu0 %1680
      %1682 = vrot.lane.b32.xlu0 %v1635, 124
      %v1683 = vpop.permute.xlu0 %1682
      %1684 = vrot.lane.b32.xlu0 %v1637, 124
      %v1685 = vpop.permute.xlu0 %1684
      %1686 = vrot.lane.b32.xlu0 %v1639, 124
      %v1687 = vpop.permute.xlu0 %1686
      %1688 = vrot.lane.b32.xlu0 %v1641, 124
      %v1689 = vpop.permute.xlu0 %1688
      %1690 = vrot.lane.b32.xlu0 %v1643, 124
      %v1691 = vpop.permute.xlu0 %1690
      %v1708 = vmul.f32 %v1580, %v1661
      %v1709 = vmul.f32 %v1581, %v1663
      %v1710 = vmul.f32 %v1582, %v1665
      %v1711 = vmul.f32 %v1583, %v1667
      %v1712 = vmul.f32 %v1584, %v1669
      %v1713 = vmul.f32 %v1585, %v1671
      %v1714 = vmul.f32 %v1586, %v1673
      %v1715 = vmul.f32 %v1587, %v1675
      %v1716 = vmul.f32 %v1588, %v1677
      %v1717 = vmul.f32 %v1589, %v1679
      %v1718 = vmul.f32 %v1590, %v1681
      %v1719 = vmul.f32 %v1591, %v1683
      %v1720 = vmul.f32 %v1592, %v1685
      %v1721 = vmul.f32 %v1593, %v1687
      %v1722 = vmul.f32 %v1594, %v1689
      %v1723 = vmul.f32 %v1595, %v1691
      %v1724 = vadd.f32 %v664, %v1708
      %v1725 = vadd.f32 %v665, %v1709
      %v1726 = vadd.f32 %v666, %v1710
      %v1727 = vadd.f32 %v667, %v1711
      %v1728 = vadd.f32 %v668, %v1712
      %v1729 = vadd.f32 %v669, %v1713
      %v1730 = vadd.f32 %v670, %v1714
      %v1731 = vadd.f32 %v671, %v1715
      %v1732 = vadd.f32 %v672, %v1716
      %v1733 = vadd.f32 %v673, %v1717
      %v1734 = vadd.f32 %v674, %v1718
      %v1735 = vadd.f32 %v675, %v1719
      %v1736 = vadd.f32 %v676, %v1720
      %v1737 = vadd.f32 %v677, %v1721
      %v1738 = vadd.f32 %v678, %v1722
      %v1739 = vadd.f32 %v679, %v1723
      %1756 = vrot.lane.b32.xlu0 %v1544, 124
      %v1757 = vpop.permute.xlu0 %1756
      %1758 = vrot.lane.b32.xlu0 %v1545, 124
      %v1759 = vpop.permute.xlu0 %1758
      %1760 = vrot.lane.b32.xlu0 %v1546, 124
      %v1761 = vpop.permute.xlu0 %1760
      %1762 = vrot.lane.b32.xlu0 %v1547, 124
      %v1763 = vpop.permute.xlu0 %1762
      %1764 = vrot.lane.b32.xlu0 %v1548, 124
      %v1765 = vpop.permute.xlu0 %1764
      %1766 = vrot.lane.b32.xlu0 %v1549, 124
      %v1767 = vpop.permute.xlu0 %1766
      %1768 = vrot.lane.b32.xlu0 %v1550, 124
      %v1769 = vpop.permute.xlu0 %1768
      %1770 = vrot.lane.b32.xlu0 %v1551, 124
      %v1771 = vpop.permute.xlu0 %1770
      %1772 = vrot.lane.b32.xlu0 %v1552, 124
      %v1773 = vpop.permute.xlu0 %1772
      %1774 = vrot.lane.b32.xlu0 %v1553, 124
      %v1775 = vpop.permute.xlu0 %1774
      %1776 = vrot.lane.b32.xlu0 %v1554, 124
      %v1777 = vpop.permute.xlu0 %1776
      %1778 = vrot.lane.b32.xlu0 %v1555, 124
      %v1779 = vpop.permute.xlu0 %1778
      %1780 = vrot.lane.b32.xlu0 %v1556, 124
      %v1781 = vpop.permute.xlu0 %1780
      %1782 = vrot.lane.b32.xlu0 %v1557, 124
      %v1783 = vpop.permute.xlu0 %1782
      %1784 = vrot.lane.b32.xlu0 %v1558, 124
      %v1785 = vpop.permute.xlu0 %1784
      %1786 = vrot.lane.b32.xlu0 %v1559, 124
      %v1787 = vpop.permute.xlu0 %1786
      %v1804 = vmul.f32 %v1579, %v1757
      %v1805 = vmul.f32 %v1579, %v1759
      %v1806 = vmul.f32 %v1579, %v1761
      %v1807 = vmul.f32 %v1579, %v1763
      %v1808 = vmul.f32 %v1579, %v1765
      %v1809 = vmul.f32 %v1579, %v1767
      %v1810 = vmul.f32 %v1579, %v1769
      %v1811 = vmul.f32 %v1579, %v1771
      %v1812 = vmul.f32 %v1579, %v1773
      %v1813 = vmul.f32 %v1579, %v1775
      %v1814 = vmul.f32 %v1579, %v1777
      %v1815 = vmul.f32 %v1579, %v1779
      %v1816 = vmul.f32 %v1579, %v1781
      %v1817 = vmul.f32 %v1579, %v1783
      %v1818 = vmul.f32 %v1579, %v1785
      %v1819 = vmul.f32 %v1579, %v1787
      %v1820 = vsel %vm595, %v1804, 0.0
      %1821 = vadd.xlane.f32.xlu0 %v1820
      %v1822 = vpop.xlane.xlu0 %1821
      %v1823 = vsel %vm595, %v1805, 0.0
      %1824 = vadd.xlane.f32.xlu0 %v1823
      %v1825 = vpop.xlane.xlu0 %1824
      %v1826 = vsel %vm595, %v1806, 0.0
      %1827 = vadd.xlane.f32.xlu0 %v1826
      %v1828 = vpop.xlane.xlu0 %1827
      %v1829 = vsel %vm595, %v1807, 0.0
      %1830 = vadd.xlane.f32.xlu0 %v1829
      %v1831 = vpop.xlane.xlu0 %1830
      %v1832 = vsel %vm595, %v1808, 0.0
      %1833 = vadd.xlane.f32.xlu0 %v1832
      %v1834 = vpop.xlane.xlu0 %1833
      %v1835 = vsel %vm595, %v1809, 0.0
      %1836 = vadd.xlane.f32.xlu0 %v1835
      %v1837 = vpop.xlane.xlu0 %1836
      %v1838 = vsel %vm595, %v1810, 0.0
      %1839 = vadd.xlane.f32.xlu0 %v1838
      %v1840 = vpop.xlane.xlu0 %1839
      %v1841 = vsel %vm595, %v1811, 0.0
      %1842 = vadd.xlane.f32.xlu0 %v1841
      %v1843 = vpop.xlane.xlu0 %1842
      %v1844 = vsel %vm595, %v1812, 0.0
      %1845 = vadd.xlane.f32.xlu0 %v1844
      %v1846 = vpop.xlane.xlu0 %1845
      %v1847 = vsel %vm595, %v1813, 0.0
      %1848 = vadd.xlane.f32.xlu0 %v1847
      %v1849 = vpop.xlane.xlu0 %1848
      %v1850 = vsel %vm595, %v1814, 0.0
      %1851 = vadd.xlane.f32.xlu0 %v1850
      %v1852 = vpop.xlane.xlu0 %1851
      %v1853 = vsel %vm595, %v1815, 0.0
      %1854 = vadd.xlane.f32.xlu0 %v1853
      %v1855 = vpop.xlane.xlu0 %1854
      %v1856 = vsel %vm595, %v1816, 0.0
      %1857 = vadd.xlane.f32.xlu0 %v1856
      %v1858 = vpop.xlane.xlu0 %1857
      %v1859 = vsel %vm595, %v1817, 0.0
      %1860 = vadd.xlane.f32.xlu0 %v1859
      %v1861 = vpop.xlane.xlu0 %1860
      %v1862 = vsel %vm595, %v1818, 0.0
      %1863 = vadd.xlane.f32.xlu0 %v1862
      %v1864 = vpop.xlane.xlu0 %1863
      %v1865 = vsel %vm595, %v1819, 0.0
      %1866 = vadd.xlane.f32.xlu0 %v1865
      %v1867 = vpop.xlane.xlu0 %1866
      %v1868 = vsub.f32 %v644, %v1822
      %v1869 = vsub.f32 %v645, %v1825
      %v1870 = vsub.f32 %v646, %v1828
      %v1871 = vsub.f32 %v647, %v1831
      %v1872 = vsub.f32 %v648, %v1834
      %v1873 = vsub.f32 %v649, %v1837
      %v1874 = vsub.f32 %v650, %v1840
      %v1875 = vsub.f32 %v651, %v1843
      %v1876 = vsub.f32 %v652, %v1846
      %v1877 = vsub.f32 %v653, %v1849
      %v1878 = vsub.f32 %v654, %v1852
      %v1879 = vsub.f32 %v655, %v1855
      %v1880 = vsub.f32 %v656, %v1858
      %v1881 = vsub.f32 %v657, %v1861
      %v1882 = vsub.f32 %v658, %v1864
      %v1883 = vsub.f32 %v659, %v1867
      %v1884 = vlaneseq
      %v1885 = vshrl.u32 %v1884, 7
      %v1886 = vsub.s32 1, %v1885
      %v1887 = vrot.slane %v366, %v1886
      %v1888 = vmul.f32 %v1724, %v1887
      %v1889 = vmul.f32 %v1725, %v1887
      %v1890 = vmul.f32 %v1726, %v1887
      %v1891 = vmul.f32 %v1727, %v1887
      %v1892 = vmul.f32 %v1728, %v1887
      %v1893 = vmul.f32 %v1729, %v1887
      %v1894 = vmul.f32 %v1730, %v1887
      %v1895 = vmul.f32 %v1731, %v1887
      %v1896 = vmul.f32 %v1732, %v1887
      %v1897 = vmul.f32 %v1733, %v1887
      %v1898 = vmul.f32 %v1734, %v1887
      %v1899 = vmul.f32 %v1735, %v1887
      %v1900 = vmul.f32 %v1736, %v1887
      %v1901 = vmul.f32 %v1737, %v1887
      %v1902 = vmul.f32 %v1738, %v1887
      %v1903 = vmul.f32 %v1739, %v1887
      %s1904 = scalar_lea.vmem %s2, 4
      %v1905 = vld [vmem:[%s1904] sm:$0xf]
      %1907 = vset.pattern.permute.xlu0 0
      %1908 = vperm.xlu0 %1907, %v1888
      %v1909 = vpop.permute.xlu0 %1908
      %1912 = vset.pattern.permute.xlu0 0
      %1913 = vperm.xlu0 %1912, %v1889
      %v1914 = vpop.permute.xlu0 %1913
      %1917 = vset.pattern.permute.xlu0 0
      %1918 = vperm.xlu0 %1917, %v1890
      %v1919 = vpop.permute.xlu0 %1918
      %1922 = vset.pattern.permute.xlu0 0
      %1923 = vperm.xlu0 %1922, %v1891
      %v1924 = vpop.permute.xlu0 %1923
      %1927 = vset.pattern.permute.xlu0 0
      %1928 = vperm.xlu0 %1927, %v1892
      %v1929 = vpop.permute.xlu0 %1928
      %1932 = vset.pattern.permute.xlu0 0
      %1933 = vperm.xlu0 %1932, %v1893
      %v1934 = vpop.permute.xlu0 %1933
      %1937 = vset.pattern.permute.xlu0 0
      %1938 = vperm.xlu0 %1937, %v1894
      %v1939 = vpop.permute.xlu0 %1938
      %1942 = vset.pattern.permute.xlu0 0
      %1943 = vperm.xlu0 %1942, %v1895
      %v1944 = vpop.permute.xlu0 %1943
      %1947 = vset.pattern.permute.xlu0 0
      %1948 = vperm.xlu0 %1947, %v1896
      %v1949 = vpop.permute.xlu0 %1948
      %1952 = vset.pattern.permute.xlu0 0
      %1953 = vperm.xlu0 %1952, %v1897
      %v1954 = vpop.permute.xlu0 %1953
      %1957 = vset.pattern.permute.xlu0 0
      %1958 = vperm.xlu0 %1957, %v1898
      %v1959 = vpop.permute.xlu0 %1958
      %1962 = vset.pattern.permute.xlu0 0
      %1963 = vperm.xlu0 %1962, %v1899
      %v1964 = vpop.permute.xlu0 %1963
      %1967 = vset.pattern.permute.xlu0 0
      %1968 = vperm.xlu0 %1967, %v1900
      %v1969 = vpop.permute.xlu0 %1968
      %1972 = vset.pattern.permute.xlu0 0
      %1973 = vperm.xlu0 %1972, %v1901
      %v1974 = vpop.permute.xlu0 %1973
      %1977 = vset.pattern.permute.xlu0 0
      %1978 = vperm.xlu0 %1977, %v1902
      %v1979 = vpop.permute.xlu0 %1978
      %1982 = vset.pattern.permute.xlu0 0
      %1983 = vperm.xlu0 %1982, %v1903
      %v1984 = vpop.permute.xlu0 %1983
      %v1986 = vlaneseq
      %v1987 = vshrl.u32 %v1986, 7
      %v1988 = vsub.s32 0, %v1987
      %v1989 = vrot.slane %v1905, %v1988
      %v1990 = vmul.f32 %v1909, %v1989
      %v1991 = vmul.f32 %v1914, %v1989
      %v1992 = vmul.f32 %v1919, %v1989
      %v1993 = vmul.f32 %v1924, %v1989
      %v1994 = vmul.f32 %v1929, %v1989
      %v1995 = vmul.f32 %v1934, %v1989
      %v1996 = vmul.f32 %v1939, %v1989
      %v1997 = vmul.f32 %v1944, %v1989
      %v1998 = vmul.f32 %v1949, %v1989
      %v1999 = vmul.f32 %v1954, %v1989
      %v2000 = vmul.f32 %v1959, %v1989
      %v2001 = vmul.f32 %v1964, %v1989
      %v2002 = vmul.f32 %v1969, %v1989
      %v2003 = vmul.f32 %v1974, %v1989
      %v2004 = vmul.f32 %v1979, %v1989
      %v2005 = vmul.f32 %v1984, %v1989
      %v2006 = vlaneseq
      %v2007 = vshrl.u32 %v2006, 7
      %v2008 = vsub.s32 1, %v2007
      %v2009 = vrot.slane %v368, %v2008
      %v2010 = vadd.f32 %v2009, %v1990
      %v2011 = vadd.f32 %v2009, %v1991
      %v2012 = vadd.f32 %v2009, %v1992
      %v2013 = vadd.f32 %v2009, %v1993
      %v2014 = vadd.f32 %v2009, %v1994
      %v2015 = vadd.f32 %v2009, %v1995
      %v2016 = vadd.f32 %v2009, %v1996
      %v2017 = vadd.f32 %v2009, %v1997
      %v2018 = vadd.f32 %v2009, %v1998
      %v2019 = vadd.f32 %v2009, %v1999
      %v2020 = vadd.f32 %v2009, %v2000
      %v2021 = vadd.f32 %v2009, %v2001
      %v2022 = vadd.f32 %v2009, %v2002
      %v2023 = vadd.f32 %v2009, %v2003
      %v2024 = vadd.f32 %v2009, %v2004
      %v2025 = vadd.f32 %v2009, %v2005
      %2026 = vset.pattern.permute.xlu0 1
      %2027 = vperm.xlu0 %2026, %v1888
      %v2028 = vpop.permute.xlu0 %2027
      %2030 = vset.pattern.permute.xlu0 1
      %2031 = vperm.xlu0 %2030, %v1889
      %v2032 = vpop.permute.xlu0 %2031
      %2034 = vset.pattern.permute.xlu0 1
      %2035 = vperm.xlu0 %2034, %v1890
      %v2036 = vpop.permute.xlu0 %2035
      %2038 = vset.pattern.permute.xlu0 1
      %2039 = vperm.xlu0 %2038, %v1891
      %v2040 = vpop.permute.xlu0 %2039
      %2042 = vset.pattern.permute.xlu0 1
      %2043 = vperm.xlu0 %2042, %v1892
      %v2044 = vpop.permute.xlu0 %2043
      %2046 = vset.pattern.permute.xlu0 1
      %2047 = vperm.xlu0 %2046, %v1893
      %v2048 = vpop.permute.xlu0 %2047
      %2050 = vset.pattern.permute.xlu0 1
      %2051 = vperm.xlu0 %2050, %v1894
      %v2052 = vpop.permute.xlu0 %2051
      %2054 = vset.pattern.permute.xlu0 1
      %2055 = vperm.xlu0 %2054, %v1895
      %v2056 = vpop.permute.xlu0 %2055
      %2058 = vset.pattern.permute.xlu0 1
      %2059 = vperm.xlu0 %2058, %v1896
      %v2060 = vpop.permute.xlu0 %2059
      %2062 = vset.pattern.permute.xlu0 1
      %2063 = vperm.xlu0 %2062, %v1897
      %v2064 = vpop.permute.xlu0 %2063
      %2066 = vset.pattern.permute.xlu0 1
      %2067 = vperm.xlu0 %2066, %v1898
      %v2068 = vpop.permute.xlu0 %2067
      %2070 = vset.pattern.permute.xlu0 1
      %2071 = vperm.xlu0 %2070, %v1899
      %v2072 = vpop.permute.xlu0 %2071
      %2074 = vset.pattern.permute.xlu0 1
      %2075 = vperm.xlu0 %2074, %v1900
      %v2076 = vpop.permute.xlu0 %2075
      %2078 = vset.pattern.permute.xlu0 1
      %2079 = vperm.xlu0 %2078, %v1901
      %v2080 = vpop.permute.xlu0 %2079
      %2082 = vset.pattern.permute.xlu0 1
      %2083 = vperm.xlu0 %2082, %v1902
      %v2084 = vpop.permute.xlu0 %2083
      %2086 = vset.pattern.permute.xlu0 1
      %2087 = vperm.xlu0 %2086, %v1903
      %v2088 = vpop.permute.xlu0 %2087
      %v2090 = vlaneseq
      %v2091 = vshrl.u32 %v2090, 7
      %v2092 = vsub.s32 1, %v2091
      %v2093 = vrot.slane %v1905, %v2092
      %v2094 = vmul.f32 %v2028, %v2093
      %v2095 = vmul.f32 %v2032, %v2093
      %v2096 = vmul.f32 %v2036, %v2093
      %v2097 = vmul.f32 %v2040, %v2093
      %v2098 = vmul.f32 %v2044, %v2093
      %v2099 = vmul.f32 %v2048, %v2093
      %v2100 = vmul.f32 %v2052, %v2093
      %v2101 = vmul.f32 %v2056, %v2093
      %v2102 = vmul.f32 %v2060, %v2093
      %v2103 = vmul.f32 %v2064, %v2093
      %v2104 = vmul.f32 %v2068, %v2093
      %v2105 = vmul.f32 %v2072, %v2093
      %v2106 = vmul.f32 %v2076, %v2093
      %v2107 = vmul.f32 %v2080, %v2093
      %v2108 = vmul.f32 %v2084, %v2093
      %v2109 = vmul.f32 %v2088, %v2093
      %v2110 = vadd.f32 %v2010, %v2094
      %v2111 = vadd.f32 %v2011, %v2095
      %v2112 = vadd.f32 %v2012, %v2096
      %v2113 = vadd.f32 %v2013, %v2097
      %v2114 = vadd.f32 %v2014, %v2098
      %v2115 = vadd.f32 %v2015, %v2099
      %v2116 = vadd.f32 %v2016, %v2100
      %v2117 = vadd.f32 %v2017, %v2101
      %v2118 = vadd.f32 %v2018, %v2102
      %v2119 = vadd.f32 %v2019, %v2103
      %v2120 = vadd.f32 %v2020, %v2104
      %v2121 = vadd.f32 %v2021, %v2105
      %v2122 = vadd.f32 %v2022, %v2106
      %v2123 = vadd.f32 %v2023, %v2107
      %v2124 = vadd.f32 %v2024, %v2108
      %v2125 = vadd.f32 %v2025, %v2109
      %2126 = vset.pattern.permute.xlu0 2
      %2127 = vperm.xlu0 %2126, %v1888
      %v2128 = vpop.permute.xlu0 %2127
      %2130 = vset.pattern.permute.xlu0 2
      %2131 = vperm.xlu0 %2130, %v1889
      %v2132 = vpop.permute.xlu0 %2131
      %2134 = vset.pattern.permute.xlu0 2
      %2135 = vperm.xlu0 %2134, %v1890
      %v2136 = vpop.permute.xlu0 %2135
      %2138 = vset.pattern.permute.xlu0 2
      %2139 = vperm.xlu0 %2138, %v1891
      %v2140 = vpop.permute.xlu0 %2139
      %2142 = vset.pattern.permute.xlu0 2
      %2143 = vperm.xlu0 %2142, %v1892
      %v2144 = vpop.permute.xlu0 %2143
      %2146 = vset.pattern.permute.xlu0 2
      %2147 = vperm.xlu0 %2146, %v1893
      %v2148 = vpop.permute.xlu0 %2147
      %2150 = vset.pattern.permute.xlu0 2
      %2151 = vperm.xlu0 %2150, %v1894
      %v2152 = vpop.permute.xlu0 %2151
      %2154 = vset.pattern.permute.xlu0 2
      %2155 = vperm.xlu0 %2154, %v1895
      %v2156 = vpop.permute.xlu0 %2155
      %2158 = vset.pattern.permute.xlu0 2
      %2159 = vperm.xlu0 %2158, %v1896
      %v2160 = vpop.permute.xlu0 %2159
      %2162 = vset.pattern.permute.xlu0 2
      %2163 = vperm.xlu0 %2162, %v1897
      %v2164 = vpop.permute.xlu0 %2163
      %2166 = vset.pattern.permute.xlu0 2
      %2167 = vperm.xlu0 %2166, %v1898
      %v2168 = vpop.permute.xlu0 %2167
      %2170 = vset.pattern.permute.xlu0 2
      %2171 = vperm.xlu0 %2170, %v1899
      %v2172 = vpop.permute.xlu0 %2171
      %2174 = vset.pattern.permute.xlu0 2
      %2175 = vperm.xlu0 %2174, %v1900
      %v2176 = vpop.permute.xlu0 %2175
      %2178 = vset.pattern.permute.xlu0 2
      %2179 = vperm.xlu0 %2178, %v1901
      %v2180 = vpop.permute.xlu0 %2179
      %2182 = vset.pattern.permute.xlu0 2
      %2183 = vperm.xlu0 %2182, %v1902
      %v2184 = vpop.permute.xlu0 %2183
      %2186 = vset.pattern.permute.xlu0 2
      %2187 = vperm.xlu0 %2186, %v1903
      %v2188 = vpop.permute.xlu0 %2187
      %v2190 = vlaneseq
      %v2191 = vshrl.u32 %v2190, 7
      %v2192 = vsub.s32 2, %v2191
      %v2193 = vrot.slane %v1905, %v2192
      %v2194 = vmul.f32 %v2128, %v2193
      %v2195 = vmul.f32 %v2132, %v2193
      %v2196 = vmul.f32 %v2136, %v2193
      %v2197 = vmul.f32 %v2140, %v2193
      %v2198 = vmul.f32 %v2144, %v2193
      %v2199 = vmul.f32 %v2148, %v2193
      %v2200 = vmul.f32 %v2152, %v2193
      %v2201 = vmul.f32 %v2156, %v2193
      %v2202 = vmul.f32 %v2160, %v2193
      %v2203 = vmul.f32 %v2164, %v2193
      %v2204 = vmul.f32 %v2168, %v2193
      %v2205 = vmul.f32 %v2172, %v2193
      %v2206 = vmul.f32 %v2176, %v2193
      %v2207 = vmul.f32 %v2180, %v2193
      %v2208 = vmul.f32 %v2184, %v2193
      %v2209 = vmul.f32 %v2188, %v2193
      %v2210 = vadd.f32 %v2110, %v2194
      %v2211 = vadd.f32 %v2111, %v2195
      %v2212 = vadd.f32 %v2112, %v2196
      %v2213 = vadd.f32 %v2113, %v2197
      %v2214 = vadd.f32 %v2114, %v2198
      %v2215 = vadd.f32 %v2115, %v2199
      %v2216 = vadd.f32 %v2116, %v2200
      %v2217 = vadd.f32 %v2117, %v2201
      %v2218 = vadd.f32 %v2118, %v2202
      %v2219 = vadd.f32 %v2119, %v2203
      %v2220 = vadd.f32 %v2120, %v2204
      %v2221 = vadd.f32 %v2121, %v2205
      %v2222 = vadd.f32 %v2122, %v2206
      %v2223 = vadd.f32 %v2123, %v2207
      %v2224 = vadd.f32 %v2124, %v2208
      %v2225 = vadd.f32 %v2125, %v2209
      %2226 = vset.pattern.permute.xlu0 3
      %2227 = vperm.xlu0 %2226, %v1888
      %v2228 = vpop.permute.xlu0 %2227
      %2230 = vset.pattern.permute.xlu0 3
      %2231 = vperm.xlu0 %2230, %v1889
      %v2232 = vpop.permute.xlu0 %2231
      %2234 = vset.pattern.permute.xlu0 3
      %2235 = vperm.xlu0 %2234, %v1890
      %v2236 = vpop.permute.xlu0 %2235
      %2238 = vset.pattern.permute.xlu0 3
      %2239 = vperm.xlu0 %2238, %v1891
      %v2240 = vpop.permute.xlu0 %2239
      %2242 = vset.pattern.permute.xlu0 3
      %2243 = vperm.xlu0 %2242, %v1892
      %v2244 = vpop.permute.xlu0 %2243
      %2246 = vset.pattern.permute.xlu0 3
      %2247 = vperm.xlu0 %2246, %v1893
      %v2248 = vpop.permute.xlu0 %2247
      %2250 = vset.pattern.permute.xlu0 3
      %2251 = vperm.xlu0 %2250, %v1894
      %v2252 = vpop.permute.xlu0 %2251
      %2254 = vset.pattern.permute.xlu0 3
      %2255 = vperm.xlu0 %2254, %v1895
      %v2256 = vpop.permute.xlu0 %2255
      %2258 = vset.pattern.permute.xlu0 3
      %2259 = vperm.xlu0 %2258, %v1896
      %v2260 = vpop.permute.xlu0 %2259
      %2262 = vset.pattern.permute.xlu0 3
      %2263 = vperm.xlu0 %2262, %v1897
      %v2264 = vpop.permute.xlu0 %2263
      %2266 = vset.pattern.permute.xlu0 3
      %2267 = vperm.xlu0 %2266, %v1898
      %v2268 = vpop.permute.xlu0 %2267
      %2270 = vset.pattern.permute.xlu0 3
      %2271 = vperm.xlu0 %2270, %v1899
      %v2272 = vpop.permute.xlu0 %2271
      %2274 = vset.pattern.permute.xlu0 3
      %2275 = vperm.xlu0 %2274, %v1900
      %v2276 = vpop.permute.xlu0 %2275
      %2278 = vset.pattern.permute.xlu0 3
      %2279 = vperm.xlu0 %2278, %v1901
      %v2280 = vpop.permute.xlu0 %2279
      %2282 = vset.pattern.permute.xlu0 3
      %2283 = vperm.xlu0 %2282, %v1902
      %v2284 = vpop.permute.xlu0 %2283
      %2286 = vset.pattern.permute.xlu0 3
      %2287 = vperm.xlu0 %2286, %v1903
      %v2288 = vpop.permute.xlu0 %2287
      %v2290 = vlaneseq
      %v2291 = vshrl.u32 %v2290, 7
      %v2292 = vsub.s32 3, %v2291
      %v2293 = vrot.slane %v1905, %v2292
      %v2294 = vmul.f32 %v2228, %v2293
      %v2295 = vmul.f32 %v2232, %v2293
      %v2296 = vmul.f32 %v2236, %v2293
      %v2297 = vmul.f32 %v2240, %v2293
      %v2298 = vmul.f32 %v2244, %v2293
      %v2299 = vmul.f32 %v2248, %v2293
      %v2300 = vmul.f32 %v2252, %v2293
      %v2301 = vmul.f32 %v2256, %v2293
      %v2302 = vmul.f32 %v2260, %v2293
      %v2303 = vmul.f32 %v2264, %v2293
      %v2304 = vmul.f32 %v2268, %v2293
      %v2305 = vmul.f32 %v2272, %v2293
      %v2306 = vmul.f32 %v2276, %v2293
      %v2307 = vmul.f32 %v2280, %v2293
      %v2308 = vmul.f32 %v2284, %v2293
      %v2309 = vmul.f32 %v2288, %v2293
      %v2310 = vadd.f32 %v2210, %v2294
      %v2311 = vadd.f32 %v2211, %v2295
      %v2312 = vadd.f32 %v2212, %v2296
      %v2313 = vadd.f32 %v2213, %v2297
      %v2314 = vadd.f32 %v2214, %v2298
      %v2315 = vadd.f32 %v2215, %v2299
      %v2316 = vadd.f32 %v2216, %v2300
      %v2317 = vadd.f32 %v2217, %v2301
      %v2318 = vadd.f32 %v2218, %v2302
      %v2319 = vadd.f32 %v2219, %v2303
      %v2320 = vadd.f32 %v2220, %v2304
      %v2321 = vadd.f32 %v2221, %v2305
      %v2322 = vadd.f32 %v2222, %v2306
      %v2323 = vadd.f32 %v2223, %v2307
      %v2324 = vadd.f32 %v2224, %v2308
      %v2325 = vadd.f32 %v2225, %v2309
      %v2326 = vtanh.pop %v2310
      %v2327 = vtanh.pop %v2311
      %v2328 = vtanh.pop %v2312
      %v2329 = vtanh.pop %v2313
      %v2330 = vtanh.pop %v2314
      %v2331 = vtanh.pop %v2315
      %v2332 = vtanh.pop %v2316
      %v2333 = vtanh.pop %v2317
      %v2334 = vtanh.pop %v2318
      %v2335 = vtanh.pop %v2319
      %v2336 = vtanh.pop %v2320
      %v2337 = vtanh.pop %v2321
      %v2338 = vtanh.pop %v2322
      %v2339 = vtanh.pop %v2323
      %v2340 = vtanh.pop %v2324
      %v2341 = vtanh.pop %v2325
      %s2342 = scalar_lea.vmem %s4, 64
      %v2343 = vld [vmem:[%s2342] sm:$0xff]
      %v2344 = vld [vmem:[%s2342 + $0x8] sm:$0xff]
      %v2345 = vld [vmem:[%s2342 + $0x10] sm:$0xff]
      %v2346 = vld [vmem:[%s2342 + $0x18] sm:$0xff]
      %v2347 = vld [vmem:[%s2342 + $0x20] sm:$0xff]
      %v2348 = vld [vmem:[%s2342 + $0x28] sm:$0xff]
      %v2349 = vld [vmem:[%s2342 + $0x30] sm:$0xff]
      %v2350 = vld [vmem:[%s2342 + $0x38] sm:$0xff]
      %v2351 = vlaneseq
      %v2352 = vshrl.u32 %v2351, 7
      %v2353 = vsub.s32 1, %v2352
      %v2354 = vrot.slane %v369, %v2353
      %v2356 = vsel %vm1129, %v2326, 0
      %v2359 = vsel %vm1129, %v2327, 0
      %v2362 = vsel %vm1129, %v2328, 0
      %v2365 = vsel %vm1129, %v2329, 0
      %v2368 = vsel %vm1129, %v2330, 0
      %v2371 = vsel %vm1129, %v2331, 0
      %v2374 = vsel %vm1129, %v2332, 0
      %v2377 = vsel %vm1129, %v2333, 0
      %v2380 = vsel %vm1129, %v2334, 0
      %v2383 = vsel %vm1129, %v2335, 0
      %v2386 = vsel %vm1129, %v2336, 0
      %v2389 = vsel %vm1129, %v2337, 0
      %v2392 = vsel %vm1129, %v2338, 0
      %v2395 = vsel %vm1129, %v2339, 0
      %v2398 = vsel %vm1129, %v2340, 0
      %v2401 = vsel %vm1129, %v2341, 0
      %2403 = vmatprep.subr.mxu0 0.0
      %2404 = vmatpush1.msra.mxu0 %v2343
      %2405 = vmatprep.subr.mxu0 0.0
      %2406 = vmatpush1.msra.mxu0 %v2344
      %2407 = vmatprep.subr.mxu0 0.0
      %2408 = vmatpush1.msra.mxu0 %v2345
      %2409 = vmatprep.subr.mxu0 0.0
      %2410 = vmatpush1.msra.mxu0 %v2346
      %2411 = vmatprep.subr.mxu0 0.0
      %2412 = vmatpush1.msra.mxu0 %v2347
      %2413 = vmatprep.subr.mxu0 0.0
      %2414 = vmatpush1.msra.mxu0 %v2348
      %2415 = vmatprep.subr.mxu0 0.0
      %2416 = vmatpush1.msra.mxu0 %v2349
      %2417 = vmatprep.subr.mxu0 0.0
      %2418 = vmatpush1.msra.mxu0 %v2350
      %2419 = vmatprep.subr.mxu0 0.0
      %2420 = vmatpush1.msra.mxu0 0.0
      %2421 = vmatprep.subr.mxu0 0.0
      %2422 = vmatpush1.msra.mxu0 0.0
      %2423 = vmatprep.subr.mxu0 0.0
      %2424 = vmatpush1.msra.mxu0 0.0
      %2425 = vmatprep.subr.mxu0 0.0
      %2426 = vmatpush1.msra.mxu0 0.0
      %2427 = vmatprep.subr.mxu0 0.0
      %2428 = vmatpush1.msra.mxu0 0.0
      %2429 = vmatprep.subr.mxu0 0.0
      %2430 = vmatpush1.msra.mxu0 0.0
      %2431 = vmatprep.subr.mxu0 0.0
      %2432 = vmatpush1.msra.mxu0 0.0
      %2433 = vmatprep.subr.mxu0 0.0
      %2434 = vmatpush1.msra.mxu0 0.0
      %2435 = vmatprep.subr.mxu0 0.0
      %2436 = vmatpush1.msra.mxu0 0.0
      %2437 = vmatprep.subr.mxu0 0.0
      %2438 = vmatpush1.msra.mxu0 0.0
      %2439 = vmatprep.subr.mxu0 0.0
      %2440 = vmatpush1.msra.mxu0 0.0
      %2441 = vmatprep.subr.mxu0 0.0
      %2442 = vmatpush1.msra.mxu0 0.0
      %2443 = vmatprep.subr.mxu0 0.0
      %2444 = vmatpush1.msra.mxu0 0.0
      %2445 = vmatprep.subr.mxu0 0.0
      %2446 = vmatpush1.msra.mxu0 0.0
      %2447 = vmatprep.subr.mxu0 0.0
      %2448 = vmatpush1.msra.mxu0 0.0
      %2449 = vmatprep.subr.mxu0 0.0
      %2450 = vmatpush1.msra.mxu0 0.0
      %2451 = vmatprep.subr.mxu0 0.0
      %2452 = vmatpush1.msra.mxu0 0.0
      %2453 = vmatprep.subr.mxu0 0.0
      %2454 = vmatpush1.msra.mxu0 0.0
      %2455 = vmatprep.subr.mxu0 0.0
      %2456 = vmatpush1.msra.mxu0 0.0
      %2457 = vmatprep.subr.mxu0 0.0
      %2458 = vmatpush1.msra.mxu0 0.0
      %2459 = vmatprep.subr.mxu0 0.0
      %2460 = vmatpush1.msra.mxu0 0.0
      %2461 = vmatprep.subr.mxu0 0.0
      %2462 = vmatpush1.msra.mxu0 0.0
      %2463 = vmatprep.subr.mxu0 0.0
      %2464 = vmatpush1.msra.mxu0 0.0
      %2465 = vmatprep.subr.mxu0 0.0
      %2466 = vmatpush1.msra.mxu0 0.0
      %2467 = vmatprep.mubr.f32.mxu0 0.0
      %2468 = vmatmul.mubr.f32.gmra.mrb[0].mxu0 %v2356
      %v2469 = vpop.f32.mrb[0].mxu0
      %v2470 = vadd.f32 %v2354, %v2469
      %v2471 = vpop.f32.mrb[0].mxu0
      %2472 = vmatprep.mubr.f32.mxu0 0.0
      %2473 = vmatmul.mubr.f32.gmra.mrb[0].mxu0 %v2359
      %v2474 = vpop.f32.mrb[0].mxu0
      %v2475 = vadd.f32 %v2354, %v2474
      %v2476 = vpop.f32.mrb[0].mxu0
      %2477 = vmatprep.mubr.f32.mxu0 0.0
      %2478 = vmatmul.mubr.f32.gmra.mrb[0].mxu0 %v2362
      %v2479 = vpop.f32.mrb[0].mxu0
      %v2480 = vadd.f32 %v2354, %v2479
      %v2481 = vpop.f32.mrb[0].mxu0
      %2482 = vmatprep.mubr.f32.mxu0 0.0
      %2483 = vmatmul.mubr.f32.gmra.mrb[0].mxu0 %v2365
      %v2484 = vpop.f32.mrb[0].mxu0
      %v2485 = vadd.f32 %v2354, %v2484
      %v2486 = vpop.f32.mrb[0].mxu0
      %2487 = vmatprep.mubr.f32.mxu0 0.0
      %2488 = vmatmul.mubr.f32.gmra.mrb[0].mxu0 %v2368
      %v2489 = vpop.f32.mrb[0].mxu0
      %v2490 = vadd.f32 %v2354, %v2489
      %v2491 = vpop.f32.mrb[0].mxu0
      %2492 = vmatprep.mubr.f32.mxu0 0.0
      %2493 = vmatmul.mubr.f32.gmra.mrb[0].mxu0 %v2371
      %v2494 = vpop.f32.mrb[0].mxu0
      %v2495 = vadd.f32 %v2354, %v2494
      %v2496 = vpop.f32.mrb[0].mxu0
      %2497 = vmatprep.mubr.f32.mxu0 0.0
      %2498 = vmatmul.mubr.f32.gmra.mrb[0].mxu0 %v2374
      %v2499 = vpop.f32.mrb[0].mxu0
      %v2500 = vadd.f32 %v2354, %v2499
      %v2501 = vpop.f32.mrb[0].mxu0
      %2502 = vmatprep.mubr.f32.mxu0 0.0
      %2503 = vmatmul.mubr.f32.gmra.mrb[0].mxu0 %v2377
      %v2504 = vpop.f32.mrb[0].mxu0
      %v2505 = vadd.f32 %v2354, %v2504
      %v2506 = vpop.f32.mrb[0].mxu0
      %2507 = vmatprep.mubr.f32.mxu0 0.0
      %2508 = vmatmul.mubr.f32.gmra.mrb[0].mxu0 %v2380
      %v2509 = vpop.f32.mrb[0].mxu0
      %v2510 = vadd.f32 %v2354, %v2509
      %v2511 = vpop.f32.mrb[0].mxu0
      %2512 = vmatprep.mubr.f32.mxu0 0.0
      %2513 = vmatmul.mubr.f32.gmra.mrb[0].mxu0 %v2383
      %v2514 = vpop.f32.mrb[0].mxu0
      %v2515 = vadd.f32 %v2354, %v2514
      %v2516 = vpop.f32.mrb[0].mxu0
      %2517 = vmatprep.mubr.f32.mxu0 0.0
      %2518 = vmatmul.mubr.f32.gmra.mrb[0].mxu0 %v2386
      %v2519 = vpop.f32.mrb[0].mxu0
      %v2520 = vadd.f32 %v2354, %v2519
      %v2521 = vpop.f32.mrb[0].mxu0
      %2522 = vmatprep.mubr.f32.mxu0 0.0
      %2523 = vmatmul.mubr.f32.gmra.mrb[0].mxu0 %v2389
      %v2524 = vpop.f32.mrb[0].mxu0
      %v2525 = vadd.f32 %v2354, %v2524
      %v2526 = vpop.f32.mrb[0].mxu0
      %2527 = vmatprep.mubr.f32.mxu0 0.0
      %2528 = vmatmul.mubr.f32.gmra.mrb[0].mxu0 %v2392
      %v2529 = vpop.f32.mrb[0].mxu0
      %v2530 = vadd.f32 %v2354, %v2529
      %v2531 = vpop.f32.mrb[0].mxu0
      %2532 = vmatprep.mubr.f32.mxu0 0.0
      %2533 = vmatmul.mubr.f32.gmra.mrb[0].mxu0 %v2395
      %v2534 = vpop.f32.mrb[0].mxu0
      %v2535 = vadd.f32 %v2354, %v2534
      %v2536 = vpop.f32.mrb[0].mxu0
      %2537 = vmatprep.mubr.f32.mxu0 0.0
      %2538 = vmatmul.mubr.f32.gmra.mrb[0].mxu0 %v2398
      %v2539 = vpop.f32.mrb[0].mxu0
      %v2540 = vadd.f32 %v2354, %v2539
      %v2541 = vpop.f32.mrb[0].mxu0
      %2542 = vmatprep.mubr.f32.mxu0 0.0
      %2543 = vmatmul.mubr.f32.gmra.mrb[0].mxu0 %v2401
      %v2544 = vpop.f32.mrb[0].mxu0
      %v2545 = vadd.f32 %v2354, %v2544
      %v2546 = vpop.f32.mrb[0].mxu0
      %2547 = vdwg.mxu0
      %v2548 = vtanh.pop %v2470
      %v2549 = vtanh.pop %v2475
      %v2550 = vtanh.pop %v2480
      %v2551 = vtanh.pop %v2485
      %v2552 = vtanh.pop %v2490
      %v2553 = vtanh.pop %v2495
      %v2554 = vtanh.pop %v2500
      %v2555 = vtanh.pop %v2505
      %v2556 = vtanh.pop %v2510
      %v2557 = vtanh.pop %v2515
      %v2558 = vtanh.pop %v2520
      %v2559 = vtanh.pop %v2525
      %v2560 = vtanh.pop %v2530
      %v2561 = vtanh.pop %v2535
      %v2562 = vtanh.pop %v2540
      %v2563 = vtanh.pop %v2545
      %s2564 = scalar_lea.vmem %s6, 64
      %v2565 = vld [vmem:[%s2564] sm:$0xff]
      %v2566 = vld [vmem:[%s2564 + $0x8] sm:$0xff]
      %v2567 = vld [vmem:[%s2564 + $0x10] sm:$0xff]
      %v2568 = vld [vmem:[%s2564 + $0x18] sm:$0xff]
      %v2569 = vld [vmem:[%s2564 + $0x20] sm:$0xff]
      %v2570 = vld [vmem:[%s2564 + $0x28] sm:$0xff]
      %v2571 = vld [vmem:[%s2564 + $0x30] sm:$0xff]
      %v2572 = vld [vmem:[%s2564 + $0x38] sm:$0xff]
      %v2573 = vlaneseq
      %v2574 = vshrl.u32 %v2573, 7
      %v2575 = vsub.s32 1, %v2574
      %v2576 = vrot.slane %v370, %v2575
      %v2578 = vsel %vm1129, %v2548, 0
      %v2581 = vsel %vm1129, %v2549, 0
      %v2584 = vsel %vm1129, %v2550, 0
      %v2587 = vsel %vm1129, %v2551, 0
      %v2590 = vsel %vm1129, %v2552, 0
      %v2593 = vsel %vm1129, %v2553, 0
      %v2596 = vsel %vm1129, %v2554, 0
      %v2599 = vsel %vm1129, %v2555, 0
      %v2602 = vsel %vm1129, %v2556, 0
      %v2605 = vsel %vm1129, %v2557, 0
      %v2608 = vsel %vm1129, %v2558, 0
      %v2611 = vsel %vm1129, %v2559, 0
      %v2614 = vsel %vm1129, %v2560, 0
      %v2617 = vsel %vm1129, %v2561, 0
      %v2620 = vsel %vm1129, %v2562, 0
      %v2623 = vsel %vm1129, %v2563, 0
      %2625 = vmatprep.subr.mxu0 0.0
      %2626 = vmatpush1.msra.mxu0 %v2565
      %2627 = vmatprep.subr.mxu0 0.0
      %2628 = vmatpush1.msra.mxu0 %v2566
      %2629 = vmatprep.subr.mxu0 0.0
      %2630 = vmatpush1.msra.mxu0 %v2567
      %2631 = vmatprep.subr.mxu0 0.0
      %2632 = vmatpush1.msra.mxu0 %v2568
      %2633 = vmatprep.subr.mxu0 0.0
      %2634 = vmatpush1.msra.mxu0 %v2569
      %2635 = vmatprep.subr.mxu0 0.0
      %2636 = vmatpush1.msra.mxu0 %v2570
      %2637 = vmatprep.subr.mxu0 0.0
      %2638 = vmatpush1.msra.mxu0 %v2571
      %2639 = vmatprep.subr.mxu0 0.0
      %2640 = vmatpush1.msra.mxu0 %v2572
      %2641 = vmatprep.subr.mxu0 0.0
      %2642 = vmatpush1.msra.mxu0 0.0
      %2643 = vmatprep.subr.mxu0 0.0
      %2644 = vmatpush1.msra.mxu0 0.0
      %2645 = vmatprep.subr.mxu0 0.0
      %2646 = vmatpush1.msra.mxu0 0.0
      %2647 = vmatprep.subr.mxu0 0.0
      %2648 = vmatpush1.msra.mxu0 0.0
      %2649 = vmatprep.subr.mxu0 0.0
      %2650 = vmatpush1.msra.mxu0 0.0
      %2651 = vmatprep.subr.mxu0 0.0
      %2652 = vmatpush1.msra.mxu0 0.0
      %2653 = vmatprep.subr.mxu0 0.0
      %2654 = vmatpush1.msra.mxu0 0.0
      %2655 = vmatprep.subr.mxu0 0.0
      %2656 = vmatpush1.msra.mxu0 0.0
      %2657 = vmatprep.subr.mxu0 0.0
      %2658 = vmatpush1.msra.mxu0 0.0
      %2659 = vmatprep.subr.mxu0 0.0
      %2660 = vmatpush1.msra.mxu0 0.0
      %2661 = vmatprep.subr.mxu0 0.0
      %2662 = vmatpush1.msra.mxu0 0.0
      %2663 = vmatprep.subr.mxu0 0.0
      %2664 = vmatpush1.msra.mxu0 0.0
      %2665 = vmatprep.subr.mxu0 0.0
      %2666 = vmatpush1.msra.mxu0 0.0
      %2667 = vmatprep.subr.mxu0 0.0
      %2668 = vmatpush1.msra.mxu0 0.0
      %2669 = vmatprep.subr.mxu0 0.0
      %2670 = vmatpush1.msra.mxu0 0.0
      %2671 = vmatprep.subr.mxu0 0.0
      %2672 = vmatpush1.msra.mxu0 0.0
      %2673 = vmatprep.subr.mxu0 0.0
      %2674 = vmatpush1.msra.mxu0 0.0
      %2675 = vmatprep.subr.mxu0 0.0
      %2676 = vmatpush1.msra.mxu0 0.0
      %2677 = vmatprep.subr.mxu0 0.0
      %2678 = vmatpush1.msra.mxu0 0.0
      %2679 = vmatprep.subr.mxu0 0.0
      %2680 = vmatpush1.msra.mxu0 0.0
      %2681 = vmatprep.subr.mxu0 0.0
      %2682 = vmatpush1.msra.mxu0 0.0
      %2683 = vmatprep.subr.mxu0 0.0
      %2684 = vmatpush1.msra.mxu0 0.0
      %2685 = vmatprep.subr.mxu0 0.0
      %2686 = vmatpush1.msra.mxu0 0.0
      %2687 = vmatprep.subr.mxu0 0.0
      %2688 = vmatpush1.msra.mxu0 0.0
      %2689 = vmatprep.mubr.f32.mxu0 0.0
      %2690 = vmatmul.mubr.f32.gmra.mrb[0].mxu0 %v2578
      %v2691 = vpop.f32.mrb[0].mxu0
      %v2692 = vadd.f32 %v2576, %v2691
      %v2693 = vpop.f32.mrb[0].mxu0
      %2694 = vmatprep.mubr.f32.mxu0 0.0
      %2695 = vmatmul.mubr.f32.gmra.mrb[0].mxu0 %v2581
      %v2696 = vpop.f32.mrb[0].mxu0
      %v2697 = vadd.f32 %v2576, %v2696
      %v2698 = vpop.f32.mrb[0].mxu0
      %2699 = vmatprep.mubr.f32.mxu0 0.0
      %2700 = vmatmul.mubr.f32.gmra.mrb[0].mxu0 %v2584
      %v2701 = vpop.f32.mrb[0].mxu0
      %v2702 = vadd.f32 %v2576, %v2701
      %v2703 = vpop.f32.mrb[0].mxu0
      %2704 = vmatprep.mubr.f32.mxu0 0.0
      %2705 = vmatmul.mubr.f32.gmra.mrb[0].mxu0 %v2587
      %v2706 = vpop.f32.mrb[0].mxu0
      %v2707 = vadd.f32 %v2576, %v2706
      %v2708 = vpop.f32.mrb[0].mxu0
      %2709 = vmatprep.mubr.f32.mxu0 0.0
      %2710 = vmatmul.mubr.f32.gmra.mrb[0].mxu0 %v2590
      %v2711 = vpop.f32.mrb[0].mxu0
      %v2712 = vadd.f32 %v2576, %v2711
      %v2713 = vpop.f32.mrb[0].mxu0
      %2714 = vmatprep.mubr.f32.mxu0 0.0
      %2715 = vmatmul.mubr.f32.gmra.mrb[0].mxu0 %v2593
      %v2716 = vpop.f32.mrb[0].mxu0
      %v2717 = vadd.f32 %v2576, %v2716
      %v2718 = vpop.f32.mrb[0].mxu0
      %2719 = vmatprep.mubr.f32.mxu0 0.0
      %2720 = vmatmul.mubr.f32.gmra.mrb[0].mxu0 %v2596
      %v2721 = vpop.f32.mrb[0].mxu0
      %v2722 = vadd.f32 %v2576, %v2721
      %v2723 = vpop.f32.mrb[0].mxu0
      %2724 = vmatprep.mubr.f32.mxu0 0.0
      %2725 = vmatmul.mubr.f32.gmra.mrb[0].mxu0 %v2599
      %v2726 = vpop.f32.mrb[0].mxu0
      %v2727 = vadd.f32 %v2576, %v2726
      %v2728 = vpop.f32.mrb[0].mxu0
      %2729 = vmatprep.mubr.f32.mxu0 0.0
      %2730 = vmatmul.mubr.f32.gmra.mrb[0].mxu0 %v2602
      %v2731 = vpop.f32.mrb[0].mxu0
      %v2732 = vadd.f32 %v2576, %v2731
      %v2733 = vpop.f32.mrb[0].mxu0
      %2734 = vmatprep.mubr.f32.mxu0 0.0
      %2735 = vmatmul.mubr.f32.gmra.mrb[0].mxu0 %v2605
      %v2736 = vpop.f32.mrb[0].mxu0
      %v2737 = vadd.f32 %v2576, %v2736
      %v2738 = vpop.f32.mrb[0].mxu0
      %2739 = vmatprep.mubr.f32.mxu0 0.0
      %2740 = vmatmul.mubr.f32.gmra.mrb[0].mxu0 %v2608
      %v2741 = vpop.f32.mrb[0].mxu0
      %v2742 = vadd.f32 %v2576, %v2741
      %v2743 = vpop.f32.mrb[0].mxu0
      %2744 = vmatprep.mubr.f32.mxu0 0.0
      %2745 = vmatmul.mubr.f32.gmra.mrb[0].mxu0 %v2611
      %v2746 = vpop.f32.mrb[0].mxu0
      %v2747 = vadd.f32 %v2576, %v2746
      %v2748 = vpop.f32.mrb[0].mxu0
      %2749 = vmatprep.mubr.f32.mxu0 0.0
      %2750 = vmatmul.mubr.f32.gmra.mrb[0].mxu0 %v2614
      %v2751 = vpop.f32.mrb[0].mxu0
      %v2752 = vadd.f32 %v2576, %v2751
      %v2753 = vpop.f32.mrb[0].mxu0
      %2754 = vmatprep.mubr.f32.mxu0 0.0
      %2755 = vmatmul.mubr.f32.gmra.mrb[0].mxu0 %v2617
      %v2756 = vpop.f32.mrb[0].mxu0
      %v2757 = vadd.f32 %v2576, %v2756
      %v2758 = vpop.f32.mrb[0].mxu0
      %2759 = vmatprep.mubr.f32.mxu0 0.0
      %2760 = vmatmul.mubr.f32.gmra.mrb[0].mxu0 %v2620
      %v2761 = vpop.f32.mrb[0].mxu0
      %v2762 = vadd.f32 %v2576, %v2761
      %v2763 = vpop.f32.mrb[0].mxu0
      %2764 = vmatprep.mubr.f32.mxu0 0.0
      %2765 = vmatmul.mubr.f32.gmra.mrb[0].mxu0 %v2623
      %v2766 = vpop.f32.mrb[0].mxu0
      %v2767 = vadd.f32 %v2576, %v2766
      %v2768 = vpop.f32.mrb[0].mxu0
      %2769 = vdwg.mxu0
      %v2770 = vtanh.pop %v2692
      %v2771 = vtanh.pop %v2697
      %v2772 = vtanh.pop %v2702
      %v2773 = vtanh.pop %v2707
      %v2774 = vtanh.pop %v2712
      %v2775 = vtanh.pop %v2717
      %v2776 = vtanh.pop %v2722
      %v2777 = vtanh.pop %v2727
      %v2778 = vtanh.pop %v2732
      %v2779 = vtanh.pop %v2737
      %v2780 = vtanh.pop %v2742
      %v2781 = vtanh.pop %v2747
      %v2782 = vtanh.pop %v2752
      %v2783 = vtanh.pop %v2757
      %v2784 = vtanh.pop %v2762
      %v2785 = vtanh.pop %v2767
      %v2786 = vsub.f32 %v1724, %v2692
      %v2787 = vsub.f32 %v1725, %v2697
      %v2788 = vsub.f32 %v1726, %v2702
      %v2789 = vsub.f32 %v1727, %v2707
      %v2790 = vsub.f32 %v1728, %v2712
      %v2791 = vsub.f32 %v1729, %v2717
      %v2792 = vsub.f32 %v1730, %v2722
      %v2793 = vsub.f32 %v1731, %v2727
      %v2794 = vsub.f32 %v1732, %v2732
      %v2795 = vsub.f32 %v1733, %v2737
      %v2796 = vsub.f32 %v1734, %v2742
      %v2797 = vsub.f32 %v1735, %v2747
      %v2798 = vsub.f32 %v1736, %v2752
      %v2799 = vsub.f32 %v1737, %v2757
      %v2800 = vsub.f32 %v1738, %v2762
      %v2801 = vsub.f32 %v1739, %v2767
      %v2802 = vlaneseq
      %v2803 = vshrl.u32 %v2802, 7
      %v2804 = vsub.s32 1, %v2803
      %v2805 = vrot.slane %v367, %v2804
      %v2806 = vmul.f32 %v2805, %v2786
      %v2807 = vmul.f32 %v2805, %v2787
      %v2808 = vmul.f32 %v2805, %v2788
      %v2809 = vmul.f32 %v2805, %v2789
      %v2810 = vmul.f32 %v2805, %v2790
      %v2811 = vmul.f32 %v2805, %v2791
      %v2812 = vmul.f32 %v2805, %v2792
      %v2813 = vmul.f32 %v2805, %v2793
      %v2814 = vmul.f32 %v2805, %v2794
      %v2815 = vmul.f32 %v2805, %v2795
      %v2816 = vmul.f32 %v2805, %v2796
      %v2817 = vmul.f32 %v2805, %v2797
      %v2818 = vmul.f32 %v2805, %v2798
      %v2819 = vmul.f32 %v2805, %v2799
      %v2820 = vmul.f32 %v2805, %v2800
      %v2821 = vmul.f32 %v2805, %v2801
      %v2822 = vsub.f32 0.0, %v2770
      %v2823 = vsub.f32 0.0, %v2771
      %v2824 = vsub.f32 0.0, %v2772
      %v2825 = vsub.f32 0.0, %v2773
      %v2826 = vsub.f32 0.0, %v2774
      %v2827 = vsub.f32 0.0, %v2775
      %v2828 = vsub.f32 0.0, %v2776
      %v2829 = vsub.f32 0.0, %v2777
      %v2830 = vsub.f32 0.0, %v2778
      %v2831 = vsub.f32 0.0, %v2779
      %v2832 = vsub.f32 0.0, %v2780
      %v2833 = vsub.f32 0.0, %v2781
      %v2834 = vsub.f32 0.0, %v2782
      %v2835 = vsub.f32 0.0, %v2783
      %v2836 = vsub.f32 0.0, %v2784
      %v2837 = vsub.f32 0.0, %v2785
      %v2838 = vmul.f32 %v2822, 1.442695
      %v2839 = vpow.pop %v2838
      %v2840 = vmul.f32 %v2823, 1.442695
      %v2841 = vpow.pop %v2840
      %v2842 = vmul.f32 %v2824, 1.442695
      %v2843 = vpow.pop %v2842
      %v2844 = vmul.f32 %v2825, 1.442695
      %v2845 = vpow.pop %v2844
      %v2846 = vmul.f32 %v2826, 1.442695
      %v2847 = vpow.pop %v2846
      %v2848 = vmul.f32 %v2827, 1.442695
      %v2849 = vpow.pop %v2848
      %v2850 = vmul.f32 %v2828, 1.442695
      %v2851 = vpow.pop %v2850
      %v2852 = vmul.f32 %v2829, 1.442695
      %v2853 = vpow.pop %v2852
      %v2854 = vmul.f32 %v2830, 1.442695
      %v2855 = vpow.pop %v2854
      %v2856 = vmul.f32 %v2831, 1.442695
      %v2857 = vpow.pop %v2856
      %v2858 = vmul.f32 %v2832, 1.442695
      %v2859 = vpow.pop %v2858
      %v2860 = vmul.f32 %v2833, 1.442695
      %v2861 = vpow.pop %v2860
      %v2862 = vmul.f32 %v2834, 1.442695
      %v2863 = vpow.pop %v2862
      %v2864 = vmul.f32 %v2835, 1.442695
      %v2865 = vpow.pop %v2864
      %v2866 = vmul.f32 %v2836, 1.442695
      %v2867 = vpow.pop %v2866
      %v2868 = vmul.f32 %v2837, 1.442695
      %v2869 = vpow.pop %v2868
      %2886 = vrot.lane.b32.xlu0 %v2839, 124
      %v2887 = vpop.permute.xlu0 %2886
      %2888 = vrot.lane.b32.xlu0 %v2841, 124
      %v2889 = vpop.permute.xlu0 %2888
      %2890 = vrot.lane.b32.xlu0 %v2843, 124
      %v2891 = vpop.permute.xlu0 %2890
      %2892 = vrot.lane.b32.xlu0 %v2845, 124
      %v2893 = vpop.permute.xlu0 %2892
      %2894 = vrot.lane.b32.xlu0 %v2847, 124
      %v2895 = vpop.permute.xlu0 %2894
      %2896 = vrot.lane.b32.xlu0 %v2849, 124
      %v2897 = vpop.permute.xlu0 %2896
      %2898 = vrot.lane.b32.xlu0 %v2851, 124
      %v2899 = vpop.permute.xlu0 %2898
      %2900 = vrot.lane.b32.xlu0 %v2853, 124
      %v2901 = vpop.permute.xlu0 %2900
      %2902 = vrot.lane.b32.xlu0 %v2855, 124
      %v2903 = vpop.permute.xlu0 %2902
      %2904 = vrot.lane.b32.xlu0 %v2857, 124
      %v2905 = vpop.permute.xlu0 %2904
      %2906 = vrot.lane.b32.xlu0 %v2859, 124
      %v2907 = vpop.permute.xlu0 %2906
      %2908 = vrot.lane.b32.xlu0 %v2861, 124
      %v2909 = vpop.permute.xlu0 %2908
      %2910 = vrot.lane.b32.xlu0 %v2863, 124
      %v2911 = vpop.permute.xlu0 %2910
      %2912 = vrot.lane.b32.xlu0 %v2865, 124
      %v2913 = vpop.permute.xlu0 %2912
      %2914 = vrot.lane.b32.xlu0 %v2867, 124
      %v2915 = vpop.permute.xlu0 %2914
      %2916 = vrot.lane.b32.xlu0 %v2869, 124
      %v2917 = vpop.permute.xlu0 %2916
      %v2934 = vmul.f32 %v2806, %v2887
      %v2935 = vmul.f32 %v2807, %v2889
      %v2936 = vmul.f32 %v2808, %v2891
      %v2937 = vmul.f32 %v2809, %v2893
      %v2938 = vmul.f32 %v2810, %v2895
      %v2939 = vmul.f32 %v2811, %v2897
      %v2940 = vmul.f32 %v2812, %v2899
      %v2941 = vmul.f32 %v2813, %v2901
      %v2942 = vmul.f32 %v2814, %v2903
      %v2943 = vmul.f32 %v2815, %v2905
      %v2944 = vmul.f32 %v2816, %v2907
      %v2945 = vmul.f32 %v2817, %v2909
      %v2946 = vmul.f32 %v2818, %v2911
      %v2947 = vmul.f32 %v2819, %v2913
      %v2948 = vmul.f32 %v2820, %v2915
      %v2949 = vmul.f32 %v2821, %v2917
      %v2950 = vadd.f32 %v1888, %v2934
      %v2951 = vadd.f32 %v1889, %v2935
      %v2952 = vadd.f32 %v1890, %v2936
      %v2953 = vadd.f32 %v1891, %v2937
      %v2954 = vadd.f32 %v1892, %v2938
      %v2955 = vadd.f32 %v1893, %v2939
      %v2956 = vadd.f32 %v1894, %v2940
      %v2957 = vadd.f32 %v1895, %v2941
      %v2958 = vadd.f32 %v1896, %v2942
      %v2959 = vadd.f32 %v1897, %v2943
      %v2960 = vadd.f32 %v1898, %v2944
      %v2961 = vadd.f32 %v1899, %v2945
      %v2962 = vadd.f32 %v1900, %v2946
      %v2963 = vadd.f32 %v1901, %v2947
      %v2964 = vadd.f32 %v1902, %v2948
      %v2965 = vadd.f32 %v1903, %v2949
      %2982 = vrot.lane.b32.xlu0 %v2770, 124
      %v2983 = vpop.permute.xlu0 %2982
      %2984 = vrot.lane.b32.xlu0 %v2771, 124
      %v2985 = vpop.permute.xlu0 %2984
      %2986 = vrot.lane.b32.xlu0 %v2772, 124
      %v2987 = vpop.permute.xlu0 %2986
      %2988 = vrot.lane.b32.xlu0 %v2773, 124
      %v2989 = vpop.permute.xlu0 %2988
      %2990 = vrot.lane.b32.xlu0 %v2774, 124
      %v2991 = vpop.permute.xlu0 %2990
      %2992 = vrot.lane.b32.xlu0 %v2775, 124
      %v2993 = vpop.permute.xlu0 %2992
      %2994 = vrot.lane.b32.xlu0 %v2776, 124
      %v2995 = vpop.permute.xlu0 %2994
      %2996 = vrot.lane.b32.xlu0 %v2777, 124
      %v2997 = vpop.permute.xlu0 %2996
      %2998 = vrot.lane.b32.xlu0 %v2778, 124
      %v2999 = vpop.permute.xlu0 %2998
      %3000 = vrot.lane.b32.xlu0 %v2779, 124
      %v3001 = vpop.permute.xlu0 %3000
      %3002 = vrot.lane.b32.xlu0 %v2780, 124
      %v3003 = vpop.permute.xlu0 %3002
      %3004 = vrot.lane.b32.xlu0 %v2781, 124
      %v3005 = vpop.permute.xlu0 %3004
      %3006 = vrot.lane.b32.xlu0 %v2782, 124
      %v3007 = vpop.permute.xlu0 %3006
      %3008 = vrot.lane.b32.xlu0 %v2783, 124
      %v3009 = vpop.permute.xlu0 %3008
      %3010 = vrot.lane.b32.xlu0 %v2784, 124
      %v3011 = vpop.permute.xlu0 %3010
      %3012 = vrot.lane.b32.xlu0 %v2785, 124
      %v3013 = vpop.permute.xlu0 %3012
      %v3030 = vmul.f32 %v2805, %v2983
      %v3031 = vmul.f32 %v2805, %v2985
      %v3032 = vmul.f32 %v2805, %v2987
      %v3033 = vmul.f32 %v2805, %v2989
      %v3034 = vmul.f32 %v2805, %v2991
      %v3035 = vmul.f32 %v2805, %v2993
      %v3036 = vmul.f32 %v2805, %v2995
      %v3037 = vmul.f32 %v2805, %v2997
      %v3038 = vmul.f32 %v2805, %v2999
      %v3039 = vmul.f32 %v2805, %v3001
      %v3040 = vmul.f32 %v2805, %v3003
      %v3041 = vmul.f32 %v2805, %v3005
      %v3042 = vmul.f32 %v2805, %v3007
      %v3043 = vmul.f32 %v2805, %v3009
      %v3044 = vmul.f32 %v2805, %v3011
      %v3045 = vmul.f32 %v2805, %v3013
      %v3046 = vsel %vm595, %v3030, 0.0
      %3047 = vadd.xlane.f32.xlu0 %v3046
      %v3048 = vpop.xlane.xlu0 %3047
      %v3049 = vsel %vm595, %v3031, 0.0
      %3050 = vadd.xlane.f32.xlu0 %v3049
      %v3051 = vpop.xlane.xlu0 %3050
      %v3052 = vsel %vm595, %v3032, 0.0
      %3053 = vadd.xlane.f32.xlu0 %v3052
      %v3054 = vpop.xlane.xlu0 %3053
      %v3055 = vsel %vm595, %v3033, 0.0
      %3056 = vadd.xlane.f32.xlu0 %v3055
      %v3057 = vpop.xlane.xlu0 %3056
      %v3058 = vsel %vm595, %v3034, 0.0
      %3059 = vadd.xlane.f32.xlu0 %v3058
      %v3060 = vpop.xlane.xlu0 %3059
      %v3061 = vsel %vm595, %v3035, 0.0
      %3062 = vadd.xlane.f32.xlu0 %v3061
      %v3063 = vpop.xlane.xlu0 %3062
      %v3064 = vsel %vm595, %v3036, 0.0
      %3065 = vadd.xlane.f32.xlu0 %v3064
      %v3066 = vpop.xlane.xlu0 %3065
      %v3067 = vsel %vm595, %v3037, 0.0
      %3068 = vadd.xlane.f32.xlu0 %v3067
      %v3069 = vpop.xlane.xlu0 %3068
      %v3070 = vsel %vm595, %v3038, 0.0
      %3071 = vadd.xlane.f32.xlu0 %v3070
      %v3072 = vpop.xlane.xlu0 %3071
      %v3073 = vsel %vm595, %v3039, 0.0
      %3074 = vadd.xlane.f32.xlu0 %v3073
      %v3075 = vpop.xlane.xlu0 %3074
      %v3076 = vsel %vm595, %v3040, 0.0
      %3077 = vadd.xlane.f32.xlu0 %v3076
      %v3078 = vpop.xlane.xlu0 %3077
      %v3079 = vsel %vm595, %v3041, 0.0
      %3080 = vadd.xlane.f32.xlu0 %v3079
      %v3081 = vpop.xlane.xlu0 %3080
      %v3082 = vsel %vm595, %v3042, 0.0
      %3083 = vadd.xlane.f32.xlu0 %v3082
      %v3084 = vpop.xlane.xlu0 %3083
      %v3085 = vsel %vm595, %v3043, 0.0
      %3086 = vadd.xlane.f32.xlu0 %v3085
      %v3087 = vpop.xlane.xlu0 %3086
      %v3088 = vsel %vm595, %v3044, 0.0
      %3089 = vadd.xlane.f32.xlu0 %v3088
      %v3090 = vpop.xlane.xlu0 %3089
      %v3091 = vsel %vm595, %v3045, 0.0
      %3092 = vadd.xlane.f32.xlu0 %v3091
      %v3093 = vpop.xlane.xlu0 %3092
      %v3094 = vsub.f32 %v1868, %v3048
      %v3095 = vsub.f32 %v1869, %v3051
      %v3096 = vsub.f32 %v1870, %v3054
      %v3097 = vsub.f32 %v1871, %v3057
      %v3098 = vsub.f32 %v1872, %v3060
      %v3099 = vsub.f32 %v1873, %v3063
      %v3100 = vsub.f32 %v1874, %v3066
      %v3101 = vsub.f32 %v1875, %v3069
      %v3102 = vsub.f32 %v1876, %v3072
      %v3103 = vsub.f32 %v1877, %v3075
      %v3104 = vsub.f32 %v1878, %v3078
      %v3105 = vsub.f32 %v1879, %v3081
      %v3106 = vsub.f32 %v1880, %v3084
      %v3107 = vsub.f32 %v1881, %v3087
      %v3108 = vsub.f32 %v1882, %v3090
      %v3109 = vsub.f32 %v1883, %v3093
      %v3110 = vlaneseq
      %v3111 = vshrl.u32 %v3110, 7
      %v3112 = vsub.s32 2, %v3111
      %v3113 = vrot.slane %v366, %v3112
      %v3114 = vmul.f32 %v2950, %v3113
      %v3115 = vmul.f32 %v2951, %v3113
      %v3116 = vmul.f32 %v2952, %v3113
      %v3117 = vmul.f32 %v2953, %v3113
      %v3118 = vmul.f32 %v2954, %v3113
      %v3119 = vmul.f32 %v2955, %v3113
      %v3120 = vmul.f32 %v2956, %v3113
      %v3121 = vmul.f32 %v2957, %v3113
      %v3122 = vmul.f32 %v2958, %v3113
      %v3123 = vmul.f32 %v2959, %v3113
      %v3124 = vmul.f32 %v2960, %v3113
      %v3125 = vmul.f32 %v2961, %v3113
      %v3126 = vmul.f32 %v2962, %v3113
      %v3127 = vmul.f32 %v2963, %v3113
      %v3128 = vmul.f32 %v2964, %v3113
      %v3129 = vmul.f32 %v2965, %v3113
      %s3130 = scalar_lea.vmem %s2, 8
      %v3131 = vld [vmem:[%s3130] sm:$0xf]
      %3133 = vset.pattern.permute.xlu0 0
      %3134 = vperm.xlu0 %3133, %v3114
      %v3135 = vpop.permute.xlu0 %3134
      %3138 = vset.pattern.permute.xlu0 0
      %3139 = vperm.xlu0 %3138, %v3115
      %v3140 = vpop.permute.xlu0 %3139
      %3143 = vset.pattern.permute.xlu0 0
      %3144 = vperm.xlu0 %3143, %v3116
      %v3145 = vpop.permute.xlu0 %3144
      %3148 = vset.pattern.permute.xlu0 0
      %3149 = vperm.xlu0 %3148, %v3117
      %v3150 = vpop.permute.xlu0 %3149
      %3153 = vset.pattern.permute.xlu0 0
      %3154 = vperm.xlu0 %3153, %v3118
      %v3155 = vpop.permute.xlu0 %3154
      %3158 = vset.pattern.permute.xlu0 0
      %3159 = vperm.xlu0 %3158, %v3119
      %v3160 = vpop.permute.xlu0 %3159
      %3163 = vset.pattern.permute.xlu0 0
      %3164 = vperm.xlu0 %3163, %v3120
      %v3165 = vpop.permute.xlu0 %3164
      %3168 = vset.pattern.permute.xlu0 0
      %3169 = vperm.xlu0 %3168, %v3121
      %v3170 = vpop.permute.xlu0 %3169
      %3173 = vset.pattern.permute.xlu0 0
      %3174 = vperm.xlu0 %3173, %v3122
      %v3175 = vpop.permute.xlu0 %3174
      %3178 = vset.pattern.permute.xlu0 0
      %3179 = vperm.xlu0 %3178, %v3123
      %v3180 = vpop.permute.xlu0 %3179
      %3183 = vset.pattern.permute.xlu0 0
      %3184 = vperm.xlu0 %3183, %v3124
      %v3185 = vpop.permute.xlu0 %3184
      %3188 = vset.pattern.permute.xlu0 0
      %3189 = vperm.xlu0 %3188, %v3125
      %v3190 = vpop.permute.xlu0 %3189
      %3193 = vset.pattern.permute.xlu0 0
      %3194 = vperm.xlu0 %3193, %v3126
      %v3195 = vpop.permute.xlu0 %3194
      %3198 = vset.pattern.permute.xlu0 0
      %3199 = vperm.xlu0 %3198, %v3127
      %v3200 = vpop.permute.xlu0 %3199
      %3203 = vset.pattern.permute.xlu0 0
      %3204 = vperm.xlu0 %3203, %v3128
      %v3205 = vpop.permute.xlu0 %3204
      %3208 = vset.pattern.permute.xlu0 0
      %3209 = vperm.xlu0 %3208, %v3129
      %v3210 = vpop.permute.xlu0 %3209
      %v3212 = vlaneseq
      %v3213 = vshrl.u32 %v3212, 7
      %v3214 = vsub.s32 0, %v3213
      %v3215 = vrot.slane %v3131, %v3214
      %v3216 = vmul.f32 %v3135, %v3215
      %v3217 = vmul.f32 %v3140, %v3215
      %v3218 = vmul.f32 %v3145, %v3215
      %v3219 = vmul.f32 %v3150, %v3215
      %v3220 = vmul.f32 %v3155, %v3215
      %v3221 = vmul.f32 %v3160, %v3215
      %v3222 = vmul.f32 %v3165, %v3215
      %v3223 = vmul.f32 %v3170, %v3215
      %v3224 = vmul.f32 %v3175, %v3215
      %v3225 = vmul.f32 %v3180, %v3215
      %v3226 = vmul.f32 %v3185, %v3215
      %v3227 = vmul.f32 %v3190, %v3215
      %v3228 = vmul.f32 %v3195, %v3215
      %v3229 = vmul.f32 %v3200, %v3215
      %v3230 = vmul.f32 %v3205, %v3215
      %v3231 = vmul.f32 %v3210, %v3215
      %v3232 = vlaneseq
      %v3233 = vshrl.u32 %v3232, 7
      %v3234 = vsub.s32 2, %v3233
      %v3235 = vrot.slane %v368, %v3234
      %v3236 = vadd.f32 %v3235, %v3216
      %v3237 = vadd.f32 %v3235, %v3217
      %v3238 = vadd.f32 %v3235, %v3218
      %v3239 = vadd.f32 %v3235, %v3219
      %v3240 = vadd.f32 %v3235, %v3220
      %v3241 = vadd.f32 %v3235, %v3221
      %v3242 = vadd.f32 %v3235, %v3222
      %v3243 = vadd.f32 %v3235, %v3223
      %v3244 = vadd.f32 %v3235, %v3224
      %v3245 = vadd.f32 %v3235, %v3225
      %v3246 = vadd.f32 %v3235, %v3226
      %v3247 = vadd.f32 %v3235, %v3227
      %v3248 = vadd.f32 %v3235, %v3228
      %v3249 = vadd.f32 %v3235, %v3229
      %v3250 = vadd.f32 %v3235, %v3230
      %v3251 = vadd.f32 %v3235, %v3231
      %3252 = vset.pattern.permute.xlu0 1
      %3253 = vperm.xlu0 %3252, %v3114
      %v3254 = vpop.permute.xlu0 %3253
      %3256 = vset.pattern.permute.xlu0 1
      %3257 = vperm.xlu0 %3256, %v3115
      %v3258 = vpop.permute.xlu0 %3257
      %3260 = vset.pattern.permute.xlu0 1
      %3261 = vperm.xlu0 %3260, %v3116
      %v3262 = vpop.permute.xlu0 %3261
      %3264 = vset.pattern.permute.xlu0 1
      %3265 = vperm.xlu0 %3264, %v3117
      %v3266 = vpop.permute.xlu0 %3265
      %3268 = vset.pattern.permute.xlu0 1
      %3269 = vperm.xlu0 %3268, %v3118
      %v3270 = vpop.permute.xlu0 %3269
      %3272 = vset.pattern.permute.xlu0 1
      %3273 = vperm.xlu0 %3272, %v3119
      %v3274 = vpop.permute.xlu0 %3273
      %3276 = vset.pattern.permute.xlu0 1
      %3277 = vperm.xlu0 %3276, %v3120
      %v3278 = vpop.permute.xlu0 %3277
      %3280 = vset.pattern.permute.xlu0 1
      %3281 = vperm.xlu0 %3280, %v3121
      %v3282 = vpop.permute.xlu0 %3281
      %3284 = vset.pattern.permute.xlu0 1
      %3285 = vperm.xlu0 %3284, %v3122
      %v3286 = vpop.permute.xlu0 %3285
      %3288 = vset.pattern.permute.xlu0 1
      %3289 = vperm.xlu0 %3288, %v3123
      %v3290 = vpop.permute.xlu0 %3289
      %3292 = vset.pattern.permute.xlu0 1
      %3293 = vperm.xlu0 %3292, %v3124
      %v3294 = vpop.permute.xlu0 %3293
      %3296 = vset.pattern.permute.xlu0 1
      %3297 = vperm.xlu0 %3296, %v3125
      %v3298 = vpop.permute.xlu0 %3297
      %3300 = vset.pattern.permute.xlu0 1
      %3301 = vperm.xlu0 %3300, %v3126
      %v3302 = vpop.permute.xlu0 %3301
      %3304 = vset.pattern.permute.xlu0 1
      %3305 = vperm.xlu0 %3304, %v3127
      %v3306 = vpop.permute.xlu0 %3305
      %3308 = vset.pattern.permute.xlu0 1
      %3309 = vperm.xlu0 %3308, %v3128
      %v3310 = vpop.permute.xlu0 %3309
      %3312 = vset.pattern.permute.xlu0 1
      %3313 = vperm.xlu0 %3312, %v3129
      %v3314 = vpop.permute.xlu0 %3313
      %v3316 = vlaneseq
      %v3317 = vshrl.u32 %v3316, 7
      %v3318 = vsub.s32 1, %v3317
      %v3319 = vrot.slane %v3131, %v3318
      %v3320 = vmul.f32 %v3254, %v3319
      %v3321 = vmul.f32 %v3258, %v3319
      %v3322 = vmul.f32 %v3262, %v3319
      %v3323 = vmul.f32 %v3266, %v3319
      %v3324 = vmul.f32 %v3270, %v3319
      %v3325 = vmul.f32 %v3274, %v3319
      %v3326 = vmul.f32 %v3278, %v3319
      %v3327 = vmul.f32 %v3282, %v3319
      %v3328 = vmul.f32 %v3286, %v3319
      %v3329 = vmul.f32 %v3290, %v3319
      %v3330 = vmul.f32 %v3294, %v3319
      %v3331 = vmul.f32 %v3298, %v3319
      %v3332 = vmul.f32 %v3302, %v3319
      %v3333 = vmul.f32 %v3306, %v3319
      %v3334 = vmul.f32 %v3310, %v3319
      %v3335 = vmul.f32 %v3314, %v3319
      %v3336 = vadd.f32 %v3236, %v3320
      %v3337 = vadd.f32 %v3237, %v3321
      %v3338 = vadd.f32 %v3238, %v3322
      %v3339 = vadd.f32 %v3239, %v3323
      %v3340 = vadd.f32 %v3240, %v3324
      %v3341 = vadd.f32 %v3241, %v3325
      %v3342 = vadd.f32 %v3242, %v3326
      %v3343 = vadd.f32 %v3243, %v3327
      %v3344 = vadd.f32 %v3244, %v3328
      %v3345 = vadd.f32 %v3245, %v3329
      %v3346 = vadd.f32 %v3246, %v3330
      %v3347 = vadd.f32 %v3247, %v3331
      %v3348 = vadd.f32 %v3248, %v3332
      %v3349 = vadd.f32 %v3249, %v3333
      %v3350 = vadd.f32 %v3250, %v3334
      %v3351 = vadd.f32 %v3251, %v3335
      %3352 = vset.pattern.permute.xlu0 2
      %3353 = vperm.xlu0 %3352, %v3114
      %v3354 = vpop.permute.xlu0 %3353
      %3356 = vset.pattern.permute.xlu0 2
      %3357 = vperm.xlu0 %3356, %v3115
      %v3358 = vpop.permute.xlu0 %3357
      %3360 = vset.pattern.permute.xlu0 2
      %3361 = vperm.xlu0 %3360, %v3116
      %v3362 = vpop.permute.xlu0 %3361
      %3364 = vset.pattern.permute.xlu0 2
      %3365 = vperm.xlu0 %3364, %v3117
      %v3366 = vpop.permute.xlu0 %3365
      %3368 = vset.pattern.permute.xlu0 2
      %3369 = vperm.xlu0 %3368, %v3118
      %v3370 = vpop.permute.xlu0 %3369
      %3372 = vset.pattern.permute.xlu0 2
      %3373 = vperm.xlu0 %3372, %v3119
      %v3374 = vpop.permute.xlu0 %3373
      %3376 = vset.pattern.permute.xlu0 2
      %3377 = vperm.xlu0 %3376, %v3120
      %v3378 = vpop.permute.xlu0 %3377
      %3380 = vset.pattern.permute.xlu0 2
      %3381 = vperm.xlu0 %3380, %v3121
      %v3382 = vpop.permute.xlu0 %3381
      %3384 = vset.pattern.permute.xlu0 2
      %3385 = vperm.xlu0 %3384, %v3122
      %v3386 = vpop.permute.xlu0 %3385
      %3388 = vset.pattern.permute.xlu0 2
      %3389 = vperm.xlu0 %3388, %v3123
      %v3390 = vpop.permute.xlu0 %3389
      %3392 = vset.pattern.permute.xlu0 2
      %3393 = vperm.xlu0 %3392, %v3124
      %v3394 = vpop.permute.xlu0 %3393
      %3396 = vset.pattern.permute.xlu0 2
      %3397 = vperm.xlu0 %3396, %v3125
      %v3398 = vpop.permute.xlu0 %3397
      %3400 = vset.pattern.permute.xlu0 2
      %3401 = vperm.xlu0 %3400, %v3126
      %v3402 = vpop.permute.xlu0 %3401
      %3404 = vset.pattern.permute.xlu0 2
      %3405 = vperm.xlu0 %3404, %v3127
      %v3406 = vpop.permute.xlu0 %3405
      %3408 = vset.pattern.permute.xlu0 2
      %3409 = vperm.xlu0 %3408, %v3128
      %v3410 = vpop.permute.xlu0 %3409
      %3412 = vset.pattern.permute.xlu0 2
      %3413 = vperm.xlu0 %3412, %v3129
      %v3414 = vpop.permute.xlu0 %3413
      %v3416 = vlaneseq
      %v3417 = vshrl.u32 %v3416, 7
      %v3418 = vsub.s32 2, %v3417
      %v3419 = vrot.slane %v3131, %v3418
      %v3420 = vmul.f32 %v3354, %v3419
      %v3421 = vmul.f32 %v3358, %v3419
      %v3422 = vmul.f32 %v3362, %v3419
      %v3423 = vmul.f32 %v3366, %v3419
      %v3424 = vmul.f32 %v3370, %v3419
      %v3425 = vmul.f32 %v3374, %v3419
      %v3426 = vmul.f32 %v3378, %v3419
      %v3427 = vmul.f32 %v3382, %v3419
      %v3428 = vmul.f32 %v3386, %v3419
      %v3429 = vmul.f32 %v3390, %v3419
      %v3430 = vmul.f32 %v3394, %v3419
      %v3431 = vmul.f32 %v3398, %v3419
      %v3432 = vmul.f32 %v3402, %v3419
      %v3433 = vmul.f32 %v3406, %v3419
      %v3434 = vmul.f32 %v3410, %v3419
      %v3435 = vmul.f32 %v3414, %v3419
      %v3436 = vadd.f32 %v3336, %v3420
      %v3437 = vadd.f32 %v3337, %v3421
      %v3438 = vadd.f32 %v3338, %v3422
      %v3439 = vadd.f32 %v3339, %v3423
      %v3440 = vadd.f32 %v3340, %v3424
      %v3441 = vadd.f32 %v3341, %v3425
      %v3442 = vadd.f32 %v3342, %v3426
      %v3443 = vadd.f32 %v3343, %v3427
      %v3444 = vadd.f32 %v3344, %v3428
      %v3445 = vadd.f32 %v3345, %v3429
      %v3446 = vadd.f32 %v3346, %v3430
      %v3447 = vadd.f32 %v3347, %v3431
      %v3448 = vadd.f32 %v3348, %v3432
      %v3449 = vadd.f32 %v3349, %v3433
      %v3450 = vadd.f32 %v3350, %v3434
      %v3451 = vadd.f32 %v3351, %v3435
      %3452 = vset.pattern.permute.xlu0 3
      %3453 = vperm.xlu0 %3452, %v3114
      %v3454 = vpop.permute.xlu0 %3453
      %3456 = vset.pattern.permute.xlu0 3
      %3457 = vperm.xlu0 %3456, %v3115
      %v3458 = vpop.permute.xlu0 %3457
      %3460 = vset.pattern.permute.xlu0 3
      %3461 = vperm.xlu0 %3460, %v3116
      %v3462 = vpop.permute.xlu0 %3461
      %3464 = vset.pattern.permute.xlu0 3
      %3465 = vperm.xlu0 %3464, %v3117
      %v3466 = vpop.permute.xlu0 %3465
      %3468 = vset.pattern.permute.xlu0 3
      %3469 = vperm.xlu0 %3468, %v3118
      %v3470 = vpop.permute.xlu0 %3469
      %3472 = vset.pattern.permute.xlu0 3
      %3473 = vperm.xlu0 %3472, %v3119
      %v3474 = vpop.permute.xlu0 %3473
      %3476 = vset.pattern.permute.xlu0 3
      %3477 = vperm.xlu0 %3476, %v3120
      %v3478 = vpop.permute.xlu0 %3477
      %3480 = vset.pattern.permute.xlu0 3
      %3481 = vperm.xlu0 %3480, %v3121
      %v3482 = vpop.permute.xlu0 %3481
      %3484 = vset.pattern.permute.xlu0 3
      %3485 = vperm.xlu0 %3484, %v3122
      %v3486 = vpop.permute.xlu0 %3485
      %3488 = vset.pattern.permute.xlu0 3
      %3489 = vperm.xlu0 %3488, %v3123
      %v3490 = vpop.permute.xlu0 %3489
      %3492 = vset.pattern.permute.xlu0 3
      %3493 = vperm.xlu0 %3492, %v3124
      %v3494 = vpop.permute.xlu0 %3493
      %3496 = vset.pattern.permute.xlu0 3
      %3497 = vperm.xlu0 %3496, %v3125
      %v3498 = vpop.permute.xlu0 %3497
      %3500 = vset.pattern.permute.xlu0 3
      %3501 = vperm.xlu0 %3500, %v3126
      %v3502 = vpop.permute.xlu0 %3501
      %3504 = vset.pattern.permute.xlu0 3
      %3505 = vperm.xlu0 %3504, %v3127
      %v3506 = vpop.permute.xlu0 %3505
      %3508 = vset.pattern.permute.xlu0 3
      %3509 = vperm.xlu0 %3508, %v3128
      %v3510 = vpop.permute.xlu0 %3509
      %3512 = vset.pattern.permute.xlu0 3
      %3513 = vperm.xlu0 %3512, %v3129
      %v3514 = vpop.permute.xlu0 %3513
      %v3516 = vlaneseq
      %v3517 = vshrl.u32 %v3516, 7
      %v3518 = vsub.s32 3, %v3517
      %v3519 = vrot.slane %v3131, %v3518
      %v3520 = vmul.f32 %v3454, %v3519
      %v3521 = vmul.f32 %v3458, %v3519
      %v3522 = vmul.f32 %v3462, %v3519
      %v3523 = vmul.f32 %v3466, %v3519
      %v3524 = vmul.f32 %v3470, %v3519
      %v3525 = vmul.f32 %v3474, %v3519
      %v3526 = vmul.f32 %v3478, %v3519
      %v3527 = vmul.f32 %v3482, %v3519
      %v3528 = vmul.f32 %v3486, %v3519
      %v3529 = vmul.f32 %v3490, %v3519
      %v3530 = vmul.f32 %v3494, %v3519
      %v3531 = vmul.f32 %v3498, %v3519
      %v3532 = vmul.f32 %v3502, %v3519
      %v3533 = vmul.f32 %v3506, %v3519
      %v3534 = vmul.f32 %v3510, %v3519
      %v3535 = vmul.f32 %v3514, %v3519
      %v3536 = vadd.f32 %v3436, %v3520
      %v3537 = vadd.f32 %v3437, %v3521
      %v3538 = vadd.f32 %v3438, %v3522
      %v3539 = vadd.f32 %v3439, %v3523
      %v3540 = vadd.f32 %v3440, %v3524
      %v3541 = vadd.f32 %v3441, %v3525
      %v3542 = vadd.f32 %v3442, %v3526
      %v3543 = vadd.f32 %v3443, %v3527
      %v3544 = vadd.f32 %v3444, %v3528
      %v3545 = vadd.f32 %v3445, %v3529
      %v3546 = vadd.f32 %v3446, %v3530
      %v3547 = vadd.f32 %v3447, %v3531
      %v3548 = vadd.f32 %v3448, %v3532
      %v3549 = vadd.f32 %v3449, %v3533
      %v3550 = vadd.f32 %v3450, %v3534
      %v3551 = vadd.f32 %v3451, %v3535
      %v3552 = vtanh.pop %v3536
      %v3553 = vtanh.pop %v3537
      %v3554 = vtanh.pop %v3538
      %v3555 = vtanh.pop %v3539
      %v3556 = vtanh.pop %v3540
      %v3557 = vtanh.pop %v3541
      %v3558 = vtanh.pop %v3542
      %v3559 = vtanh.pop %v3543
      %v3560 = vtanh.pop %v3544
      %v3561 = vtanh.pop %v3545
      %v3562 = vtanh.pop %v3546
      %v3563 = vtanh.pop %v3547
      %v3564 = vtanh.pop %v3548
      %v3565 = vtanh.pop %v3549
      %v3566 = vtanh.pop %v3550
      %v3567 = vtanh.pop %v3551
      %s3568 = scalar_lea.vmem %s4, 128
      %v3569 = vld [vmem:[%s3568] sm:$0xff]
      %v3570 = vld [vmem:[%s3568 + $0x8] sm:$0xff]
      %v3571 = vld [vmem:[%s3568 + $0x10] sm:$0xff]
      %v3572 = vld [vmem:[%s3568 + $0x18] sm:$0xff]
      %v3573 = vld [vmem:[%s3568 + $0x20] sm:$0xff]
      %v3574 = vld [vmem:[%s3568 + $0x28] sm:$0xff]
      %v3575 = vld [vmem:[%s3568 + $0x30] sm:$0xff]
      %v3576 = vld [vmem:[%s3568 + $0x38] sm:$0xff]
      %v3577 = vlaneseq
      %v3578 = vshrl.u32 %v3577, 7
      %v3579 = vsub.s32 2, %v3578
      %v3580 = vrot.slane %v369, %v3579
      %v3582 = vsel %vm1129, %v3552, 0
      %v3585 = vsel %vm1129, %v3553, 0
      %v3588 = vsel %vm1129, %v3554, 0
      %v3591 = vsel %vm1129, %v3555, 0
      %v3594 = vsel %vm1129, %v3556, 0
      %v3597 = vsel %vm1129, %v3557, 0
      %v3600 = vsel %vm1129, %v3558, 0
      %v3603 = vsel %vm1129, %v3559, 0
      %v3606 = vsel %vm1129, %v3560, 0
      %v3609 = vsel %vm1129, %v3561, 0
      %v3612 = vsel %vm1129, %v3562, 0
      %v3615 = vsel %vm1129, %v3563, 0
      %v3618 = vsel %vm1129, %v3564, 0
      %v3621 = vsel %vm1129, %v3565, 0
      %v3624 = vsel %vm1129, %v3566, 0
      %v3627 = vsel %vm1129, %v3567, 0
      %3629 = vmatprep.subr.mxu0 0.0
      %3630 = vmatpush1.msra.mxu0 %v3569
      %3631 = vmatprep.subr.mxu0 0.0
      %3632 = vmatpush1.msra.mxu0 %v3570
      %3633 = vmatprep.subr.mxu0 0.0
      %3634 = vmatpush1.msra.mxu0 %v3571
      %3635 = vmatprep.subr.mxu0 0.0
      %3636 = vmatpush1.msra.mxu0 %v3572
      %3637 = vmatprep.subr.mxu0 0.0
      %3638 = vmatpush1.msra.mxu0 %v3573
      %3639 = vmatprep.subr.mxu0 0.0
      %3640 = vmatpush1.msra.mxu0 %v3574
      %3641 = vmatprep.subr.mxu0 0.0
      %3642 = vmatpush1.msra.mxu0 %v3575
      %3643 = vmatprep.subr.mxu0 0.0
      %3644 = vmatpush1.msra.mxu0 %v3576
      %3645 = vmatprep.subr.mxu0 0.0
      %3646 = vmatpush1.msra.mxu0 0.0
      %3647 = vmatprep.subr.mxu0 0.0
      %3648 = vmatpush1.msra.mxu0 0.0
      %3649 = vmatprep.subr.mxu0 0.0
      %3650 = vmatpush1.msra.mxu0 0.0
      %3651 = vmatprep.subr.mxu0 0.0
      %3652 = vmatpush1.msra.mxu0 0.0
      %3653 = vmatprep.subr.mxu0 0.0
      %3654 = vmatpush1.msra.mxu0 0.0
      %3655 = vmatprep.subr.mxu0 0.0
      %3656 = vmatpush1.msra.mxu0 0.0
      %3657 = vmatprep.subr.mxu0 0.0
      %3658 = vmatpush1.msra.mxu0 0.0
      %3659 = vmatprep.subr.mxu0 0.0
      %3660 = vmatpush1.msra.mxu0 0.0
      %3661 = vmatprep.subr.mxu0 0.0
      %3662 = vmatpush1.msra.mxu0 0.0
      %3663 = vmatprep.subr.mxu0 0.0
      %3664 = vmatpush1.msra.mxu0 0.0
      %3665 = vmatprep.subr.mxu0 0.0
      %3666 = vmatpush1.msra.mxu0 0.0
      %3667 = vmatprep.subr.mxu0 0.0
      %3668 = vmatpush1.msra.mxu0 0.0
      %3669 = vmatprep.subr.mxu0 0.0
      %3670 = vmatpush1.msra.mxu0 0.0
      %3671 = vmatprep.subr.mxu0 0.0
      %3672 = vmatpush1.msra.mxu0 0.0
      %3673 = vmatprep.subr.mxu0 0.0
      %3674 = vmatpush1.msra.mxu0 0.0
      %3675 = vmatprep.subr.mxu0 0.0
      %3676 = vmatpush1.msra.mxu0 0.0
      %3677 = vmatprep.subr.mxu0 0.0
      %3678 = vmatpush1.msra.mxu0 0.0
      %3679 = vmatprep.subr.mxu0 0.0
      %3680 = vmatpush1.msra.mxu0 0.0
      %3681 = vmatprep.subr.mxu0 0.0
      %3682 = vmatpush1.msra.mxu0 0.0
      %3683 = vmatprep.subr.mxu0 0.0
      %3684 = vmatpush1.msra.mxu0 0.0
      %3685 = vmatprep.subr.mxu0 0.0
      %3686 = vmatpush1.msra.mxu0 0.0
      %3687 = vmatprep.subr.mxu0 0.0
      %3688 = vmatpush1.msra.mxu0 0.0
      %3689 = vmatprep.subr.mxu0 0.0
      %3690 = vmatpush1.msra.mxu0 0.0
      %3691 = vmatprep.subr.mxu0 0.0
      %3692 = vmatpush1.msra.mxu0 0.0
      %3693 = vmatprep.mubr.f32.mxu0 0.0
      %3694 = vmatmul.mubr.f32.gmra.mrb[0].mxu0 %v3582
      %v3695 = vpop.f32.mrb[0].mxu0
      %v3696 = vadd.f32 %v3580, %v3695
      %v3697 = vpop.f32.mrb[0].mxu0
      %3698 = vmatprep.mubr.f32.mxu0 0.0
      %3699 = vmatmul.mubr.f32.gmra.mrb[0].mxu0 %v3585
      %v3700 = vpop.f32.mrb[0].mxu0
      %v3701 = vadd.f32 %v3580, %v3700
      %v3702 = vpop.f32.mrb[0].mxu0
      %3703 = vmatprep.mubr.f32.mxu0 0.0
      %3704 = vmatmul.mubr.f32.gmra.mrb[0].mxu0 %v3588
      %v3705 = vpop.f32.mrb[0].mxu0
      %v3706 = vadd.f32 %v3580, %v3705
      %v3707 = vpop.f32.mrb[0].mxu0
      %3708 = vmatprep.mubr.f32.mxu0 0.0
      %3709 = vmatmul.mubr.f32.gmra.mrb[0].mxu0 %v3591
      %v3710 = vpop.f32.mrb[0].mxu0
      %v3711 = vadd.f32 %v3580, %v3710
      %v3712 = vpop.f32.mrb[0].mxu0
      %3713 = vmatprep.mubr.f32.mxu0 0.0
      %3714 = vmatmul.mubr.f32.gmra.mrb[0].mxu0 %v3594
      %v3715 = vpop.f32.mrb[0].mxu0
      %v3716 = vadd.f32 %v3580, %v3715
      %v3717 = vpop.f32.mrb[0].mxu0
      %3718 = vmatprep.mubr.f32.mxu0 0.0
      %3719 = vmatmul.mubr.f32.gmra.mrb[0].mxu0 %v3597
      %v3720 = vpop.f32.mrb[0].mxu0
      %v3721 = vadd.f32 %v3580, %v3720
      %v3722 = vpop.f32.mrb[0].mxu0
      %3723 = vmatprep.mubr.f32.mxu0 0.0
      %3724 = vmatmul.mubr.f32.gmra.mrb[0].mxu0 %v3600
      %v3725 = vpop.f32.mrb[0].mxu0
      %v3726 = vadd.f32 %v3580, %v3725
      %v3727 = vpop.f32.mrb[0].mxu0
      %3728 = vmatprep.mubr.f32.mxu0 0.0
      %3729 = vmatmul.mubr.f32.gmra.mrb[0].mxu0 %v3603
      %v3730 = vpop.f32.mrb[0].mxu0
      %v3731 = vadd.f32 %v3580, %v3730
      %v3732 = vpop.f32.mrb[0].mxu0
      %3733 = vmatprep.mubr.f32.mxu0 0.0
      %3734 = vmatmul.mubr.f32.gmra.mrb[0].mxu0 %v3606
      %v3735 = vpop.f32.mrb[0].mxu0
      %v3736 = vadd.f32 %v3580, %v3735
      %v3737 = vpop.f32.mrb[0].mxu0
      %3738 = vmatprep.mubr.f32.mxu0 0.0
      %3739 = vmatmul.mubr.f32.gmra.mrb[0].mxu0 %v3609
      %v3740 = vpop.f32.mrb[0].mxu0
      %v3741 = vadd.f32 %v3580, %v3740
      %v3742 = vpop.f32.mrb[0].mxu0
      %3743 = vmatprep.mubr.f32.mxu0 0.0
      %3744 = vmatmul.mubr.f32.gmra.mrb[0].mxu0 %v3612
      %v3745 = vpop.f32.mrb[0].mxu0
      %v3746 = vadd.f32 %v3580, %v3745
      %v3747 = vpop.f32.mrb[0].mxu0
      %3748 = vmatprep.mubr.f32.mxu0 0.0
      %3749 = vmatmul.mubr.f32.gmra.mrb[0].mxu0 %v3615
      %v3750 = vpop.f32.mrb[0].mxu0
      %v3751 = vadd.f32 %v3580, %v3750
      %v3752 = vpop.f32.mrb[0].mxu0
      %3753 = vmatprep.mubr.f32.mxu0 0.0
      %3754 = vmatmul.mubr.f32.gmra.mrb[0].mxu0 %v3618
      %v3755 = vpop.f32.mrb[0].mxu0
      %v3756 = vadd.f32 %v3580, %v3755
      %v3757 = vpop.f32.mrb[0].mxu0
      %3758 = vmatprep.mubr.f32.mxu0 0.0
      %3759 = vmatmul.mubr.f32.gmra.mrb[0].mxu0 %v3621
      %v3760 = vpop.f32.mrb[0].mxu0
      %v3761 = vadd.f32 %v3580, %v3760
      %v3762 = vpop.f32.mrb[0].mxu0
      %3763 = vmatprep.mubr.f32.mxu0 0.0
      %3764 = vmatmul.mubr.f32.gmra.mrb[0].mxu0 %v3624
      %v3765 = vpop.f32.mrb[0].mxu0
      %v3766 = vadd.f32 %v3580, %v3765
      %v3767 = vpop.f32.mrb[0].mxu0
      %3768 = vmatprep.mubr.f32.mxu0 0.0
      %3769 = vmatmul.mubr.f32.gmra.mrb[0].mxu0 %v3627
      %v3770 = vpop.f32.mrb[0].mxu0
      %v3771 = vadd.f32 %v3580, %v3770
      %v3772 = vpop.f32.mrb[0].mxu0
      %3773 = vdwg.mxu0
      %v3774 = vtanh.pop %v3696
      %v3775 = vtanh.pop %v3701
      %v3776 = vtanh.pop %v3706
      %v3777 = vtanh.pop %v3711
      %v3778 = vtanh.pop %v3716
      %v3779 = vtanh.pop %v3721
      %v3780 = vtanh.pop %v3726
      %v3781 = vtanh.pop %v3731
      %v3782 = vtanh.pop %v3736
      %v3783 = vtanh.pop %v3741
      %v3784 = vtanh.pop %v3746
      %v3785 = vtanh.pop %v3751
      %v3786 = vtanh.pop %v3756
      %v3787 = vtanh.pop %v3761
      %v3788 = vtanh.pop %v3766
      %v3789 = vtanh.pop %v3771
      %s3790 = scalar_lea.vmem %s6, 128
      %v3791 = vld [vmem:[%s3790] sm:$0xff]
      %v3792 = vld [vmem:[%s3790 + $0x8] sm:$0xff]
      %v3793 = vld [vmem:[%s3790 + $0x10] sm:$0xff]
      %v3794 = vld [vmem:[%s3790 + $0x18] sm:$0xff]
      %v3795 = vld [vmem:[%s3790 + $0x20] sm:$0xff]
      %v3796 = vld [vmem:[%s3790 + $0x28] sm:$0xff]
      %v3797 = vld [vmem:[%s3790 + $0x30] sm:$0xff]
      %v3798 = vld [vmem:[%s3790 + $0x38] sm:$0xff]
      %v3799 = vlaneseq
      %v3800 = vshrl.u32 %v3799, 7
      %v3801 = vsub.s32 2, %v3800
      %v3802 = vrot.slane %v370, %v3801
      %v3804 = vsel %vm1129, %v3774, 0
      %v3807 = vsel %vm1129, %v3775, 0
      %v3810 = vsel %vm1129, %v3776, 0
      %v3813 = vsel %vm1129, %v3777, 0
      %v3816 = vsel %vm1129, %v3778, 0
      %v3819 = vsel %vm1129, %v3779, 0
      %v3822 = vsel %vm1129, %v3780, 0
      %v3825 = vsel %vm1129, %v3781, 0
      %v3828 = vsel %vm1129, %v3782, 0
      %v3831 = vsel %vm1129, %v3783, 0
      %v3834 = vsel %vm1129, %v3784, 0
      %v3837 = vsel %vm1129, %v3785, 0
      %v3840 = vsel %vm1129, %v3786, 0
      %v3843 = vsel %vm1129, %v3787, 0
      %v3846 = vsel %vm1129, %v3788, 0
      %v3849 = vsel %vm1129, %v3789, 0
      %3851 = vmatprep.subr.mxu0 0.0
      %3852 = vmatpush1.msra.mxu0 %v3791
      %3853 = vmatprep.subr.mxu0 0.0
      %3854 = vmatpush1.msra.mxu0 %v3792
      %3855 = vmatprep.subr.mxu0 0.0
      %3856 = vmatpush1.msra.mxu0 %v3793
      %3857 = vmatprep.subr.mxu0 0.0
      %3858 = vmatpush1.msra.mxu0 %v3794
      %3859 = vmatprep.subr.mxu0 0.0
      %3860 = vmatpush1.msra.mxu0 %v3795
      %3861 = vmatprep.subr.mxu0 0.0
      %3862 = vmatpush1.msra.mxu0 %v3796
      %3863 = vmatprep.subr.mxu0 0.0
      %3864 = vmatpush1.msra.mxu0 %v3797
      %3865 = vmatprep.subr.mxu0 0.0
      %3866 = vmatpush1.msra.mxu0 %v3798
      %3867 = vmatprep.subr.mxu0 0.0
      %3868 = vmatpush1.msra.mxu0 0.0
      %3869 = vmatprep.subr.mxu0 0.0
      %3870 = vmatpush1.msra.mxu0 0.0
      %3871 = vmatprep.subr.mxu0 0.0
      %3872 = vmatpush1.msra.mxu0 0.0
      %3873 = vmatprep.subr.mxu0 0.0
      %3874 = vmatpush1.msra.mxu0 0.0
      %3875 = vmatprep.subr.mxu0 0.0
      %3876 = vmatpush1.msra.mxu0 0.0
      %3877 = vmatprep.subr.mxu0 0.0
      %3878 = vmatpush1.msra.mxu0 0.0
      %3879 = vmatprep.subr.mxu0 0.0
      %3880 = vmatpush1.msra.mxu0 0.0
      %3881 = vmatprep.subr.mxu0 0.0
      %3882 = vmatpush1.msra.mxu0 0.0
      %3883 = vmatprep.subr.mxu0 0.0
      %3884 = vmatpush1.msra.mxu0 0.0
      %3885 = vmatprep.subr.mxu0 0.0
      %3886 = vmatpush1.msra.mxu0 0.0
      %3887 = vmatprep.subr.mxu0 0.0
      %3888 = vmatpush1.msra.mxu0 0.0
      %3889 = vmatprep.subr.mxu0 0.0
      %3890 = vmatpush1.msra.mxu0 0.0
      %3891 = vmatprep.subr.mxu0 0.0
      %3892 = vmatpush1.msra.mxu0 0.0
      %3893 = vmatprep.subr.mxu0 0.0
      %3894 = vmatpush1.msra.mxu0 0.0
      %3895 = vmatprep.subr.mxu0 0.0
      %3896 = vmatpush1.msra.mxu0 0.0
      %3897 = vmatprep.subr.mxu0 0.0
      %3898 = vmatpush1.msra.mxu0 0.0
      %3899 = vmatprep.subr.mxu0 0.0
      %3900 = vmatpush1.msra.mxu0 0.0
      %3901 = vmatprep.subr.mxu0 0.0
      %3902 = vmatpush1.msra.mxu0 0.0
      %3903 = vmatprep.subr.mxu0 0.0
      %3904 = vmatpush1.msra.mxu0 0.0
      %3905 = vmatprep.subr.mxu0 0.0
      %3906 = vmatpush1.msra.mxu0 0.0
      %3907 = vmatprep.subr.mxu0 0.0
      %3908 = vmatpush1.msra.mxu0 0.0
      %3909 = vmatprep.subr.mxu0 0.0
      %3910 = vmatpush1.msra.mxu0 0.0
      %3911 = vmatprep.subr.mxu0 0.0
      %3912 = vmatpush1.msra.mxu0 0.0
      %3913 = vmatprep.subr.mxu0 0.0
      %3914 = vmatpush1.msra.mxu0 0.0
      %3915 = vmatprep.mubr.f32.mxu0 0.0
      %3916 = vmatmul.mubr.f32.gmra.mrb[0].mxu0 %v3804
      %v3917 = vpop.f32.mrb[0].mxu0
      %v3918 = vadd.f32 %v3802, %v3917
      %v3919 = vpop.f32.mrb[0].mxu0
      %3920 = vmatprep.mubr.f32.mxu0 0.0
      %3921 = vmatmul.mubr.f32.gmra.mrb[0].mxu0 %v3807
      %v3922 = vpop.f32.mrb[0].mxu0
      %v3923 = vadd.f32 %v3802, %v3922
      %v3924 = vpop.f32.mrb[0].mxu0
      %3925 = vmatprep.mubr.f32.mxu0 0.0
      %3926 = vmatmul.mubr.f32.gmra.mrb[0].mxu0 %v3810
      %v3927 = vpop.f32.mrb[0].mxu0
      %v3928 = vadd.f32 %v3802, %v3927
      %v3929 = vpop.f32.mrb[0].mxu0
      %3930 = vmatprep.mubr.f32.mxu0 0.0
      %3931 = vmatmul.mubr.f32.gmra.mrb[0].mxu0 %v3813
      %v3932 = vpop.f32.mrb[0].mxu0
      %v3933 = vadd.f32 %v3802, %v3932
      %v3934 = vpop.f32.mrb[0].mxu0
      %3935 = vmatprep.mubr.f32.mxu0 0.0
      %3936 = vmatmul.mubr.f32.gmra.mrb[0].mxu0 %v3816
      %v3937 = vpop.f32.mrb[0].mxu0
      %v3938 = vadd.f32 %v3802, %v3937
      %v3939 = vpop.f32.mrb[0].mxu0
      %3940 = vmatprep.mubr.f32.mxu0 0.0
      %3941 = vmatmul.mubr.f32.gmra.mrb[0].mxu0 %v3819
      %v3942 = vpop.f32.mrb[0].mxu0
      %v3943 = vadd.f32 %v3802, %v3942
      %v3944 = vpop.f32.mrb[0].mxu0
      %3945 = vmatprep.mubr.f32.mxu0 0.0
      %3946 = vmatmul.mubr.f32.gmra.mrb[0].mxu0 %v3822
      %v3947 = vpop.f32.mrb[0].mxu0
      %v3948 = vadd.f32 %v3802, %v3947
      %v3949 = vpop.f32.mrb[0].mxu0
      %3950 = vmatprep.mubr.f32.mxu0 0.0
      %3951 = vmatmul.mubr.f32.gmra.mrb[0].mxu0 %v3825
      %v3952 = vpop.f32.mrb[0].mxu0
      %v3953 = vadd.f32 %v3802, %v3952
      %v3954 = vpop.f32.mrb[0].mxu0
      %3955 = vmatprep.mubr.f32.mxu0 0.0
      %3956 = vmatmul.mubr.f32.gmra.mrb[0].mxu0 %v3828
      %v3957 = vpop.f32.mrb[0].mxu0
      %v3958 = vadd.f32 %v3802, %v3957
      %v3959 = vpop.f32.mrb[0].mxu0
      %3960 = vmatprep.mubr.f32.mxu0 0.0
      %3961 = vmatmul.mubr.f32.gmra.mrb[0].mxu0 %v3831
      %v3962 = vpop.f32.mrb[0].mxu0
      %v3963 = vadd.f32 %v3802, %v3962
      %v3964 = vpop.f32.mrb[0].mxu0
      %3965 = vmatprep.mubr.f32.mxu0 0.0
      %3966 = vmatmul.mubr.f32.gmra.mrb[0].mxu0 %v3834
      %v3967 = vpop.f32.mrb[0].mxu0
      %v3968 = vadd.f32 %v3802, %v3967
      %v3969 = vpop.f32.mrb[0].mxu0
      %3970 = vmatprep.mubr.f32.mxu0 0.0
      %3971 = vmatmul.mubr.f32.gmra.mrb[0].mxu0 %v3837
      %v3972 = vpop.f32.mrb[0].mxu0
      %v3973 = vadd.f32 %v3802, %v3972
      %v3974 = vpop.f32.mrb[0].mxu0
      %3975 = vmatprep.mubr.f32.mxu0 0.0
      %3976 = vmatmul.mubr.f32.gmra.mrb[0].mxu0 %v3840
      %v3977 = vpop.f32.mrb[0].mxu0
      %v3978 = vadd.f32 %v3802, %v3977
      %v3979 = vpop.f32.mrb[0].mxu0
      %3980 = vmatprep.mubr.f32.mxu0 0.0
      %3981 = vmatmul.mubr.f32.gmra.mrb[0].mxu0 %v3843
      %v3982 = vpop.f32.mrb[0].mxu0
      %v3983 = vadd.f32 %v3802, %v3982
      %v3984 = vpop.f32.mrb[0].mxu0
      %3985 = vmatprep.mubr.f32.mxu0 0.0
      %3986 = vmatmul.mubr.f32.gmra.mrb[0].mxu0 %v3846
      %v3987 = vpop.f32.mrb[0].mxu0
      %v3988 = vadd.f32 %v3802, %v3987
      %v3989 = vpop.f32.mrb[0].mxu0
      %3990 = vmatprep.mubr.f32.mxu0 0.0
      %3991 = vmatmul.mubr.f32.gmra.mrb[0].mxu0 %v3849
      %v3992 = vpop.f32.mrb[0].mxu0
      %v3993 = vadd.f32 %v3802, %v3992
      %v3994 = vpop.f32.mrb[0].mxu0
      %3995 = vdwg.mxu0
      %v3996 = vtanh.pop %v3918
      %v3997 = vtanh.pop %v3923
      %v3998 = vtanh.pop %v3928
      %v3999 = vtanh.pop %v3933
      %v4000 = vtanh.pop %v3938
      %v4001 = vtanh.pop %v3943
      %v4002 = vtanh.pop %v3948
      %v4003 = vtanh.pop %v3953
      %v4004 = vtanh.pop %v3958
      %v4005 = vtanh.pop %v3963
      %v4006 = vtanh.pop %v3968
      %v4007 = vtanh.pop %v3973
      %v4008 = vtanh.pop %v3978
      %v4009 = vtanh.pop %v3983
      %v4010 = vtanh.pop %v3988
      %v4011 = vtanh.pop %v3993
      %v4012 = vsub.f32 %v2950, %v3918
      %v4013 = vsub.f32 %v2951, %v3923
      %v4014 = vsub.f32 %v2952, %v3928
      %v4015 = vsub.f32 %v2953, %v3933
      %v4016 = vsub.f32 %v2954, %v3938
      %v4017 = vsub.f32 %v2955, %v3943
      %v4018 = vsub.f32 %v2956, %v3948
      %v4019 = vsub.f32 %v2957, %v3953
      %v4020 = vsub.f32 %v2958, %v3958
      %v4021 = vsub.f32 %v2959, %v3963
      %v4022 = vsub.f32 %v2960, %v3968
      %v4023 = vsub.f32 %v2961, %v3973
      %v4024 = vsub.f32 %v2962, %v3978
      %v4025 = vsub.f32 %v2963, %v3983
      %v4026 = vsub.f32 %v2964, %v3988
      %v4027 = vsub.f32 %v2965, %v3993
      %v4028 = vlaneseq
      %v4029 = vshrl.u32 %v4028, 7
      %v4030 = vsub.s32 2, %v4029
      %v4031 = vrot.slane %v367, %v4030
      %v4032 = vmul.f32 %v4031, %v4012
      %v4033 = vmul.f32 %v4031, %v4013
      %v4034 = vmul.f32 %v4031, %v4014
      %v4035 = vmul.f32 %v4031, %v4015
      %v4036 = vmul.f32 %v4031, %v4016
      %v4037 = vmul.f32 %v4031, %v4017
      %v4038 = vmul.f32 %v4031, %v4018
      %v4039 = vmul.f32 %v4031, %v4019
      %v4040 = vmul.f32 %v4031, %v4020
      %v4041 = vmul.f32 %v4031, %v4021
      %v4042 = vmul.f32 %v4031, %v4022
      %v4043 = vmul.f32 %v4031, %v4023
      %v4044 = vmul.f32 %v4031, %v4024
      %v4045 = vmul.f32 %v4031, %v4025
      %v4046 = vmul.f32 %v4031, %v4026
      %v4047 = vmul.f32 %v4031, %v4027
      %v4048 = vsub.f32 0.0, %v3996
      %v4049 = vsub.f32 0.0, %v3997
      %v4050 = vsub.f32 0.0, %v3998
      %v4051 = vsub.f32 0.0, %v3999
      %v4052 = vsub.f32 0.0, %v4000
      %v4053 = vsub.f32 0.0, %v4001
      %v4054 = vsub.f32 0.0, %v4002
      %v4055 = vsub.f32 0.0, %v4003
      %v4056 = vsub.f32 0.0, %v4004
      %v4057 = vsub.f32 0.0, %v4005
      %v4058 = vsub.f32 0.0, %v4006
      %v4059 = vsub.f32 0.0, %v4007
      %v4060 = vsub.f32 0.0, %v4008
      %v4061 = vsub.f32 0.0, %v4009
      %v4062 = vsub.f32 0.0, %v4010
      %v4063 = vsub.f32 0.0, %v4011
      %v4064 = vmul.f32 %v4048, 1.442695
      %v4065 = vpow.pop %v4064
      %v4066 = vmul.f32 %v4049, 1.442695
      %v4067 = vpow.pop %v4066
      %v4068 = vmul.f32 %v4050, 1.442695
      %v4069 = vpow.pop %v4068
      %v4070 = vmul.f32 %v4051, 1.442695
      %v4071 = vpow.pop %v4070
      %v4072 = vmul.f32 %v4052, 1.442695
      %v4073 = vpow.pop %v4072
      %v4074 = vmul.f32 %v4053, 1.442695
      %v4075 = vpow.pop %v4074
      %v4076 = vmul.f32 %v4054, 1.442695
      %v4077 = vpow.pop %v4076
      %v4078 = vmul.f32 %v4055, 1.442695
      %v4079 = vpow.pop %v4078
      %v4080 = vmul.f32 %v4056, 1.442695
      %v4081 = vpow.pop %v4080
      %v4082 = vmul.f32 %v4057, 1.442695
      %v4083 = vpow.pop %v4082
      %v4084 = vmul.f32 %v4058, 1.442695
      %v4085 = vpow.pop %v4084
      %v4086 = vmul.f32 %v4059, 1.442695
      %v4087 = vpow.pop %v4086
      %v4088 = vmul.f32 %v4060, 1.442695
      %v4089 = vpow.pop %v4088
      %v4090 = vmul.f32 %v4061, 1.442695
      %v4091 = vpow.pop %v4090
      %v4092 = vmul.f32 %v4062, 1.442695
      %v4093 = vpow.pop %v4092
      %v4094 = vmul.f32 %v4063, 1.442695
      %v4095 = vpow.pop %v4094
      %4112 = vrot.lane.b32.xlu0 %v4065, 124
      %v4113 = vpop.permute.xlu0 %4112
      %4114 = vrot.lane.b32.xlu0 %v4067, 124
      %v4115 = vpop.permute.xlu0 %4114
      %4116 = vrot.lane.b32.xlu0 %v4069, 124
      %v4117 = vpop.permute.xlu0 %4116
      %4118 = vrot.lane.b32.xlu0 %v4071, 124
      %v4119 = vpop.permute.xlu0 %4118
      %4120 = vrot.lane.b32.xlu0 %v4073, 124
      %v4121 = vpop.permute.xlu0 %4120
      %4122 = vrot.lane.b32.xlu0 %v4075, 124
      %v4123 = vpop.permute.xlu0 %4122
      %4124 = vrot.lane.b32.xlu0 %v4077, 124
      %v4125 = vpop.permute.xlu0 %4124
      %4126 = vrot.lane.b32.xlu0 %v4079, 124
      %v4127 = vpop.permute.xlu0 %4126
      %4128 = vrot.lane.b32.xlu0 %v4081, 124
      %v4129 = vpop.permute.xlu0 %4128
      %4130 = vrot.lane.b32.xlu0 %v4083, 124
      %v4131 = vpop.permute.xlu0 %4130
      %4132 = vrot.lane.b32.xlu0 %v4085, 124
      %v4133 = vpop.permute.xlu0 %4132
      %4134 = vrot.lane.b32.xlu0 %v4087, 124
      %v4135 = vpop.permute.xlu0 %4134
      %4136 = vrot.lane.b32.xlu0 %v4089, 124
      %v4137 = vpop.permute.xlu0 %4136
      %4138 = vrot.lane.b32.xlu0 %v4091, 124
      %v4139 = vpop.permute.xlu0 %4138
      %4140 = vrot.lane.b32.xlu0 %v4093, 124
      %v4141 = vpop.permute.xlu0 %4140
      %4142 = vrot.lane.b32.xlu0 %v4095, 124
      %v4143 = vpop.permute.xlu0 %4142
      %v4160 = vmul.f32 %v4032, %v4113
      %v4161 = vmul.f32 %v4033, %v4115
      %v4162 = vmul.f32 %v4034, %v4117
      %v4163 = vmul.f32 %v4035, %v4119
      %v4164 = vmul.f32 %v4036, %v4121
      %v4165 = vmul.f32 %v4037, %v4123
      %v4166 = vmul.f32 %v4038, %v4125
      %v4167 = vmul.f32 %v4039, %v4127
      %v4168 = vmul.f32 %v4040, %v4129
      %v4169 = vmul.f32 %v4041, %v4131
      %v4170 = vmul.f32 %v4042, %v4133
      %v4171 = vmul.f32 %v4043, %v4135
      %v4172 = vmul.f32 %v4044, %v4137
      %v4173 = vmul.f32 %v4045, %v4139
      %v4174 = vmul.f32 %v4046, %v4141
      %v4175 = vmul.f32 %v4047, %v4143
      %v4176 = vadd.f32 %v3114, %v4160
      %v4177 = vadd.f32 %v3115, %v4161
      %v4178 = vadd.f32 %v3116, %v4162
      %v4179 = vadd.f32 %v3117, %v4163
      %v4180 = vadd.f32 %v3118, %v4164
      %v4181 = vadd.f32 %v3119, %v4165
      %v4182 = vadd.f32 %v3120, %v4166
      %v4183 = vadd.f32 %v3121, %v4167
      %v4184 = vadd.f32 %v3122, %v4168
      %v4185 = vadd.f32 %v3123, %v4169
      %v4186 = vadd.f32 %v3124, %v4170
      %v4187 = vadd.f32 %v3125, %v4171
      %v4188 = vadd.f32 %v3126, %v4172
      %v4189 = vadd.f32 %v3127, %v4173
      %v4190 = vadd.f32 %v3128, %v4174
      %v4191 = vadd.f32 %v3129, %v4175
      %4208 = vrot.lane.b32.xlu0 %v3996, 124
      %v4209 = vpop.permute.xlu0 %4208
      %4210 = vrot.lane.b32.xlu0 %v3997, 124
      %v4211 = vpop.permute.xlu0 %4210
      %4212 = vrot.lane.b32.xlu0 %v3998, 124
      %v4213 = vpop.permute.xlu0 %4212
      %4214 = vrot.lane.b32.xlu0 %v3999, 124
      %v4215 = vpop.permute.xlu0 %4214
      %4216 = vrot.lane.b32.xlu0 %v4000, 124
      %v4217 = vpop.permute.xlu0 %4216
      %4218 = vrot.lane.b32.xlu0 %v4001, 124
      %v4219 = vpop.permute.xlu0 %4218
      %4220 = vrot.lane.b32.xlu0 %v4002, 124
      %v4221 = vpop.permute.xlu0 %4220
      %4222 = vrot.lane.b32.xlu0 %v4003, 124
      %v4223 = vpop.permute.xlu0 %4222
      %4224 = vrot.lane.b32.xlu0 %v4004, 124
      %v4225 = vpop.permute.xlu0 %4224
      %4226 = vrot.lane.b32.xlu0 %v4005, 124
      %v4227 = vpop.permute.xlu0 %4226
      %4228 = vrot.lane.b32.xlu0 %v4006, 124
      %v4229 = vpop.permute.xlu0 %4228
      %4230 = vrot.lane.b32.xlu0 %v4007, 124
      %v4231 = vpop.permute.xlu0 %4230
      %4232 = vrot.lane.b32.xlu0 %v4008, 124
      %v4233 = vpop.permute.xlu0 %4232
      %4234 = vrot.lane.b32.xlu0 %v4009, 124
      %v4235 = vpop.permute.xlu0 %4234
      %4236 = vrot.lane.b32.xlu0 %v4010, 124
      %v4237 = vpop.permute.xlu0 %4236
      %4238 = vrot.lane.b32.xlu0 %v4011, 124
      %v4239 = vpop.permute.xlu0 %4238
      %v4256 = vmul.f32 %v4031, %v4209
      %v4257 = vmul.f32 %v4031, %v4211
      %v4258 = vmul.f32 %v4031, %v4213
      %v4259 = vmul.f32 %v4031, %v4215
      %v4260 = vmul.f32 %v4031, %v4217
      %v4261 = vmul.f32 %v4031, %v4219
      %v4262 = vmul.f32 %v4031, %v4221
      %v4263 = vmul.f32 %v4031, %v4223
      %v4264 = vmul.f32 %v4031, %v4225
      %v4265 = vmul.f32 %v4031, %v4227
      %v4266 = vmul.f32 %v4031, %v4229
      %v4267 = vmul.f32 %v4031, %v4231
      %v4268 = vmul.f32 %v4031, %v4233
      %v4269 = vmul.f32 %v4031, %v4235
      %v4270 = vmul.f32 %v4031, %v4237
      %v4271 = vmul.f32 %v4031, %v4239
      %v4272 = vsel %vm595, %v4256, 0.0
      %4273 = vadd.xlane.f32.xlu0 %v4272
      %v4274 = vpop.xlane.xlu0 %4273
      %v4275 = vsel %vm595, %v4257, 0.0
      %4276 = vadd.xlane.f32.xlu0 %v4275
      %v4277 = vpop.xlane.xlu0 %4276
      %v4278 = vsel %vm595, %v4258, 0.0
      %4279 = vadd.xlane.f32.xlu0 %v4278
      %v4280 = vpop.xlane.xlu0 %4279
      %v4281 = vsel %vm595, %v4259, 0.0
      %4282 = vadd.xlane.f32.xlu0 %v4281
      %v4283 = vpop.xlane.xlu0 %4282
      %v4284 = vsel %vm595, %v4260, 0.0
      %4285 = vadd.xlane.f32.xlu0 %v4284
      %v4286 = vpop.xlane.xlu0 %4285
      %v4287 = vsel %vm595, %v4261, 0.0
      %4288 = vadd.xlane.f32.xlu0 %v4287
      %v4289 = vpop.xlane.xlu0 %4288
      %v4290 = vsel %vm595, %v4262, 0.0
      %4291 = vadd.xlane.f32.xlu0 %v4290
      %v4292 = vpop.xlane.xlu0 %4291
      %v4293 = vsel %vm595, %v4263, 0.0
      %4294 = vadd.xlane.f32.xlu0 %v4293
      %v4295 = vpop.xlane.xlu0 %4294
      %v4296 = vsel %vm595, %v4264, 0.0
      %4297 = vadd.xlane.f32.xlu0 %v4296
      %v4298 = vpop.xlane.xlu0 %4297
      %v4299 = vsel %vm595, %v4265, 0.0
      %4300 = vadd.xlane.f32.xlu0 %v4299
      %v4301 = vpop.xlane.xlu0 %4300
      %v4302 = vsel %vm595, %v4266, 0.0
      %4303 = vadd.xlane.f32.xlu0 %v4302
      %v4304 = vpop.xlane.xlu0 %4303
      %v4305 = vsel %vm595, %v4267, 0.0
      %4306 = vadd.xlane.f32.xlu0 %v4305
      %v4307 = vpop.xlane.xlu0 %4306
      %v4308 = vsel %vm595, %v4268, 0.0
      %4309 = vadd.xlane.f32.xlu0 %v4308
      %v4310 = vpop.xlane.xlu0 %4309
      %v4311 = vsel %vm595, %v4269, 0.0
      %4312 = vadd.xlane.f32.xlu0 %v4311
      %v4313 = vpop.xlane.xlu0 %4312
      %v4314 = vsel %vm595, %v4270, 0.0
      %4315 = vadd.xlane.f32.xlu0 %v4314
      %v4316 = vpop.xlane.xlu0 %4315
      %v4317 = vsel %vm595, %v4271, 0.0
      %4318 = vadd.xlane.f32.xlu0 %v4317
      %v4319 = vpop.xlane.xlu0 %4318
      %v4320 = vsub.f32 %v3094, %v4274
      %v4321 = vsub.f32 %v3095, %v4277
      %v4322 = vsub.f32 %v3096, %v4280
      %v4323 = vsub.f32 %v3097, %v4283
      %v4324 = vsub.f32 %v3098, %v4286
      %v4325 = vsub.f32 %v3099, %v4289
      %v4326 = vsub.f32 %v3100, %v4292
      %v4327 = vsub.f32 %v3101, %v4295
      %v4328 = vsub.f32 %v3102, %v4298
      %v4329 = vsub.f32 %v3103, %v4301
      %v4330 = vsub.f32 %v3104, %v4304
      %v4331 = vsub.f32 %v3105, %v4307
      %v4332 = vsub.f32 %v3106, %v4310
      %v4333 = vsub.f32 %v3107, %v4313
      %v4334 = vsub.f32 %v3108, %v4316
      %v4335 = vsub.f32 %v3109, %v4319
      %v4336 = vlaneseq
      %v4337 = vshrl.u32 %v4336, 7
      %v4338 = vsub.s32 3, %v4337
      %v4339 = vrot.slane %v366, %v4338
      %v4340 = vmul.f32 %v4176, %v4339
      %v4341 = vmul.f32 %v4177, %v4339
      %v4342 = vmul.f32 %v4178, %v4339
      %v4343 = vmul.f32 %v4179, %v4339
      %v4344 = vmul.f32 %v4180, %v4339
      %v4345 = vmul.f32 %v4181, %v4339
      %v4346 = vmul.f32 %v4182, %v4339
      %v4347 = vmul.f32 %v4183, %v4339
      %v4348 = vmul.f32 %v4184, %v4339
      %v4349 = vmul.f32 %v4185, %v4339
      %v4350 = vmul.f32 %v4186, %v4339
      %v4351 = vmul.f32 %v4187, %v4339
      %v4352 = vmul.f32 %v4188, %v4339
      %v4353 = vmul.f32 %v4189, %v4339
      %v4354 = vmul.f32 %v4190, %v4339
      %v4355 = vmul.f32 %v4191, %v4339
      %s4356 = scalar_lea.vmem %s2, 12
      %v4357 = vld [vmem:[%s4356] sm:$0xf]
      %4359 = vset.pattern.permute.xlu0 0
      %4360 = vperm.xlu0 %4359, %v4340
      %v4361 = vpop.permute.xlu0 %4360
      %4364 = vset.pattern.permute.xlu0 0
      %4365 = vperm.xlu0 %4364, %v4341
      %v4366 = vpop.permute.xlu0 %4365
      %4369 = vset.pattern.permute.xlu0 0
      %4370 = vperm.xlu0 %4369, %v4342
      %v4371 = vpop.permute.xlu0 %4370
      %4374 = vset.pattern.permute.xlu0 0
      %4375 = vperm.xlu0 %4374, %v4343
      %v4376 = vpop.permute.xlu0 %4375
      %4379 = vset.pattern.permute.xlu0 0
      %4380 = vperm.xlu0 %4379, %v4344
      %v4381 = vpop.permute.xlu0 %4380
      %4384 = vset.pattern.permute.xlu0 0
      %4385 = vperm.xlu0 %4384, %v4345
      %v4386 = vpop.permute.xlu0 %4385
      %4389 = vset.pattern.permute.xlu0 0
      %4390 = vperm.xlu0 %4389, %v4346
      %v4391 = vpop.permute.xlu0 %4390
      %4394 = vset.pattern.permute.xlu0 0
      %4395 = vperm.xlu0 %4394, %v4347
      %v4396 = vpop.permute.xlu0 %4395
      %4399 = vset.pattern.permute.xlu0 0
      %4400 = vperm.xlu0 %4399, %v4348
      %v4401 = vpop.permute.xlu0 %4400
      %4404 = vset.pattern.permute.xlu0 0
      %4405 = vperm.xlu0 %4404, %v4349
      %v4406 = vpop.permute.xlu0 %4405
      %4409 = vset.pattern.permute.xlu0 0
      %4410 = vperm.xlu0 %4409, %v4350
      %v4411 = vpop.permute.xlu0 %4410
      %4414 = vset.pattern.permute.xlu0 0
      %4415 = vperm.xlu0 %4414, %v4351
      %v4416 = vpop.permute.xlu0 %4415
      %4419 = vset.pattern.permute.xlu0 0
      %4420 = vperm.xlu0 %4419, %v4352
      %v4421 = vpop.permute.xlu0 %4420
      %4424 = vset.pattern.permute.xlu0 0
      %4425 = vperm.xlu0 %4424, %v4353
      %v4426 = vpop.permute.xlu0 %4425
      %4429 = vset.pattern.permute.xlu0 0
      %4430 = vperm.xlu0 %4429, %v4354
      %v4431 = vpop.permute.xlu0 %4430
      %4434 = vset.pattern.permute.xlu0 0
      %4435 = vperm.xlu0 %4434, %v4355
      %v4436 = vpop.permute.xlu0 %4435
      %v4438 = vlaneseq
      %v4439 = vshrl.u32 %v4438, 7
      %v4440 = vsub.s32 0, %v4439
      %v4441 = vrot.slane %v4357, %v4440
      %v4442 = vmul.f32 %v4361, %v4441
      %v4443 = vmul.f32 %v4366, %v4441
      %v4444 = vmul.f32 %v4371, %v4441
      %v4445 = vmul.f32 %v4376, %v4441
      %v4446 = vmul.f32 %v4381, %v4441
      %v4447 = vmul.f32 %v4386, %v4441
      %v4448 = vmul.f32 %v4391, %v4441
      %v4449 = vmul.f32 %v4396, %v4441
      %v4450 = vmul.f32 %v4401, %v4441
      %v4451 = vmul.f32 %v4406, %v4441
      %v4452 = vmul.f32 %v4411, %v4441
      %v4453 = vmul.f32 %v4416, %v4441
      %v4454 = vmul.f32 %v4421, %v4441
      %v4455 = vmul.f32 %v4426, %v4441
      %v4456 = vmul.f32 %v4431, %v4441
      %v4457 = vmul.f32 %v4436, %v4441
      %v4458 = vlaneseq
      %v4459 = vshrl.u32 %v4458, 7
      %v4460 = vsub.s32 3, %v4459
      %v4461 = vrot.slane %v368, %v4460
      %v4462 = vadd.f32 %v4461, %v4442
      %v4463 = vadd.f32 %v4461, %v4443
      %v4464 = vadd.f32 %v4461, %v4444
      %v4465 = vadd.f32 %v4461, %v4445
      %v4466 = vadd.f32 %v4461, %v4446
      %v4467 = vadd.f32 %v4461, %v4447
      %v4468 = vadd.f32 %v4461, %v4448
      %v4469 = vadd.f32 %v4461, %v4449
      %v4470 = vadd.f32 %v4461, %v4450
      %v4471 = vadd.f32 %v4461, %v4451
      %v4472 = vadd.f32 %v4461, %v4452
      %v4473 = vadd.f32 %v4461, %v4453
      %v4474 = vadd.f32 %v4461, %v4454
      %v4475 = vadd.f32 %v4461, %v4455
      %v4476 = vadd.f32 %v4461, %v4456
      %v4477 = vadd.f32 %v4461, %v4457
      %4478 = vset.pattern.permute.xlu0 1
      %4479 = vperm.xlu0 %4478, %v4340
      %v4480 = vpop.permute.xlu0 %4479
      %4482 = vset.pattern.permute.xlu0 1
      %4483 = vperm.xlu0 %4482, %v4341
      %v4484 = vpop.permute.xlu0 %4483
      %4486 = vset.pattern.permute.xlu0 1
      %4487 = vperm.xlu0 %4486, %v4342
      %v4488 = vpop.permute.xlu0 %4487
      %4490 = vset.pattern.permute.xlu0 1
      %4491 = vperm.xlu0 %4490, %v4343
      %v4492 = vpop.permute.xlu0 %4491
      %4494 = vset.pattern.permute.xlu0 1
      %4495 = vperm.xlu0 %4494, %v4344
      %v4496 = vpop.permute.xlu0 %4495
      %4498 = vset.pattern.permute.xlu0 1
      %4499 = vperm.xlu0 %4498, %v4345
      %v4500 = vpop.permute.xlu0 %4499
      %4502 = vset.pattern.permute.xlu0 1
      %4503 = vperm.xlu0 %4502, %v4346
      %v4504 = vpop.permute.xlu0 %4503
      %4506 = vset.pattern.permute.xlu0 1
      %4507 = vperm.xlu0 %4506, %v4347
      %v4508 = vpop.permute.xlu0 %4507
      %4510 = vset.pattern.permute.xlu0 1
      %4511 = vperm.xlu0 %4510, %v4348
      %v4512 = vpop.permute.xlu0 %4511
      %4514 = vset.pattern.permute.xlu0 1
      %4515 = vperm.xlu0 %4514, %v4349
      %v4516 = vpop.permute.xlu0 %4515
      %4518 = vset.pattern.permute.xlu0 1
      %4519 = vperm.xlu0 %4518, %v4350
      %v4520 = vpop.permute.xlu0 %4519
      %4522 = vset.pattern.permute.xlu0 1
      %4523 = vperm.xlu0 %4522, %v4351
      %v4524 = vpop.permute.xlu0 %4523
      %4526 = vset.pattern.permute.xlu0 1
      %4527 = vperm.xlu0 %4526, %v4352
      %v4528 = vpop.permute.xlu0 %4527
      %4530 = vset.pattern.permute.xlu0 1
      %4531 = vperm.xlu0 %4530, %v4353
      %v4532 = vpop.permute.xlu0 %4531
      %4534 = vset.pattern.permute.xlu0 1
      %4535 = vperm.xlu0 %4534, %v4354
      %v4536 = vpop.permute.xlu0 %4535
      %4538 = vset.pattern.permute.xlu0 1
      %4539 = vperm.xlu0 %4538, %v4355
      %v4540 = vpop.permute.xlu0 %4539
      %v4542 = vlaneseq
      %v4543 = vshrl.u32 %v4542, 7
      %v4544 = vsub.s32 1, %v4543
      %v4545 = vrot.slane %v4357, %v4544
      %v4546 = vmul.f32 %v4480, %v4545
      %v4547 = vmul.f32 %v4484, %v4545
      %v4548 = vmul.f32 %v4488, %v4545
      %v4549 = vmul.f32 %v4492, %v4545
      %v4550 = vmul.f32 %v4496, %v4545
      %v4551 = vmul.f32 %v4500, %v4545
      %v4552 = vmul.f32 %v4504, %v4545
      %v4553 = vmul.f32 %v4508, %v4545
      %v4554 = vmul.f32 %v4512, %v4545
      %v4555 = vmul.f32 %v4516, %v4545
      %v4556 = vmul.f32 %v4520, %v4545
      %v4557 = vmul.f32 %v4524, %v4545
      %v4558 = vmul.f32 %v4528, %v4545
      %v4559 = vmul.f32 %v4532, %v4545
      %v4560 = vmul.f32 %v4536, %v4545
      %v4561 = vmul.f32 %v4540, %v4545
      %v4562 = vadd.f32 %v4462, %v4546
      %v4563 = vadd.f32 %v4463, %v4547
      %v4564 = vadd.f32 %v4464, %v4548
      %v4565 = vadd.f32 %v4465, %v4549
      %v4566 = vadd.f32 %v4466, %v4550
      %v4567 = vadd.f32 %v4467, %v4551
      %v4568 = vadd.f32 %v4468, %v4552
      %v4569 = vadd.f32 %v4469, %v4553
      %v4570 = vadd.f32 %v4470, %v4554
      %v4571 = vadd.f32 %v4471, %v4555
      %v4572 = vadd.f32 %v4472, %v4556
      %v4573 = vadd.f32 %v4473, %v4557
      %v4574 = vadd.f32 %v4474, %v4558
      %v4575 = vadd.f32 %v4475, %v4559
      %v4576 = vadd.f32 %v4476, %v4560
      %v4577 = vadd.f32 %v4477, %v4561
      %4578 = vset.pattern.permute.xlu0 2
      %4579 = vperm.xlu0 %4578, %v4340
      %v4580 = vpop.permute.xlu0 %4579
      %4582 = vset.pattern.permute.xlu0 2
      %4583 = vperm.xlu0 %4582, %v4341
      %v4584 = vpop.permute.xlu0 %4583
      %4586 = vset.pattern.permute.xlu0 2
      %4587 = vperm.xlu0 %4586, %v4342
      %v4588 = vpop.permute.xlu0 %4587
      %4590 = vset.pattern.permute.xlu0 2
      %4591 = vperm.xlu0 %4590, %v4343
      %v4592 = vpop.permute.xlu0 %4591
      %4594 = vset.pattern.permute.xlu0 2
      %4595 = vperm.xlu0 %4594, %v4344
      %v4596 = vpop.permute.xlu0 %4595
      %4598 = vset.pattern.permute.xlu0 2
      %4599 = vperm.xlu0 %4598, %v4345
      %v4600 = vpop.permute.xlu0 %4599
      %4602 = vset.pattern.permute.xlu0 2
      %4603 = vperm.xlu0 %4602, %v4346
      %v4604 = vpop.permute.xlu0 %4603
      %4606 = vset.pattern.permute.xlu0 2
      %4607 = vperm.xlu0 %4606, %v4347
      %v4608 = vpop.permute.xlu0 %4607
      %4610 = vset.pattern.permute.xlu0 2
      %4611 = vperm.xlu0 %4610, %v4348
      %v4612 = vpop.permute.xlu0 %4611
      %4614 = vset.pattern.permute.xlu0 2
      %4615 = vperm.xlu0 %4614, %v4349
      %v4616 = vpop.permute.xlu0 %4615
      %4618 = vset.pattern.permute.xlu0 2
      %4619 = vperm.xlu0 %4618, %v4350
      %v4620 = vpop.permute.xlu0 %4619
      %4622 = vset.pattern.permute.xlu0 2
      %4623 = vperm.xlu0 %4622, %v4351
      %v4624 = vpop.permute.xlu0 %4623
      %4626 = vset.pattern.permute.xlu0 2
      %4627 = vperm.xlu0 %4626, %v4352
      %v4628 = vpop.permute.xlu0 %4627
      %4630 = vset.pattern.permute.xlu0 2
      %4631 = vperm.xlu0 %4630, %v4353
      %v4632 = vpop.permute.xlu0 %4631
      %4634 = vset.pattern.permute.xlu0 2
      %4635 = vperm.xlu0 %4634, %v4354
      %v4636 = vpop.permute.xlu0 %4635
      %4638 = vset.pattern.permute.xlu0 2
      %4639 = vperm.xlu0 %4638, %v4355
      %v4640 = vpop.permute.xlu0 %4639
      %v4642 = vlaneseq
      %v4643 = vshrl.u32 %v4642, 7
      %v4644 = vsub.s32 2, %v4643
      %v4645 = vrot.slane %v4357, %v4644
      %v4646 = vmul.f32 %v4580, %v4645
      %v4647 = vmul.f32 %v4584, %v4645
      %v4648 = vmul.f32 %v4588, %v4645
      %v4649 = vmul.f32 %v4592, %v4645
      %v4650 = vmul.f32 %v4596, %v4645
      %v4651 = vmul.f32 %v4600, %v4645
      %v4652 = vmul.f32 %v4604, %v4645
      %v4653 = vmul.f32 %v4608, %v4645
      %v4654 = vmul.f32 %v4612, %v4645
      %v4655 = vmul.f32 %v4616, %v4645
      %v4656 = vmul.f32 %v4620, %v4645
      %v4657 = vmul.f32 %v4624, %v4645
      %v4658 = vmul.f32 %v4628, %v4645
      %v4659 = vmul.f32 %v4632, %v4645
      %v4660 = vmul.f32 %v4636, %v4645
      %v4661 = vmul.f32 %v4640, %v4645
      %v4662 = vadd.f32 %v4562, %v4646
      %v4663 = vadd.f32 %v4563, %v4647
      %v4664 = vadd.f32 %v4564, %v4648
      %v4665 = vadd.f32 %v4565, %v4649
      %v4666 = vadd.f32 %v4566, %v4650
      %v4667 = vadd.f32 %v4567, %v4651
      %v4668 = vadd.f32 %v4568, %v4652
      %v4669 = vadd.f32 %v4569, %v4653
      %v4670 = vadd.f32 %v4570, %v4654
      %v4671 = vadd.f32 %v4571, %v4655
      %v4672 = vadd.f32 %v4572, %v4656
      %v4673 = vadd.f32 %v4573, %v4657
      %v4674 = vadd.f32 %v4574, %v4658
      %v4675 = vadd.f32 %v4575, %v4659
      %v4676 = vadd.f32 %v4576, %v4660
      %v4677 = vadd.f32 %v4577, %v4661
      %4678 = vset.pattern.permute.xlu0 3
      %4679 = vperm.xlu0 %4678, %v4340
      %v4680 = vpop.permute.xlu0 %4679
      %4682 = vset.pattern.permute.xlu0 3
      %4683 = vperm.xlu0 %4682, %v4341
      %v4684 = vpop.permute.xlu0 %4683
      %4686 = vset.pattern.permute.xlu0 3
      %4687 = vperm.xlu0 %4686, %v4342
      %v4688 = vpop.permute.xlu0 %4687
      %4690 = vset.pattern.permute.xlu0 3
      %4691 = vperm.xlu0 %4690, %v4343
      %v4692 = vpop.permute.xlu0 %4691
      %4694 = vset.pattern.permute.xlu0 3
      %4695 = vperm.xlu0 %4694, %v4344
      %v4696 = vpop.permute.xlu0 %4695
      %4698 = vset.pattern.permute.xlu0 3
      %4699 = vperm.xlu0 %4698, %v4345
      %v4700 = vpop.permute.xlu0 %4699
      %4702 = vset.pattern.permute.xlu0 3
      %4703 = vperm.xlu0 %4702, %v4346
      %v4704 = vpop.permute.xlu0 %4703
      %4706 = vset.pattern.permute.xlu0 3
      %4707 = vperm.xlu0 %4706, %v4347
      %v4708 = vpop.permute.xlu0 %4707
      %4710 = vset.pattern.permute.xlu0 3
      %4711 = vperm.xlu0 %4710, %v4348
      %v4712 = vpop.permute.xlu0 %4711
      %4714 = vset.pattern.permute.xlu0 3
      %4715 = vperm.xlu0 %4714, %v4349
      %v4716 = vpop.permute.xlu0 %4715
      %4718 = vset.pattern.permute.xlu0 3
      %4719 = vperm.xlu0 %4718, %v4350
      %v4720 = vpop.permute.xlu0 %4719
      %4722 = vset.pattern.permute.xlu0 3
      %4723 = vperm.xlu0 %4722, %v4351
      %v4724 = vpop.permute.xlu0 %4723
      %4726 = vset.pattern.permute.xlu0 3
      %4727 = vperm.xlu0 %4726, %v4352
      %v4728 = vpop.permute.xlu0 %4727
      %4730 = vset.pattern.permute.xlu0 3
      %4731 = vperm.xlu0 %4730, %v4353
      %v4732 = vpop.permute.xlu0 %4731
      %4734 = vset.pattern.permute.xlu0 3
      %4735 = vperm.xlu0 %4734, %v4354
      %v4736 = vpop.permute.xlu0 %4735
      %4738 = vset.pattern.permute.xlu0 3
      %4739 = vperm.xlu0 %4738, %v4355
      %v4740 = vpop.permute.xlu0 %4739
      %v4742 = vlaneseq
      %v4743 = vshrl.u32 %v4742, 7
      %v4744 = vsub.s32 3, %v4743
      %v4745 = vrot.slane %v4357, %v4744
      %v4746 = vmul.f32 %v4680, %v4745
      %v4747 = vmul.f32 %v4684, %v4745
      %v4748 = vmul.f32 %v4688, %v4745
      %v4749 = vmul.f32 %v4692, %v4745
      %v4750 = vmul.f32 %v4696, %v4745
      %v4751 = vmul.f32 %v4700, %v4745
      %v4752 = vmul.f32 %v4704, %v4745
      %v4753 = vmul.f32 %v4708, %v4745
      %v4754 = vmul.f32 %v4712, %v4745
      %v4755 = vmul.f32 %v4716, %v4745
      %v4756 = vmul.f32 %v4720, %v4745
      %v4757 = vmul.f32 %v4724, %v4745
      %v4758 = vmul.f32 %v4728, %v4745
      %v4759 = vmul.f32 %v4732, %v4745
      %v4760 = vmul.f32 %v4736, %v4745
      %v4761 = vmul.f32 %v4740, %v4745
      %v4762 = vadd.f32 %v4662, %v4746
      %v4763 = vadd.f32 %v4663, %v4747
      %v4764 = vadd.f32 %v4664, %v4748
      %v4765 = vadd.f32 %v4665, %v4749
      %v4766 = vadd.f32 %v4666, %v4750
      %v4767 = vadd.f32 %v4667, %v4751
      %v4768 = vadd.f32 %v4668, %v4752
      %v4769 = vadd.f32 %v4669, %v4753
      %v4770 = vadd.f32 %v4670, %v4754
      %v4771 = vadd.f32 %v4671, %v4755
      %v4772 = vadd.f32 %v4672, %v4756
      %v4773 = vadd.f32 %v4673, %v4757
      %v4774 = vadd.f32 %v4674, %v4758
      %v4775 = vadd.f32 %v4675, %v4759
      %v4776 = vadd.f32 %v4676, %v4760
      %v4777 = vadd.f32 %v4677, %v4761
      %v4778 = vtanh.pop %v4762
      %v4779 = vtanh.pop %v4763
      %v4780 = vtanh.pop %v4764
      %v4781 = vtanh.pop %v4765
      %v4782 = vtanh.pop %v4766
      %v4783 = vtanh.pop %v4767
      %v4784 = vtanh.pop %v4768
      %v4785 = vtanh.pop %v4769
      %v4786 = vtanh.pop %v4770
      %v4787 = vtanh.pop %v4771
      %v4788 = vtanh.pop %v4772
      %v4789 = vtanh.pop %v4773
      %v4790 = vtanh.pop %v4774
      %v4791 = vtanh.pop %v4775
      %v4792 = vtanh.pop %v4776
      %v4793 = vtanh.pop %v4777
      %s4794 = scalar_lea.vmem %s4, 192
      %v4795 = vld [vmem:[%s4794] sm:$0xff]
      %v4796 = vld [vmem:[%s4794 + $0x8] sm:$0xff]
      %v4797 = vld [vmem:[%s4794 + $0x10] sm:$0xff]
      %v4798 = vld [vmem:[%s4794 + $0x18] sm:$0xff]
      %v4799 = vld [vmem:[%s4794 + $0x20] sm:$0xff]
      %v4800 = vld [vmem:[%s4794 + $0x28] sm:$0xff]
      %v4801 = vld [vmem:[%s4794 + $0x30] sm:$0xff]
      %v4802 = vld [vmem:[%s4794 + $0x38] sm:$0xff]
      %v4803 = vlaneseq
      %v4804 = vshrl.u32 %v4803, 7
      %v4805 = vsub.s32 3, %v4804
      %v4806 = vrot.slane %v369, %v4805
      %v4808 = vsel %vm1129, %v4778, 0
      %v4811 = vsel %vm1129, %v4779, 0
      %v4814 = vsel %vm1129, %v4780, 0
      %v4817 = vsel %vm1129, %v4781, 0
      %v4820 = vsel %vm1129, %v4782, 0
      %v4823 = vsel %vm1129, %v4783, 0
      %v4826 = vsel %vm1129, %v4784, 0
      %v4829 = vsel %vm1129, %v4785, 0
      %v4832 = vsel %vm1129, %v4786, 0
      %v4835 = vsel %vm1129, %v4787, 0
      %v4838 = vsel %vm1129, %v4788, 0
      %v4841 = vsel %vm1129, %v4789, 0
      %v4844 = vsel %vm1129, %v4790, 0
      %v4847 = vsel %vm1129, %v4791, 0
      %v4850 = vsel %vm1129, %v4792, 0
      %v4853 = vsel %vm1129, %v4793, 0
      %4855 = vmatprep.subr.mxu0 0.0
      %4856 = vmatpush1.msra.mxu0 %v4795
      %4857 = vmatprep.subr.mxu0 0.0
      %4858 = vmatpush1.msra.mxu0 %v4796
      %4859 = vmatprep.subr.mxu0 0.0
      %4860 = vmatpush1.msra.mxu0 %v4797
      %4861 = vmatprep.subr.mxu0 0.0
      %4862 = vmatpush1.msra.mxu0 %v4798
      %4863 = vmatprep.subr.mxu0 0.0
      %4864 = vmatpush1.msra.mxu0 %v4799
      %4865 = vmatprep.subr.mxu0 0.0
      %4866 = vmatpush1.msra.mxu0 %v4800
      %4867 = vmatprep.subr.mxu0 0.0
      %4868 = vmatpush1.msra.mxu0 %v4801
      %4869 = vmatprep.subr.mxu0 0.0
      %4870 = vmatpush1.msra.mxu0 %v4802
      %4871 = vmatprep.subr.mxu0 0.0
      %4872 = vmatpush1.msra.mxu0 0.0
      %4873 = vmatprep.subr.mxu0 0.0
      %4874 = vmatpush1.msra.mxu0 0.0
      %4875 = vmatprep.subr.mxu0 0.0
      %4876 = vmatpush1.msra.mxu0 0.0
      %4877 = vmatprep.subr.mxu0 0.0
      %4878 = vmatpush1.msra.mxu0 0.0
      %4879 = vmatprep.subr.mxu0 0.0
      %4880 = vmatpush1.msra.mxu0 0.0
      %4881 = vmatprep.subr.mxu0 0.0
      %4882 = vmatpush1.msra.mxu0 0.0
      %4883 = vmatprep.subr.mxu0 0.0
      %4884 = vmatpush1.msra.mxu0 0.0
      %4885 = vmatprep.subr.mxu0 0.0
      %4886 = vmatpush1.msra.mxu0 0.0
      %4887 = vmatprep.subr.mxu0 0.0
      %4888 = vmatpush1.msra.mxu0 0.0
      %4889 = vmatprep.subr.mxu0 0.0
      %4890 = vmatpush1.msra.mxu0 0.0
      %4891 = vmatprep.subr.mxu0 0.0
      %4892 = vmatpush1.msra.mxu0 0.0
      %4893 = vmatprep.subr.mxu0 0.0
      %4894 = vmatpush1.msra.mxu0 0.0
      %4895 = vmatprep.subr.mxu0 0.0
      %4896 = vmatpush1.msra.mxu0 0.0
      %4897 = vmatprep.subr.mxu0 0.0
      %4898 = vmatpush1.msra.mxu0 0.0
      %4899 = vmatprep.subr.mxu0 0.0
      %4900 = vmatpush1.msra.mxu0 0.0
      %4901 = vmatprep.subr.mxu0 0.0
      %4902 = vmatpush1.msra.mxu0 0.0
      %4903 = vmatprep.subr.mxu0 0.0
      %4904 = vmatpush1.msra.mxu0 0.0
      %4905 = vmatprep.subr.mxu0 0.0
      %4906 = vmatpush1.msra.mxu0 0.0
      %4907 = vmatprep.subr.mxu0 0.0
      %4908 = vmatpush1.msra.mxu0 0.0
      %4909 = vmatprep.subr.mxu0 0.0
      %4910 = vmatpush1.msra.mxu0 0.0
      %4911 = vmatprep.subr.mxu0 0.0
      %4912 = vmatpush1.msra.mxu0 0.0
      %4913 = vmatprep.subr.mxu0 0.0
      %4914 = vmatpush1.msra.mxu0 0.0
      %4915 = vmatprep.subr.mxu0 0.0
      %4916 = vmatpush1.msra.mxu0 0.0
      %4917 = vmatprep.subr.mxu0 0.0
      %4918 = vmatpush1.msra.mxu0 0.0
      %4919 = vmatprep.mubr.f32.mxu0 0.0
      %4920 = vmatmul.mubr.f32.gmra.mrb[0].mxu0 %v4808
      %v4921 = vpop.f32.mrb[0].mxu0
      %v4922 = vadd.f32 %v4806, %v4921
      %v4923 = vpop.f32.mrb[0].mxu0
      %4924 = vmatprep.mubr.f32.mxu0 0.0
      %4925 = vmatmul.mubr.f32.gmra.mrb[0].mxu0 %v4811
      %v4926 = vpop.f32.mrb[0].mxu0
      %v4927 = vadd.f32 %v4806, %v4926
      %v4928 = vpop.f32.mrb[0].mxu0
      %4929 = vmatprep.mubr.f32.mxu0 0.0
      %4930 = vmatmul.mubr.f32.gmra.mrb[0].mxu0 %v4814
      %v4931 = vpop.f32.mrb[0].mxu0
      %v4932 = vadd.f32 %v4806, %v4931
      %v4933 = vpop.f32.mrb[0].mxu0
      %4934 = vmatprep.mubr.f32.mxu0 0.0
      %4935 = vmatmul.mubr.f32.gmra.mrb[0].mxu0 %v4817
      %v4936 = vpop.f32.mrb[0].mxu0
      %v4937 = vadd.f32 %v4806, %v4936
      %v4938 = vpop.f32.mrb[0].mxu0
      %4939 = vmatprep.mubr.f32.mxu0 0.0
      %4940 = vmatmul.mubr.f32.gmra.mrb[0].mxu0 %v4820
      %v4941 = vpop.f32.mrb[0].mxu0
      %v4942 = vadd.f32 %v4806, %v4941
      %v4943 = vpop.f32.mrb[0].mxu0
      %4944 = vmatprep.mubr.f32.mxu0 0.0
      %4945 = vmatmul.mubr.f32.gmra.mrb[0].mxu0 %v4823
      %v4946 = vpop.f32.mrb[0].mxu0
      %v4947 = vadd.f32 %v4806, %v4946
      %v4948 = vpop.f32.mrb[0].mxu0
      %4949 = vmatprep.mubr.f32.mxu0 0.0
      %4950 = vmatmul.mubr.f32.gmra.mrb[0].mxu0 %v4826
      %v4951 = vpop.f32.mrb[0].mxu0
      %v4952 = vadd.f32 %v4806, %v4951
      %v4953 = vpop.f32.mrb[0].mxu0
      %4954 = vmatprep.mubr.f32.mxu0 0.0
      %4955 = vmatmul.mubr.f32.gmra.mrb[0].mxu0 %v4829
      %v4956 = vpop.f32.mrb[0].mxu0
      %v4957 = vadd.f32 %v4806, %v4956
      %v4958 = vpop.f32.mrb[0].mxu0
      %4959 = vmatprep.mubr.f32.mxu0 0.0
      %4960 = vmatmul.mubr.f32.gmra.mrb[0].mxu0 %v4832
      %v4961 = vpop.f32.mrb[0].mxu0
      %v4962 = vadd.f32 %v4806, %v4961
      %v4963 = vpop.f32.mrb[0].mxu0
      %4964 = vmatprep.mubr.f32.mxu0 0.0
      %4965 = vmatmul.mubr.f32.gmra.mrb[0].mxu0 %v4835
      %v4966 = vpop.f32.mrb[0].mxu0
      %v4967 = vadd.f32 %v4806, %v4966
      %v4968 = vpop.f32.mrb[0].mxu0
      %4969 = vmatprep.mubr.f32.mxu0 0.0
      %4970 = vmatmul.mubr.f32.gmra.mrb[0].mxu0 %v4838
      %v4971 = vpop.f32.mrb[0].mxu0
      %v4972 = vadd.f32 %v4806, %v4971
      %v4973 = vpop.f32.mrb[0].mxu0
      %4974 = vmatprep.mubr.f32.mxu0 0.0
      %4975 = vmatmul.mubr.f32.gmra.mrb[0].mxu0 %v4841
      %v4976 = vpop.f32.mrb[0].mxu0
      %v4977 = vadd.f32 %v4806, %v4976
      %v4978 = vpop.f32.mrb[0].mxu0
      %4979 = vmatprep.mubr.f32.mxu0 0.0
      %4980 = vmatmul.mubr.f32.gmra.mrb[0].mxu0 %v4844
      %v4981 = vpop.f32.mrb[0].mxu0
      %v4982 = vadd.f32 %v4806, %v4981
      %v4983 = vpop.f32.mrb[0].mxu0
      %4984 = vmatprep.mubr.f32.mxu0 0.0
      %4985 = vmatmul.mubr.f32.gmra.mrb[0].mxu0 %v4847
      %v4986 = vpop.f32.mrb[0].mxu0
      %v4987 = vadd.f32 %v4806, %v4986
      %v4988 = vpop.f32.mrb[0].mxu0
      %4989 = vmatprep.mubr.f32.mxu0 0.0
      %4990 = vmatmul.mubr.f32.gmra.mrb[0].mxu0 %v4850
      %v4991 = vpop.f32.mrb[0].mxu0
      %v4992 = vadd.f32 %v4806, %v4991
      %v4993 = vpop.f32.mrb[0].mxu0
      %4994 = vmatprep.mubr.f32.mxu0 0.0
      %4995 = vmatmul.mubr.f32.gmra.mrb[0].mxu0 %v4853
      %v4996 = vpop.f32.mrb[0].mxu0
      %v4997 = vadd.f32 %v4806, %v4996
      %v4998 = vpop.f32.mrb[0].mxu0
      %4999 = vdwg.mxu0
      %v5000 = vtanh.pop %v4922
      %v5001 = vtanh.pop %v4927
      %v5002 = vtanh.pop %v4932
      %v5003 = vtanh.pop %v4937
      %v5004 = vtanh.pop %v4942
      %v5005 = vtanh.pop %v4947
      %v5006 = vtanh.pop %v4952
      %v5007 = vtanh.pop %v4957
      %v5008 = vtanh.pop %v4962
      %v5009 = vtanh.pop %v4967
      %v5010 = vtanh.pop %v4972
      %v5011 = vtanh.pop %v4977
      %v5012 = vtanh.pop %v4982
      %v5013 = vtanh.pop %v4987
      %v5014 = vtanh.pop %v4992
      %v5015 = vtanh.pop %v4997
      %s5016 = scalar_lea.vmem %s6, 192
      %v5017 = vld [vmem:[%s5016] sm:$0xff]
      %v5018 = vld [vmem:[%s5016 + $0x8] sm:$0xff]
      %v5019 = vld [vmem:[%s5016 + $0x10] sm:$0xff]
      %v5020 = vld [vmem:[%s5016 + $0x18] sm:$0xff]
      %v5021 = vld [vmem:[%s5016 + $0x20] sm:$0xff]
      %v5022 = vld [vmem:[%s5016 + $0x28] sm:$0xff]
      %v5023 = vld [vmem:[%s5016 + $0x30] sm:$0xff]
      %v5024 = vld [vmem:[%s5016 + $0x38] sm:$0xff]
      %v5025 = vlaneseq
      %v5026 = vshrl.u32 %v5025, 7
      %v5027 = vsub.s32 3, %v5026
      %v5028 = vrot.slane %v370, %v5027
      %v5030 = vsel %vm1129, %v5000, 0
      %v5033 = vsel %vm1129, %v5001, 0
      %v5036 = vsel %vm1129, %v5002, 0
      %v5039 = vsel %vm1129, %v5003, 0
      %v5042 = vsel %vm1129, %v5004, 0
      %v5045 = vsel %vm1129, %v5005, 0
      %v5048 = vsel %vm1129, %v5006, 0
      %v5051 = vsel %vm1129, %v5007, 0
      %v5054 = vsel %vm1129, %v5008, 0
      %v5057 = vsel %vm1129, %v5009, 0
      %v5060 = vsel %vm1129, %v5010, 0
      %v5063 = vsel %vm1129, %v5011, 0
      %v5066 = vsel %vm1129, %v5012, 0
      %v5069 = vsel %vm1129, %v5013, 0
      %v5072 = vsel %vm1129, %v5014, 0
      %v5075 = vsel %vm1129, %v5015, 0
      %5077 = vmatprep.subr.mxu0 0.0
      %5078 = vmatpush1.msra.mxu0 %v5017
      %5079 = vmatprep.subr.mxu0 0.0
      %5080 = vmatpush1.msra.mxu0 %v5018
      %5081 = vmatprep.subr.mxu0 0.0
      %5082 = vmatpush1.msra.mxu0 %v5019
      %5083 = vmatprep.subr.mxu0 0.0
      %5084 = vmatpush1.msra.mxu0 %v5020
      %5085 = vmatprep.subr.mxu0 0.0
      %5086 = vmatpush1.msra.mxu0 %v5021
      %5087 = vmatprep.subr.mxu0 0.0
      %5088 = vmatpush1.msra.mxu0 %v5022
      %5089 = vmatprep.subr.mxu0 0.0
      %5090 = vmatpush1.msra.mxu0 %v5023
      %5091 = vmatprep.subr.mxu0 0.0
      %5092 = vmatpush1.msra.mxu0 %v5024
      %5093 = vmatprep.subr.mxu0 0.0
      %5094 = vmatpush1.msra.mxu0 0.0
      %5095 = vmatprep.subr.mxu0 0.0
      %5096 = vmatpush1.msra.mxu0 0.0
      %5097 = vmatprep.subr.mxu0 0.0
      %5098 = vmatpush1.msra.mxu0 0.0
      %5099 = vmatprep.subr.mxu0 0.0
      %5100 = vmatpush1.msra.mxu0 0.0
      %5101 = vmatprep.subr.mxu0 0.0
      %5102 = vmatpush1.msra.mxu0 0.0
      %5103 = vmatprep.subr.mxu0 0.0
      %5104 = vmatpush1.msra.mxu0 0.0
      %5105 = vmatprep.subr.mxu0 0.0
      %5106 = vmatpush1.msra.mxu0 0.0
      %5107 = vmatprep.subr.mxu0 0.0
      %5108 = vmatpush1.msra.mxu0 0.0
      %5109 = vmatprep.subr.mxu0 0.0
      %5110 = vmatpush1.msra.mxu0 0.0
      %5111 = vmatprep.subr.mxu0 0.0
      %5112 = vmatpush1.msra.mxu0 0.0
      %5113 = vmatprep.subr.mxu0 0.0
      %5114 = vmatpush1.msra.mxu0 0.0
      %5115 = vmatprep.subr.mxu0 0.0
      %5116 = vmatpush1.msra.mxu0 0.0
      %5117 = vmatprep.subr.mxu0 0.0
      %5118 = vmatpush1.msra.mxu0 0.0
      %5119 = vmatprep.subr.mxu0 0.0
      %5120 = vmatpush1.msra.mxu0 0.0
      %5121 = vmatprep.subr.mxu0 0.0
      %5122 = vmatpush1.msra.mxu0 0.0
      %5123 = vmatprep.subr.mxu0 0.0
      %5124 = vmatpush1.msra.mxu0 0.0
      %5125 = vmatprep.subr.mxu0 0.0
      %5126 = vmatpush1.msra.mxu0 0.0
      %5127 = vmatprep.subr.mxu0 0.0
      %5128 = vmatpush1.msra.mxu0 0.0
      %5129 = vmatprep.subr.mxu0 0.0
      %5130 = vmatpush1.msra.mxu0 0.0
      %5131 = vmatprep.subr.mxu0 0.0
      %5132 = vmatpush1.msra.mxu0 0.0
      %5133 = vmatprep.subr.mxu0 0.0
      %5134 = vmatpush1.msra.mxu0 0.0
      %5135 = vmatprep.subr.mxu0 0.0
      %5136 = vmatpush1.msra.mxu0 0.0
      %5137 = vmatprep.subr.mxu0 0.0
      %5138 = vmatpush1.msra.mxu0 0.0
      %5139 = vmatprep.subr.mxu0 0.0
      %5140 = vmatpush1.msra.mxu0 0.0
      %5141 = vmatprep.mubr.f32.mxu0 0.0
      %5142 = vmatmul.mubr.f32.gmra.mrb[0].mxu0 %v5030
      %v5143 = vpop.f32.mrb[0].mxu0
      %v5144 = vadd.f32 %v5028, %v5143
      %v5145 = vpop.f32.mrb[0].mxu0
      %5146 = vmatprep.mubr.f32.mxu0 0.0
      %5147 = vmatmul.mubr.f32.gmra.mrb[0].mxu0 %v5033
      %v5148 = vpop.f32.mrb[0].mxu0
      %v5149 = vadd.f32 %v5028, %v5148
      %v5150 = vpop.f32.mrb[0].mxu0
      %5151 = vmatprep.mubr.f32.mxu0 0.0
      %5152 = vmatmul.mubr.f32.gmra.mrb[0].mxu0 %v5036
      %v5153 = vpop.f32.mrb[0].mxu0
      %v5154 = vadd.f32 %v5028, %v5153
      %v5155 = vpop.f32.mrb[0].mxu0
      %5156 = vmatprep.mubr.f32.mxu0 0.0
      %5157 = vmatmul.mubr.f32.gmra.mrb[0].mxu0 %v5039
      %v5158 = vpop.f32.mrb[0].mxu0
      %v5159 = vadd.f32 %v5028, %v5158
      %v5160 = vpop.f32.mrb[0].mxu0
      %5161 = vmatprep.mubr.f32.mxu0 0.0
      %5162 = vmatmul.mubr.f32.gmra.mrb[0].mxu0 %v5042
      %v5163 = vpop.f32.mrb[0].mxu0
      %v5164 = vadd.f32 %v5028, %v5163
      %v5165 = vpop.f32.mrb[0].mxu0
      %5166 = vmatprep.mubr.f32.mxu0 0.0
      %5167 = vmatmul.mubr.f32.gmra.mrb[0].mxu0 %v5045
      %v5168 = vpop.f32.mrb[0].mxu0
      %v5169 = vadd.f32 %v5028, %v5168
      %v5170 = vpop.f32.mrb[0].mxu0
      %5171 = vmatprep.mubr.f32.mxu0 0.0
      %5172 = vmatmul.mubr.f32.gmra.mrb[0].mxu0 %v5048
      %v5173 = vpop.f32.mrb[0].mxu0
      %v5174 = vadd.f32 %v5028, %v5173
      %v5175 = vpop.f32.mrb[0].mxu0
      %5176 = vmatprep.mubr.f32.mxu0 0.0
      %5177 = vmatmul.mubr.f32.gmra.mrb[0].mxu0 %v5051
      %v5178 = vpop.f32.mrb[0].mxu0
      %v5179 = vadd.f32 %v5028, %v5178
      %v5180 = vpop.f32.mrb[0].mxu0
      %5181 = vmatprep.mubr.f32.mxu0 0.0
      %5182 = vmatmul.mubr.f32.gmra.mrb[0].mxu0 %v5054
      %v5183 = vpop.f32.mrb[0].mxu0
      %v5184 = vadd.f32 %v5028, %v5183
      %v5185 = vpop.f32.mrb[0].mxu0
      %5186 = vmatprep.mubr.f32.mxu0 0.0
      %5187 = vmatmul.mubr.f32.gmra.mrb[0].mxu0 %v5057
      %v5188 = vpop.f32.mrb[0].mxu0
      %v5189 = vadd.f32 %v5028, %v5188
      %v5190 = vpop.f32.mrb[0].mxu0
      %5191 = vmatprep.mubr.f32.mxu0 0.0
      %5192 = vmatmul.mubr.f32.gmra.mrb[0].mxu0 %v5060
      %v5193 = vpop.f32.mrb[0].mxu0
      %v5194 = vadd.f32 %v5028, %v5193
      %v5195 = vpop.f32.mrb[0].mxu0
      %5196 = vmatprep.mubr.f32.mxu0 0.0
      %5197 = vmatmul.mubr.f32.gmra.mrb[0].mxu0 %v5063
      %v5198 = vpop.f32.mrb[0].mxu0
      %v5199 = vadd.f32 %v5028, %v5198
      %v5200 = vpop.f32.mrb[0].mxu0
      %5201 = vmatprep.mubr.f32.mxu0 0.0
      %5202 = vmatmul.mubr.f32.gmra.mrb[0].mxu0 %v5066
      %v5203 = vpop.f32.mrb[0].mxu0
      %v5204 = vadd.f32 %v5028, %v5203
      %v5205 = vpop.f32.mrb[0].mxu0
      %5206 = vmatprep.mubr.f32.mxu0 0.0
      %5207 = vmatmul.mubr.f32.gmra.mrb[0].mxu0 %v5069
      %v5208 = vpop.f32.mrb[0].mxu0
      %v5209 = vadd.f32 %v5028, %v5208
      %v5210 = vpop.f32.mrb[0].mxu0
      %5211 = vmatprep.mubr.f32.mxu0 0.0
      %5212 = vmatmul.mubr.f32.gmra.mrb[0].mxu0 %v5072
      %v5213 = vpop.f32.mrb[0].mxu0
      %v5214 = vadd.f32 %v5028, %v5213
      %v5215 = vpop.f32.mrb[0].mxu0
      %5216 = vmatprep.mubr.f32.mxu0 0.0
      %5217 = vmatmul.mubr.f32.gmra.mrb[0].mxu0 %v5075
      %v5218 = vpop.f32.mrb[0].mxu0
      %v5219 = vadd.f32 %v5028, %v5218
      %v5220 = vpop.f32.mrb[0].mxu0
      %5221 = vdwg.mxu0
      %v5222 = vtanh.pop %v5144
      %v5223 = vtanh.pop %v5149
      %v5224 = vtanh.pop %v5154
      %v5225 = vtanh.pop %v5159
      %v5226 = vtanh.pop %v5164
      %v5227 = vtanh.pop %v5169
      %v5228 = vtanh.pop %v5174
      %v5229 = vtanh.pop %v5179
      %v5230 = vtanh.pop %v5184
      %v5231 = vtanh.pop %v5189
      %v5232 = vtanh.pop %v5194
      %v5233 = vtanh.pop %v5199
      %v5234 = vtanh.pop %v5204
      %v5235 = vtanh.pop %v5209
      %v5236 = vtanh.pop %v5214
      %v5237 = vtanh.pop %v5219
      %v5238 = vsub.f32 %v4176, %v5144
      %v5239 = vsub.f32 %v4177, %v5149
      %v5240 = vsub.f32 %v4178, %v5154
      %v5241 = vsub.f32 %v4179, %v5159
      %v5242 = vsub.f32 %v4180, %v5164
      %v5243 = vsub.f32 %v4181, %v5169
      %v5244 = vsub.f32 %v4182, %v5174
      %v5245 = vsub.f32 %v4183, %v5179
      %v5246 = vsub.f32 %v4184, %v5184
      %v5247 = vsub.f32 %v4185, %v5189
      %v5248 = vsub.f32 %v4186, %v5194
      %v5249 = vsub.f32 %v4187, %v5199
      %v5250 = vsub.f32 %v4188, %v5204
      %v5251 = vsub.f32 %v4189, %v5209
      %v5252 = vsub.f32 %v4190, %v5214
      %v5253 = vsub.f32 %v4191, %v5219
      %v5254 = vlaneseq
      %v5255 = vshrl.u32 %v5254, 7
      %v5256 = vsub.s32 3, %v5255
      %v5257 = vrot.slane %v367, %v5256
      %v5258 = vmul.f32 %v5257, %v5238
      %v5259 = vmul.f32 %v5257, %v5239
      %v5260 = vmul.f32 %v5257, %v5240
      %v5261 = vmul.f32 %v5257, %v5241
      %v5262 = vmul.f32 %v5257, %v5242
      %v5263 = vmul.f32 %v5257, %v5243
      %v5264 = vmul.f32 %v5257, %v5244
      %v5265 = vmul.f32 %v5257, %v5245
      %v5266 = vmul.f32 %v5257, %v5246
      %v5267 = vmul.f32 %v5257, %v5247
      %v5268 = vmul.f32 %v5257, %v5248
      %v5269 = vmul.f32 %v5257, %v5249
      %v5270 = vmul.f32 %v5257, %v5250
      %v5271 = vmul.f32 %v5257, %v5251
      %v5272 = vmul.f32 %v5257, %v5252
      %v5273 = vmul.f32 %v5257, %v5253
      %v5274 = vsub.f32 0.0, %v5222
      %v5275 = vsub.f32 0.0, %v5223
      %v5276 = vsub.f32 0.0, %v5224
      %v5277 = vsub.f32 0.0, %v5225
      %v5278 = vsub.f32 0.0, %v5226
      %v5279 = vsub.f32 0.0, %v5227
      %v5280 = vsub.f32 0.0, %v5228
      %v5281 = vsub.f32 0.0, %v5229
      %v5282 = vsub.f32 0.0, %v5230
      %v5283 = vsub.f32 0.0, %v5231
      %v5284 = vsub.f32 0.0, %v5232
      %v5285 = vsub.f32 0.0, %v5233
      %v5286 = vsub.f32 0.0, %v5234
      %v5287 = vsub.f32 0.0, %v5235
      %v5288 = vsub.f32 0.0, %v5236
      %v5289 = vsub.f32 0.0, %v5237
      %v5290 = vmul.f32 %v5274, 1.442695
      %v5291 = vpow.pop %v5290
      %v5292 = vmul.f32 %v5275, 1.442695
      %v5293 = vpow.pop %v5292
      %v5294 = vmul.f32 %v5276, 1.442695
      %v5295 = vpow.pop %v5294
      %v5296 = vmul.f32 %v5277, 1.442695
      %v5297 = vpow.pop %v5296
      %v5298 = vmul.f32 %v5278, 1.442695
      %v5299 = vpow.pop %v5298
      %v5300 = vmul.f32 %v5279, 1.442695
      %v5301 = vpow.pop %v5300
      %v5302 = vmul.f32 %v5280, 1.442695
      %v5303 = vpow.pop %v5302
      %v5304 = vmul.f32 %v5281, 1.442695
      %v5305 = vpow.pop %v5304
      %v5306 = vmul.f32 %v5282, 1.442695
      %v5307 = vpow.pop %v5306
      %v5308 = vmul.f32 %v5283, 1.442695
      %v5309 = vpow.pop %v5308
      %v5310 = vmul.f32 %v5284, 1.442695
      %v5311 = vpow.pop %v5310
      %v5312 = vmul.f32 %v5285, 1.442695
      %v5313 = vpow.pop %v5312
      %v5314 = vmul.f32 %v5286, 1.442695
      %v5315 = vpow.pop %v5314
      %v5316 = vmul.f32 %v5287, 1.442695
      %v5317 = vpow.pop %v5316
      %v5318 = vmul.f32 %v5288, 1.442695
      %v5319 = vpow.pop %v5318
      %v5320 = vmul.f32 %v5289, 1.442695
      %v5321 = vpow.pop %v5320
      %5338 = vrot.lane.b32.xlu0 %v5291, 124
      %v5339 = vpop.permute.xlu0 %5338
      %5340 = vrot.lane.b32.xlu0 %v5293, 124
      %v5341 = vpop.permute.xlu0 %5340
      %5342 = vrot.lane.b32.xlu0 %v5295, 124
      %v5343 = vpop.permute.xlu0 %5342
      %5344 = vrot.lane.b32.xlu0 %v5297, 124
      %v5345 = vpop.permute.xlu0 %5344
      %5346 = vrot.lane.b32.xlu0 %v5299, 124
      %v5347 = vpop.permute.xlu0 %5346
      %5348 = vrot.lane.b32.xlu0 %v5301, 124
      %v5349 = vpop.permute.xlu0 %5348
      %5350 = vrot.lane.b32.xlu0 %v5303, 124
      %v5351 = vpop.permute.xlu0 %5350
      %5352 = vrot.lane.b32.xlu0 %v5305, 124
      %v5353 = vpop.permute.xlu0 %5352
      %5354 = vrot.lane.b32.xlu0 %v5307, 124
      %v5355 = vpop.permute.xlu0 %5354
      %5356 = vrot.lane.b32.xlu0 %v5309, 124
      %v5357 = vpop.permute.xlu0 %5356
      %5358 = vrot.lane.b32.xlu0 %v5311, 124
      %v5359 = vpop.permute.xlu0 %5358
      %5360 = vrot.lane.b32.xlu0 %v5313, 124
      %v5361 = vpop.permute.xlu0 %5360
      %5362 = vrot.lane.b32.xlu0 %v5315, 124
      %v5363 = vpop.permute.xlu0 %5362
      %5364 = vrot.lane.b32.xlu0 %v5317, 124
      %v5365 = vpop.permute.xlu0 %5364
      %5366 = vrot.lane.b32.xlu0 %v5319, 124
      %v5367 = vpop.permute.xlu0 %5366
      %5368 = vrot.lane.b32.xlu0 %v5321, 124
      %v5369 = vpop.permute.xlu0 %5368
      %v5386 = vmul.f32 %v5258, %v5339
      %v5387 = vmul.f32 %v5259, %v5341
      %v5388 = vmul.f32 %v5260, %v5343
      %v5389 = vmul.f32 %v5261, %v5345
      %v5390 = vmul.f32 %v5262, %v5347
      %v5391 = vmul.f32 %v5263, %v5349
      %v5392 = vmul.f32 %v5264, %v5351
      %v5393 = vmul.f32 %v5265, %v5353
      %v5394 = vmul.f32 %v5266, %v5355
      %v5395 = vmul.f32 %v5267, %v5357
      %v5396 = vmul.f32 %v5268, %v5359
      %v5397 = vmul.f32 %v5269, %v5361
      %v5398 = vmul.f32 %v5270, %v5363
      %v5399 = vmul.f32 %v5271, %v5365
      %v5400 = vmul.f32 %v5272, %v5367
      %v5401 = vmul.f32 %v5273, %v5369
      %v5402 = vadd.f32 %v4340, %v5386
      %v5403 = vadd.f32 %v4341, %v5387
      %v5404 = vadd.f32 %v4342, %v5388
      %v5405 = vadd.f32 %v4343, %v5389
      %v5406 = vadd.f32 %v4344, %v5390
      %v5407 = vadd.f32 %v4345, %v5391
      %v5408 = vadd.f32 %v4346, %v5392
      %v5409 = vadd.f32 %v4347, %v5393
      %v5410 = vadd.f32 %v4348, %v5394
      %v5411 = vadd.f32 %v4349, %v5395
      %v5412 = vadd.f32 %v4350, %v5396
      %v5413 = vadd.f32 %v4351, %v5397
      %v5414 = vadd.f32 %v4352, %v5398
      %v5415 = vadd.f32 %v4353, %v5399
      %v5416 = vadd.f32 %v4354, %v5400
      %v5417 = vadd.f32 %v4355, %v5401
      %5434 = vrot.lane.b32.xlu0 %v5222, 124
      %v5435 = vpop.permute.xlu0 %5434
      %5436 = vrot.lane.b32.xlu0 %v5223, 124
      %v5437 = vpop.permute.xlu0 %5436
      %5438 = vrot.lane.b32.xlu0 %v5224, 124
      %v5439 = vpop.permute.xlu0 %5438
      %5440 = vrot.lane.b32.xlu0 %v5225, 124
      %v5441 = vpop.permute.xlu0 %5440
      %5442 = vrot.lane.b32.xlu0 %v5226, 124
      %v5443 = vpop.permute.xlu0 %5442
      %5444 = vrot.lane.b32.xlu0 %v5227, 124
      %v5445 = vpop.permute.xlu0 %5444
      %5446 = vrot.lane.b32.xlu0 %v5228, 124
      %v5447 = vpop.permute.xlu0 %5446
      %5448 = vrot.lane.b32.xlu0 %v5229, 124
      %v5449 = vpop.permute.xlu0 %5448
      %5450 = vrot.lane.b32.xlu0 %v5230, 124
      %v5451 = vpop.permute.xlu0 %5450
      %5452 = vrot.lane.b32.xlu0 %v5231, 124
      %v5453 = vpop.permute.xlu0 %5452
      %5454 = vrot.lane.b32.xlu0 %v5232, 124
      %v5455 = vpop.permute.xlu0 %5454
      %5456 = vrot.lane.b32.xlu0 %v5233, 124
      %v5457 = vpop.permute.xlu0 %5456
      %5458 = vrot.lane.b32.xlu0 %v5234, 124
      %v5459 = vpop.permute.xlu0 %5458
      %5460 = vrot.lane.b32.xlu0 %v5235, 124
      %v5461 = vpop.permute.xlu0 %5460
      %5462 = vrot.lane.b32.xlu0 %v5236, 124
      %v5463 = vpop.permute.xlu0 %5462
      %5464 = vrot.lane.b32.xlu0 %v5237, 124
      %v5465 = vpop.permute.xlu0 %5464
      %v5482 = vmul.f32 %v5257, %v5435
      %v5483 = vmul.f32 %v5257, %v5437
      %v5484 = vmul.f32 %v5257, %v5439
      %v5485 = vmul.f32 %v5257, %v5441
      %v5486 = vmul.f32 %v5257, %v5443
      %v5487 = vmul.f32 %v5257, %v5445
      %v5488 = vmul.f32 %v5257, %v5447
      %v5489 = vmul.f32 %v5257, %v5449
      %v5490 = vmul.f32 %v5257, %v5451
      %v5491 = vmul.f32 %v5257, %v5453
      %v5492 = vmul.f32 %v5257, %v5455
      %v5493 = vmul.f32 %v5257, %v5457
      %v5494 = vmul.f32 %v5257, %v5459
      %v5495 = vmul.f32 %v5257, %v5461
      %v5496 = vmul.f32 %v5257, %v5463
      %v5497 = vmul.f32 %v5257, %v5465
      %v5498 = vsel %vm595, %v5482, 0.0
      %5499 = vadd.xlane.f32.xlu0 %v5498
      %v5500 = vpop.xlane.xlu0 %5499
      %v5501 = vsel %vm595, %v5483, 0.0
      %5502 = vadd.xlane.f32.xlu0 %v5501
      %v5503 = vpop.xlane.xlu0 %5502
      %v5504 = vsel %vm595, %v5484, 0.0
      %5505 = vadd.xlane.f32.xlu0 %v5504
      %v5506 = vpop.xlane.xlu0 %5505
      %v5507 = vsel %vm595, %v5485, 0.0
      %5508 = vadd.xlane.f32.xlu0 %v5507
      %v5509 = vpop.xlane.xlu0 %5508
      %v5510 = vsel %vm595, %v5486, 0.0
      %5511 = vadd.xlane.f32.xlu0 %v5510
      %v5512 = vpop.xlane.xlu0 %5511
      %v5513 = vsel %vm595, %v5487, 0.0
      %5514 = vadd.xlane.f32.xlu0 %v5513
      %v5515 = vpop.xlane.xlu0 %5514
      %v5516 = vsel %vm595, %v5488, 0.0
      %5517 = vadd.xlane.f32.xlu0 %v5516
      %v5518 = vpop.xlane.xlu0 %5517
      %v5519 = vsel %vm595, %v5489, 0.0
      %5520 = vadd.xlane.f32.xlu0 %v5519
      %v5521 = vpop.xlane.xlu0 %5520
      %v5522 = vsel %vm595, %v5490, 0.0
      %5523 = vadd.xlane.f32.xlu0 %v5522
      %v5524 = vpop.xlane.xlu0 %5523
      %v5525 = vsel %vm595, %v5491, 0.0
      %5526 = vadd.xlane.f32.xlu0 %v5525
      %v5527 = vpop.xlane.xlu0 %5526
      %v5528 = vsel %vm595, %v5492, 0.0
      %5529 = vadd.xlane.f32.xlu0 %v5528
      %v5530 = vpop.xlane.xlu0 %5529
      %v5531 = vsel %vm595, %v5493, 0.0
      %5532 = vadd.xlane.f32.xlu0 %v5531
      %v5533 = vpop.xlane.xlu0 %5532
      %v5534 = vsel %vm595, %v5494, 0.0
      %5535 = vadd.xlane.f32.xlu0 %v5534
      %v5536 = vpop.xlane.xlu0 %5535
      %v5537 = vsel %vm595, %v5495, 0.0
      %5538 = vadd.xlane.f32.xlu0 %v5537
      %v5539 = vpop.xlane.xlu0 %5538
      %v5540 = vsel %vm595, %v5496, 0.0
      %5541 = vadd.xlane.f32.xlu0 %v5540
      %v5542 = vpop.xlane.xlu0 %5541
      %v5543 = vsel %vm595, %v5497, 0.0
      %5544 = vadd.xlane.f32.xlu0 %v5543
      %v5545 = vpop.xlane.xlu0 %5544
      %v5546 = vsub.f32 %v4320, %v5500
      %v5547 = vsub.f32 %v4321, %v5503
      %v5548 = vsub.f32 %v4322, %v5506
      %v5549 = vsub.f32 %v4323, %v5509
      %v5550 = vsub.f32 %v4324, %v5512
      %v5551 = vsub.f32 %v4325, %v5515
      %v5552 = vsub.f32 %v4326, %v5518
      %v5553 = vsub.f32 %v4327, %v5521
      %v5554 = vsub.f32 %v4328, %v5524
      %v5555 = vsub.f32 %v4329, %v5527
      %v5556 = vsub.f32 %v4330, %v5530
      %v5557 = vsub.f32 %v4331, %v5533
      %v5558 = vsub.f32 %v4332, %v5536
      %v5559 = vsub.f32 %v4333, %v5539
      %v5560 = vsub.f32 %v4334, %v5542
      %v5561 = vsub.f32 %v4335, %v5545
      %5562 = vst.msk [vmem:[%s342] sm:$0xff] %vm595, %v5402
      %5563 = vst.msk [vmem:[%s342 + $0x8] sm:$0xff] %vm595, %v5403
      %5564 = vst.msk [vmem:[%s342 + $0x10] sm:$0xff] %vm595, %v5404
      %5565 = vst.msk [vmem:[%s342 + $0x18] sm:$0xff] %vm595, %v5405
      %5566 = vst.msk [vmem:[%s342 + $0x20] sm:$0xff] %vm595, %v5406
      %5567 = vst.msk [vmem:[%s342 + $0x28] sm:$0xff] %vm595, %v5407
      %5568 = vst.msk [vmem:[%s342 + $0x30] sm:$0xff] %vm595, %v5408
      %5569 = vst.msk [vmem:[%s342 + $0x38] sm:$0xff] %vm595, %v5409
      %5570 = vst.msk [vmem:[%s342 + $0x40] sm:$0xff] %vm595, %v5410
      %5571 = vst.msk [vmem:[%s342 + $0x48] sm:$0xff] %vm595, %v5411
      %5572 = vst.msk [vmem:[%s342 + $0x50] sm:$0xff] %vm595, %v5412
      %5573 = vst.msk [vmem:[%s342 + $0x58] sm:$0xff] %vm595, %v5413
      %5574 = vst.msk [vmem:[%s342 + $0x60] sm:$0xff] %vm595, %v5414
      %5575 = vst.msk [vmem:[%s342 + $0x68] sm:$0xff] %vm595, %v5415
      %5576 = vst.msk [vmem:[%s342 + $0x70] sm:$0xff] %vm595, %v5416
      %5577 = vst.msk [vmem:[%s342 + $0x78] sm:$0xff] %vm595, %v5417
      %vm5578 = vcmask 7168
      %5579 = vst.msk [vmem:[%s348] sm:$0xff] %vm5578, %v5546
      %5580 = vst.msk [vmem:[%s348 + $0x8] sm:$0xff] %vm5578, %v5547
      %5581 = vst.msk [vmem:[%s348 + $0x10] sm:$0xff] %vm5578, %v5548
      %5582 = vst.msk [vmem:[%s348 + $0x18] sm:$0xff] %vm5578, %v5549
      %5583 = vst.msk [vmem:[%s348 + $0x20] sm:$0xff] %vm5578, %v5550
      %5584 = vst.msk [vmem:[%s348 + $0x28] sm:$0xff] %vm5578, %v5551
      %5585 = vst.msk [vmem:[%s348 + $0x30] sm:$0xff] %vm5578, %v5552
      %5586 = vst.msk [vmem:[%s348 + $0x38] sm:$0xff] %vm5578, %v5553
      %5587 = vst.msk [vmem:[%s348 + $0x40] sm:$0xff] %vm5578, %v5554
      %5588 = vst.msk [vmem:[%s348 + $0x48] sm:$0xff] %vm5578, %v5555
      %5589 = vst.msk [vmem:[%s348 + $0x50] sm:$0xff] %vm5578, %v5556
      %5590 = vst.msk [vmem:[%s348 + $0x58] sm:$0xff] %vm5578, %v5557
      %5591 = vst.msk [vmem:[%s348 + $0x60] sm:$0xff] %vm5578, %v5558
      %5592 = vst.msk [vmem:[%s348 + $0x68] sm:$0xff] %vm5578, %v5559
      %5593 = vst.msk [vmem:[%s348 + $0x70] sm:$0xff] %vm5578, %v5560
      %5594 = vst.msk [vmem:[%s348 + $0x78] sm:$0xff] %vm5578, %v5561
      %s5595 = smul.u32 16, %s21
      %p5596 = scmp.lt.s32.totalorder %s5595, 31
      %s5597 = scalar_select %p5596, %s5595, 31
      %s5598 = smul.addr %s5597, 8
      %s5599 = scalar_lea.vmem %s8, %s5598
      %s5600 = smul.u32 16, %s21
      %p5601 = scmp.lt.s32.totalorder %s5600, 31
      %s5602 = scalar_select %p5601, %s5600, 31
      %s5603 = smul.addr %s5602, 8
      %s5604 = scalar_lea.vmem %s9, %s5603
      // Predicated region
      $region53: #{realnvp_forward.1} parent=51 // pred_check
        %p5605 = pneg %p212
      $region54: #{realnvp_forward.1} parent=51 // pred_check_branch
        %5607 = sbr.rel (%p5605) target = $region56
      $region55: #{realnvp_forward.1} parent=51 // pred_region
        %s5608 = smul.u32 16, %s21
      $region56: #{realnvp_forward.1} parent=51 // pred_fallthru
        _
      // Predicated region
      $region57: #{realnvp_forward.1} parent=51 // pred_check
        %p5609 = pneg %p238
      $region58: #{realnvp_forward.1} parent=51 // pred_check_branch
        %5611 = sbr.rel (%p5609) target = $region60
      $region59: #{realnvp_forward.1} parent=51 // pred_region
        %s5612 = smul.u32 16, %s21
      $region60: #{realnvp_forward.1} parent=51 // pred_fallthru
        _
    $region52: #{realnvp_forward.1} parent=5 // pred_fallthru
      _
    %p5613 = scmp.le.s32.totalorder 2, %s16
    // Predicated region
    $region61: #{realnvp_forward.1} parent=5 // pred_check
      %p5614 = pneg %p5613
    $region62: #{realnvp_forward.1} parent=5 // pred_check_branch
      %5616 = sbr.rel (%p5614) target = $region64
    $region63: #{realnvp_forward.1} parent=5 // pred_region
      %s5617 = ssub.s32 %s16, 2
      // Predicated region
      $region65: #{realnvp_forward.1} parent=63 // pred_check
        %p5618 = pneg %p218
      $region66: #{realnvp_forward.1} parent=63 // pred_check_branch
        %5620 = sbr.rel (%p5618) target = $region68
      $region67: #{realnvp_forward.1} parent=63 // pred_region
        %s5621 = smul.u32 16, %s22
        %p5622 = scmp.lt.s32.totalorder %s5621, 31
        %s5623 = scalar_select %p5622, %s5621, 31
        %s5624 = smul.addr %s5623, 8
        %s5625 = scalar_lea.vmem %s8, %s5624
      $region68: #{realnvp_forward.1} parent=63 // pred_fallthru
        _
      // Predicated region
      $region69: #{realnvp_forward.1} parent=63 // pred_check
        %p5626 = pneg %p244
      $region70: #{realnvp_forward.1} parent=63 // pred_check_branch
        %5628 = sbr.rel (%p5626) target = $region72
      $region71: #{realnvp_forward.1} parent=63 // pred_region
        %s5629 = smul.u32 16, %s22
        %p5630 = scmp.lt.s32.totalorder %s5629, 31
        %s5631 = scalar_select %p5630, %s5629, 31
        %s5632 = smul.addr %s5631, 8
        %s5633 = scalar_lea.vmem %s9, %s5632
      $region72: #{realnvp_forward.1} parent=63 // pred_fallthru
        _
    $region64: #{realnvp_forward.1} parent=5 // pred_fallthru
      _
  $region6: #{realnvp_forward.1} parent=0 // loop_footer
    %s20 = sadd.s32 1, %s16
  $region7: #{realnvp_forward.1} parent=0 // loop_footer_branch
    %15 = sbr.rel target = $region3
  $region8: #{realnvp_forward.1} parent=0 // loop_exit
    _

</llo_original>
